<compile_context>
chip_gen: v6e
topology: v6e:2x2x1
jax: 0.10.0
libtpu: 0.0.40
codegen_flags: <defaults>
</compile_context>

<pallas_src>
import functools
import math

import jax
import jax.numpy as jnp
from jax.experimental import pallas as pl
from jax.experimental.pallas import tpu as pltpu


# -----------------------------------------------------------------------------
# Fused Pallas kernel: all dilated-conv+BN+ReLU layers + final 1x1 conv + sigmoid
# -----------------------------------------------------------------------------
def make_msdnet_kernel(depth, max_dilation, B, H, W, d_max, Wp, L_pad):
    n_px = float(B * H * W)          # BN statistics are over real pixels only
    inv_npx = 1.0 / n_px
    eps = 1e-5

    def kernel(x_ref, m_ref, w_ref, g_ref, bt_ref, lw_ref, lb_ref, o_ref,
               stack_ref):
        # x_ref  : (B, L_pad)            VMEM  flattened zero-padded input plane
        # m_ref  : (B, L_pad)            VMEM  1.0 at interior pixels, 0.0 at halo/tail
        # w_ref  : (sum_i 9*(i+1),)      SMEM  packed per-layer 3x3 conv weights
        # g_ref  : (depth,)              SMEM  BN gamma
        # bt_ref : (depth,)              SMEM  BN beta
        # lw_ref : (depth+1,)            SMEM  final 1x1 conv weights
        # lb_ref : (1,)                  SMEM  final 1x1 conv bias
        # o_ref  : (B, L_pad)            VMEM  output plane (interior extracted in wrapper)
        # stack_ref : (depth+1, B, L_pad) VMEM persistent feature stack (zero halos)

        x = x_ref[...]
        mask = m_ref[...]
        stack_ref[0] = x

        # Final 1x1 conv accumulator, fused into the layer loop.
        facc = lw_ref[0] * x

        zero_plane = jnp.zeros((B, L_pad), jnp.float32)

        for i in range(depth):                       # static layer loop (small depth)
            d = 1 + i % max_dilation                 # matches the torch module exactly
            C = i + 1
            w_base = 9 * i * (i + 1) // 2            # ragged packed-weight offset

            # ---- shift-after-channel-sum: accumulate 9 per-tap weighted planes
            def channel_body(c, taps, w_base=w_base):
                ch = stack_ref[c]                    # (B, L_pad) dynamic slot load
                return tuple(
                    taps[k] + w_ref[w_base + c * 9 + k] * ch for k in range(9)
                )

            taps = jax.lax.fori_loop(0, C, channel_body, (zero_plane,) * 9)

            # ---- apply the 9 dilated shifts once per layer (flat lane offsets)
            acc = taps[4]                            # center tap: zero shift
            for k in range(9):
                if k == 4:
                    continue
                ky, kx = divmod(k, 3)
                t = (ky - 1) * d * Wp + (kx - 1) * d
                # want out[b, p] = taps[k][b, p + t]; the circular wrap only
                # touches halo/tail positions, which are masked below.
                acc = acc + jnp.roll(taps[k], -t, axis=1)

            # ---- BatchNorm2d(1), training-mode batch stats, biased var, eps=1e-5.
            # Two-pass (subtract mean before squaring) for numerical robustness.
            # Conv bias intentionally omitted: the batch-mean subtraction cancels it.
            mean = jnp.sum(acc * mask) * inv_npx
            centered = (acc - mean) * mask
            var = jnp.sum(centered * centered) * inv_npx
            scale = g_ref[i] * jax.lax.rsqrt(var + eps)
            y = jnp.maximum(centered * scale + bt_ref[i], 0.0) * mask   # ReLU + zero halo

            stack_ref[i + 1] = y                     # full dense store, no masking
            facc = facc + lw_ref[i + 1] * y          # fused final 1x1 conv

        # Final 1x1 conv bias + sigmoid.  Halo positions hold sigmoid(lb) garbage;
        # the wrapper extracts only the interior.
        o_ref[...] = jax.nn.sigmoid(facc + lb_ref[0])

    return kernel


# -----------------------------------------------------------------------------
# Wrapper: full MSDNET forward (one pallas_call)
# -----------------------------------------------------------------------------
_VMEM = pl.BlockSpec(memory_space=pltpu.MemorySpace.VMEM)
_SMEM = pl.BlockSpec(memory_space=pltpu.MemorySpace.SMEM)


def msdnet_forward(x, params, *, depth, max_dilation):
    """x: (B, H, W) float32  ->  (B, H, W) float32."""
    B, H, W = x.shape
    d_max = max((1 + i % max_dilation for i in range(depth)), default=1)
    Hp, Wp = H + 2 * d_max, W + 2 * d_max
    L = Hp * Wp
    L_pad = ((L + 127) // 128) * 128

    # Lane-dense plane layout: zero-pad spatially, flatten, pad lanes to 128.
    def to_plane(a):
        ap = jnp.pad(a, ((0, 0), (d_max, d_max), (d_max, d_max)))
        return jnp.pad(ap.reshape(B, L), ((0, 0), (0, L_pad - L)))

    x_plane = to_plane(x.astype(jnp.float32))
    mask_plane = to_plane(jnp.ones((B, H, W), jnp.float32))

    # Packed per-layer 3x3 weights (layer i occupies 9*(i+1) contiguous floats).
    conv_w_flat = jnp.concatenate(
        [jnp.asarray(w, jnp.float32).reshape(-1) for w in params["conv_w"]]
    )
    bn_gamma = jnp.asarray(params["bn_gamma"], jnp.float32)
    bn_beta = jnp.asarray(params["bn_beta"], jnp.float32)
    last_w = jnp.asarray(params["last_w"], jnp.float32)
    last_b = jnp.asarray(params["last_b"], jnp.float32)
    # params["conv_b"] is unused: it cancels exactly under training-mode BN.

    # Scoped-VMEM limit: grow with the feature stack, respect chip capacity
    # (v7x: 64 MiB per TC; v5e/v6e: 128 MiB), keep a small headroom.
    plane_bytes = B * L_pad * 4
    stack_bytes = (depth + 1) * plane_bytes
    need = stack_bytes + 16 * plane_bytes + (4 << 20)
    try:
        cap = int(getattr(pltpu.get_tpu_info(), "vmem_capacity_bytes", 64 << 20))
    except Exception:
        cap = 64 << 20
    vmem_limit = int(min(max(need, 32 << 20), cap - (8 << 20)))

    out_plane = pl.pallas_call(
        make_msdnet_kernel(depth, max_dilation, B, H, W, d_max, Wp, L_pad),
        out_shape=jax.ShapeDtypeStruct((B, L_pad), jnp.float32),
        in_specs=[_VMEM, _VMEM, _SMEM, _SMEM, _SMEM, _SMEM, _SMEM],
        out_specs=_VMEM,
        scratch_shapes=[pltpu.VMEM((depth + 1, B, L_pad), jnp.float32)],
        compiler_params=pltpu.CompilerParams(vmem_limit_bytes=vmem_limit),
    )(x_plane, mask_plane, conv_w_flat, bn_gamma, bn_beta, last_w, last_b)

    # Layout plumbing: extract the interior (B, H, W) from the padded plane.
    out = out_plane[:, :L].reshape(B, Hp, Wp)[:, d_max:d_max + H, d_max:d_max + W]
    return out


# -----------------------------------------------------------------------------
# Deterministic parameter initialization (matches PyTorch module shapes/init)
# -----------------------------------------------------------------------------
def init_params(key, depth, max_dilation):
    conv_w, conv_b, bn_gamma, bn_beta = [], [], [], []
    for i in range(depth):
        C = i + 1
        key, kw, kb = jax.random.split(key, 3)
        bound = 1.0 / math.sqrt(C * 9)  # PyTorch Conv2d default bound
        conv_w.append(
            jax.random.uniform(kw, (C, 3, 3), jnp.float32, -bound, bound)
        )
        conv_b.append(jax.random.uniform(kb, (), jnp.float32, -bound, bound))
        bn_gamma.append(1.0)            # BatchNorm2d default init
        bn_beta.append(0.0)
    key, kw, kb = jax.random.split(key, 3)
    Cl = depth + 1
    bound = 1.0 / math.sqrt(Cl)
    last_w = jax.random.uniform(kw, (Cl,), jnp.float32, -bound, bound)
    last_b = jax.random.uniform(kb, (1,), jnp.float32, -bound, bound)
    return {
        "conv_w": conv_w,
        "conv_b": conv_b,   # kept for module parity; cancelled by training-mode BN
        "bn_gamma": bn_gamma,
        "bn_beta": bn_beta,
        "last_w": last_w,
        "last_b": last_b,
    }


if __name__ == "__main__":
    DEPTH = 8          # module default is 100; small synthetic config
    MAX_DILATION = 3   # module default is 10
    B, H, W = 2, 16, 16

    key = jax.random.PRNGKey(0)
    key, kx = jax.random.split(key)
    x = jax.random.uniform(kx, (B, H, W), jnp.float32)

    params = init_params(key, DEPTH, MAX_DILATION)

    fwd = jax.jit(
        functools.partial(msdnet_forward, depth=DEPTH, max_dilation=MAX_DILATION)
    )
    out = fwd(x, params)
    out = jax.block_until_ready(out)

    assert out.shape == (B, H, W), out.shape
    assert bool(jnp.all(jnp.isfinite(out)))
    assert bool(jnp.all((out >= 0.0) & (out <= 1.0)))  # sigmoid output
    print("KERNEL_OK")
</pallas_src>

<mosaic_0001>
module attributes {stable_mosaic.version = 11 : i64} {
  func.func @kernel(%arg0: memref<2x512xf32, #tpu.memory_space<vmem>>, %arg1: memref<2x512xf32, #tpu.memory_space<vmem>>, %arg2: memref<324xf32, #tpu.memory_space<smem>>, %arg3: memref<8xf32, #tpu.memory_space<smem>>, %arg4: memref<8xf32, #tpu.memory_space<smem>>, %arg5: memref<9xf32, #tpu.memory_space<smem>>, %arg6: memref<1xf32, #tpu.memory_space<smem>>, %arg7: memref<2x512xf32, #tpu.memory_space<vmem>>, %arg8: memref<9x2x512xf32, #tpu.memory_space<vmem>>) attributes {dimension_semantics = [], scalar_prefetch = 0 : i64, scratch_operands = 1 : i64, tpu.core_type = #tpu.core_type<tc>} {
    %c0 = arith.constant 0 : index
    %c0_0 = arith.constant 0 : index
    %0 = vector.load %arg0[%c0, %c0_0] : memref<2x512xf32, #tpu.memory_space<vmem>>, vector<2x512xf32>
    %c0_1 = arith.constant 0 : index
    %c0_2 = arith.constant 0 : index
    %1 = vector.load %arg1[%c0_1, %c0_2] : memref<2x512xf32, #tpu.memory_space<vmem>>, vector<2x512xf32>
    %c0_3 = arith.constant 0 : index
    %c0_4 = arith.constant 0 : index
    %c0_5 = arith.constant 0 : index
    %2 = vector.load %arg8[%c0_3, %c0_4, %c0_5] : memref<9x2x512xf32, #tpu.memory_space<vmem>>, vector<1x2x512xf32>
    %3 = vector.shape_cast %2 : vector<1x2x512xf32> to vector<2x512xf32>
    %4 = vector.shape_cast %0 : vector<2x512xf32> to vector<1x2x512xf32>
    tpu.vector_store %arg8[%c0_3, %c0_4, %c0_5], %4 {strides = array<i32>} : memref<9x2x512xf32, #tpu.memory_space<vmem>>, vector<1x2x512xf32>,
    %c0_6 = arith.constant 0 : index
    %5 = memref.load %arg5[%c0_6] : memref<9xf32, #tpu.memory_space<smem>>
    %6 = vector.broadcast %5 : f32 to vector<2x512xf32>
    %7 = arith.mulf %6, %0 : vector<2x512xf32>
    %cst = arith.constant 0.000000e+00 : f32
    %8 = vector.broadcast %cst : f32 to vector<2x512xf32>
    %c0_i32 = arith.constant 0 : i32
    %9 = arith.index_cast %c0_i32 : i32 to index
    %c0_7 = arith.constant 0 : index
    %c0_8 = arith.constant 0 : index
    %10 = vector.load %arg8[%9, %c0_7, %c0_8] : memref<9x2x512xf32, #tpu.memory_space<vmem>>, vector<1x2x512xf32>
    %11 = vector.shape_cast %10 : vector<1x2x512xf32> to vector<2x512xf32>
    %c9_i32 = arith.constant 9 : i32
    %12 = arith.muli %c0_i32, %c9_i32 : i32
    %c0_i32_9 = arith.constant 0 : i32
    %13 = arith.addi %c0_i32_9, %12 : i32
    %c0_i32_10 = arith.constant 0 : i32
    %14 = arith.addi %13, %c0_i32_10 : i32
    %15 = arith.index_cast %14 : i32 to index
    %16 = memref.load %arg2[%15] : memref<324xf32, #tpu.memory_space<smem>>
    %17 = vector.broadcast %16 : f32 to vector<2x512xf32>
    %18 = arith.mulf %17, %11 : vector<2x512xf32>
    %19 = arith.addf %8, %18 : vector<2x512xf32>
    %c9_i32_11 = arith.constant 9 : i32
    %20 = arith.muli %c0_i32, %c9_i32_11 : i32
    %c0_i32_12 = arith.constant 0 : i32
    %21 = arith.addi %c0_i32_12, %20 : i32
    %c1_i32 = arith.constant 1 : i32
    %22 = arith.addi %21, %c1_i32 : i32
    %23 = arith.index_cast %22 : i32 to index
    %24 = memref.load %arg2[%23] : memref<324xf32, #tpu.memory_space<smem>>
    %25 = vector.broadcast %24 : f32 to vector<2x512xf32>
    %26 = arith.mulf %25, %11 : vector<2x512xf32>
    %27 = arith.addf %8, %26 : vector<2x512xf32>
    %c9_i32_13 = arith.constant 9 : i32
    %28 = arith.muli %c0_i32, %c9_i32_13 : i32
    %c0_i32_14 = arith.constant 0 : i32
    %29 = arith.addi %c0_i32_14, %28 : i32
    %c2_i32 = arith.constant 2 : i32
    %30 = arith.addi %29, %c2_i32 : i32
    %31 = arith.index_cast %30 : i32 to index
    %32 = memref.load %arg2[%31] : memref<324xf32, #tpu.memory_space<smem>>
    %33 = vector.broadcast %32 : f32 to vector<2x512xf32>
    %34 = arith.mulf %33, %11 : vector<2x512xf32>
    %35 = arith.addf %8, %34 : vector<2x512xf32>
    %c9_i32_15 = arith.constant 9 : i32
    %36 = arith.muli %c0_i32, %c9_i32_15 : i32
    %c0_i32_16 = arith.constant 0 : i32
    %37 = arith.addi %c0_i32_16, %36 : i32
    %c3_i32 = arith.constant 3 : i32
    %38 = arith.addi %37, %c3_i32 : i32
    %39 = arith.index_cast %38 : i32 to index
    %40 = memref.load %arg2[%39] : memref<324xf32, #tpu.memory_space<smem>>
    %41 = vector.broadcast %40 : f32 to vector<2x512xf32>
    %42 = arith.mulf %41, %11 : vector<2x512xf32>
    %43 = arith.addf %8, %42 : vector<2x512xf32>
    %c9_i32_17 = arith.constant 9 : i32
    %44 = arith.muli %c0_i32, %c9_i32_17 : i32
    %c0_i32_18 = arith.constant 0 : i32
    %45 = arith.addi %c0_i32_18, %44 : i32
    %c4_i32 = arith.constant 4 : i32
    %46 = arith.addi %45, %c4_i32 : i32
    %47 = arith.index_cast %46 : i32 to index
    %48 = memref.load %arg2[%47] : memref<324xf32, #tpu.memory_space<smem>>
    %49 = vector.broadcast %48 : f32 to vector<2x512xf32>
    %50 = arith.mulf %49, %11 : vector<2x512xf32>
    %51 = arith.addf %8, %50 : vector<2x512xf32>
    %c9_i32_19 = arith.constant 9 : i32
    %52 = arith.muli %c0_i32, %c9_i32_19 : i32
    %c0_i32_20 = arith.constant 0 : i32
    %53 = arith.addi %c0_i32_20, %52 : i32
    %c5_i32 = arith.constant 5 : i32
    %54 = arith.addi %53, %c5_i32 : i32
    %55 = arith.index_cast %54 : i32 to index
    %56 = memref.load %arg2[%55] : memref<324xf32, #tpu.memory_space<smem>>
    %57 = vector.broadcast %56 : f32 to vector<2x512xf32>
    %58 = arith.mulf %57, %11 : vector<2x512xf32>
    %59 = arith.addf %8, %58 : vector<2x512xf32>
    %c9_i32_21 = arith.constant 9 : i32
    %60 = arith.muli %c0_i32, %c9_i32_21 : i32
    %c0_i32_22 = arith.constant 0 : i32
    %61 = arith.addi %c0_i32_22, %60 : i32
    %c6_i32 = arith.constant 6 : i32
    %62 = arith.addi %61, %c6_i32 : i32
    %63 = arith.index_cast %62 : i32 to index
    %64 = memref.load %arg2[%63] : memref<324xf32, #tpu.memory_space<smem>>
    %65 = vector.broadcast %64 : f32 to vector<2x512xf32>
    %66 = arith.mulf %65, %11 : vector<2x512xf32>
    %67 = arith.addf %8, %66 : vector<2x512xf32>
    %c9_i32_23 = arith.constant 9 : i32
    %68 = arith.muli %c0_i32, %c9_i32_23 : i32
    %c0_i32_24 = arith.constant 0 : i32
    %69 = arith.addi %c0_i32_24, %68 : i32
    %c7_i32 = arith.constant 7 : i32
    %70 = arith.addi %69, %c7_i32 : i32
    %71 = arith.index_cast %70 : i32 to index
    %72 = memref.load %arg2[%71] : memref<324xf32, #tpu.memory_space<smem>>
    %73 = vector.broadcast %72 : f32 to vector<2x512xf32>
    %74 = arith.mulf %73, %11 : vector<2x512xf32>
    %75 = arith.addf %8, %74 : vector<2x512xf32>
    %c9_i32_25 = arith.constant 9 : i32
    %76 = arith.muli %c0_i32, %c9_i32_25 : i32
    %c0_i32_26 = arith.constant 0 : i32
    %77 = arith.addi %c0_i32_26, %76 : i32
    %c8_i32 = arith.constant 8 : i32
    %78 = arith.addi %77, %c8_i32 : i32
    %79 = arith.index_cast %78 : i32 to index
    %80 = memref.load %arg2[%79] : memref<324xf32, #tpu.memory_space<smem>>
    %81 = vector.broadcast %80 : f32 to vector<2x512xf32>
    %82 = arith.mulf %81, %11 : vector<2x512xf32>
    %83 = arith.addf %8, %82 : vector<2x512xf32>
    %c1_i32_27 = arith.constant 1 : i32
    %84 = vector.extract_strided_slice %19 {offsets = [0, 489], sizes = [2, 23], strides = [1, 1]} : vector<2x512xf32> to vector<2x23xf32>
    %85 = vector.extract_strided_slice %19 {offsets = [0, 0], sizes = [2, 489], strides = [1, 1]} : vector<2x512xf32> to vector<2x489xf32>
    %86 = tpu.concatenate %84, %85 in 1 : vector<2x23xf32>, vector<2x489xf32> -> vector<2x512xf32>
    %87 = arith.addf %51, %86 : vector<2x512xf32>
    %88 = vector.extract_strided_slice %27 {offsets = [0, 490], sizes = [2, 22], strides = [1, 1]} : vector<2x512xf32> to vector<2x22xf32>
    %89 = vector.extract_strided_slice %27 {offsets = [0, 0], sizes = [2, 490], strides = [1, 1]} : vector<2x512xf32> to vector<2x490xf32>
    %90 = tpu.concatenate %88, %89 in 1 : vector<2x22xf32>, vector<2x490xf32> -> vector<2x512xf32>
    %91 = arith.addf %87, %90 : vector<2x512xf32>
    %92 = vector.extract_strided_slice %35 {offsets = [0, 491], sizes = [2, 21], strides = [1, 1]} : vector<2x512xf32> to vector<2x21xf32>
    %93 = vector.extract_strided_slice %35 {offsets = [0, 0], sizes = [2, 491], strides = [1, 1]} : vector<2x512xf32> to vector<2x491xf32>
    %94 = tpu.concatenate %92, %93 in 1 : vector<2x21xf32>, vector<2x491xf32> -> vector<2x512xf32>
    %95 = arith.addf %91, %94 : vector<2x512xf32>
    %96 = vector.extract_strided_slice %43 {offsets = [0, 511], sizes = [2, 1], strides = [1, 1]} : vector<2x512xf32> to vector<2x1xf32>
    %97 = vector.extract_strided_slice %43 {offsets = [0, 0], sizes = [2, 511], strides = [1, 1]} : vector<2x512xf32> to vector<2x511xf32>
    %98 = tpu.concatenate %96, %97 in 1 : vector<2x1xf32>, vector<2x511xf32> -> vector<2x512xf32>
    %99 = arith.addf %95, %98 : vector<2x512xf32>
    %100 = vector.extract_strided_slice %59 {offsets = [0, 1], sizes = [2, 511], strides = [1, 1]} : vector<2x512xf32> to vector<2x511xf32>
    %101 = vector.extract_strided_slice %59 {offsets = [0, 0], sizes = [2, 1], strides = [1, 1]} : vector<2x512xf32> to vector<2x1xf32>
    %102 = tpu.concatenate %100, %101 in 1 : vector<2x511xf32>, vector<2x1xf32> -> vector<2x512xf32>
    %103 = arith.addf %99, %102 : vector<2x512xf32>
    %104 = vector.extract_strided_slice %67 {offsets = [0, 21], sizes = [2, 491], strides = [1, 1]} : vector<2x512xf32> to vector<2x491xf32>
    %105 = vector.extract_strided_slice %67 {offsets = [0, 0], sizes = [2, 21], strides = [1, 1]} : vector<2x512xf32> to vector<2x21xf32>
    %106 = tpu.concatenate %104, %105 in 1 : vector<2x491xf32>, vector<2x21xf32> -> vector<2x512xf32>
    %107 = arith.addf %103, %106 : vector<2x512xf32>
    %108 = vector.extract_strided_slice %75 {offsets = [0, 22], sizes = [2, 490], strides = [1, 1]} : vector<2x512xf32> to vector<2x490xf32>
    %109 = vector.extract_strided_slice %75 {offsets = [0, 0], sizes = [2, 22], strides = [1, 1]} : vector<2x512xf32> to vector<2x22xf32>
    %110 = tpu.concatenate %108, %109 in 1 : vector<2x490xf32>, vector<2x22xf32> -> vector<2x512xf32>
    %111 = arith.addf %107, %110 : vector<2x512xf32>
    %112 = vector.extract_strided_slice %83 {offsets = [0, 23], sizes = [2, 489], strides = [1, 1]} : vector<2x512xf32> to vector<2x489xf32>
    %113 = vector.extract_strided_slice %83 {offsets = [0, 0], sizes = [2, 23], strides = [1, 1]} : vector<2x512xf32> to vector<2x23xf32>
    %114 = tpu.concatenate %112, %113 in 1 : vector<2x489xf32>, vector<2x23xf32> -> vector<2x512xf32>
    %115 = arith.addf %111, %114 : vector<2x512xf32>
    %116 = arith.mulf %115, %1 : vector<2x512xf32>
    %117 = vector.shape_cast %116 : vector<2x512xf32> to vector<1x2x512xf32>
    %cst_28 = arith.constant dense<0.000000e+00> : vector<1xf32>
    %118 = vector.multi_reduction <add>, %117, %cst_28 [1, 2] : vector<1x2x512xf32> to vector<1xf32>
    %119 = vector.shape_cast %118 : vector<1xf32> to vector<1x1x1xf32>
    %120 = vector.extract %119[0, 0, 0] : f32 from vector<1x1x1xf32>
    %cst_29 = arith.constant 0.001953125 : f32
    %121 = arith.mulf %120, %cst_29 : f32
    %122 = vector.broadcast %121 : f32 to vector<2x512xf32>
    %123 = arith.subf %115, %122 : vector<2x512xf32>
    %124 = arith.mulf %123, %1 : vector<2x512xf32>
    %125 = arith.mulf %124, %124 : vector<2x512xf32>
    %126 = vector.shape_cast %125 : vector<2x512xf32> to vector<1x2x512xf32>
    %cst_30 = arith.constant dense<0.000000e+00> : vector<1xf32>
    %127 = vector.multi_reduction <add>, %126, %cst_30 [1, 2] : vector<1x2x512xf32> to vector<1xf32>
    %128 = vector.shape_cast %127 : vector<1xf32> to vector<1x1x1xf32>
    %129 = vector.extract %128[0, 0, 0] : f32 from vector<1x1x1xf32>
    %cst_31 = arith.constant 0.001953125 : f32
    %130 = arith.mulf %129, %cst_31 : f32
    %c0_32 = arith.constant 0 : index
    %131 = memref.load %arg3[%c0_32] : memref<8xf32, #tpu.memory_space<smem>>
    %cst_33 = arith.constant 9.99999974E-6 : f32
    %132 = arith.addf %130, %cst_33 : f32
    %133 = math.rsqrt %132 : f32
    %134 = arith.mulf %131, %133 : f32
    %135 = vector.broadcast %134 : f32 to vector<2x512xf32>
    %136 = arith.mulf %124, %135 : vector<2x512xf32>
    %c0_34 = arith.constant 0 : index
    %137 = memref.load %arg4[%c0_34] : memref<8xf32, #tpu.memory_space<smem>>
    %138 = vector.broadcast %137 : f32 to vector<2x512xf32>
    %139 = arith.addf %136, %138 : vector<2x512xf32>
    %cst_35 = arith.constant 0.000000e+00 : f32
    %140 = vector.broadcast %cst_35 : f32 to vector<2x512xf32>
    %141 = arith.maximumf %139, %140 : vector<2x512xf32>
    %142 = arith.mulf %141, %1 : vector<2x512xf32>
    %c1 = arith.constant 1 : index
    %c0_36 = arith.constant 0 : index
    %c0_37 = arith.constant 0 : index
    %143 = vector.load %arg8[%c1, %c0_36, %c0_37] : memref<9x2x512xf32, #tpu.memory_space<vmem>>, vector<1x2x512xf32>
    %144 = vector.shape_cast %143 : vector<1x2x512xf32> to vector<2x512xf32>
    %145 = vector.shape_cast %142 : vector<2x512xf32> to vector<1x2x512xf32>
    tpu.vector_store %arg8[%c1, %c0_36, %c0_37], %145 {strides = array<i32>} : memref<9x2x512xf32, #tpu.memory_space<vmem>>, vector<1x2x512xf32>,
    %c1_38 = arith.constant 1 : index
    %146 = memref.load %arg5[%c1_38] : memref<9xf32, #tpu.memory_space<smem>>
    %147 = vector.broadcast %146 : f32 to vector<2x512xf32>
    %148 = arith.mulf %147, %142 : vector<2x512xf32>
    %149 = arith.addf %7, %148 : vector<2x512xf32>
    %c0_i32_39 = arith.constant 0 : i32
    %c2_i32_40 = arith.constant 2 : i32
    %150 = arith.addi %c0_i32_39, %c2_i32_40 : i32
    %c1_i32_41 = arith.constant 1 : i32
    %151:9 = scf.for %arg9 = %c0_i32_39 to %150 step %c1_i32_41 iter_args(%arg10 = %8, %arg11 = %8, %arg12 = %8, %arg13 = %8, %arg14 = %8, %arg15 = %8, %arg16 = %8, %arg17 = %8, %arg18 = %8) -> (vector<2x512xf32>, vector<2x512xf32>, vector<2x512xf32>, vector<2x512xf32>, vector<2x512xf32>, vector<2x512xf32>, vector<2x512xf32>, vector<2x512xf32>, vector<2x512xf32>)  : i32 {
      %635 = arith.index_cast %arg9 : i32 to index
      %c0_148 = arith.constant 0 : index
      %c0_149 = arith.constant 0 : index
      %636 = vector.load %arg8[%635, %c0_148, %c0_149] : memref<9x2x512xf32, #tpu.memory_space<vmem>>, vector<1x2x512xf32>
      %637 = vector.shape_cast %636 : vector<1x2x512xf32> to vector<2x512xf32>
      %c9_i32_150 = arith.constant 9 : i32
      %638 = arith.muli %arg9, %c9_i32_150 : i32
      %c9_i32_151 = arith.constant 9 : i32
      %639 = arith.addi %c9_i32_151, %638 : i32
      %c0_i32_152 = arith.constant 0 : i32
      %640 = arith.addi %639, %c0_i32_152 : i32
      %641 = arith.index_cast %640 : i32 to index
      %642 = memref.load %arg2[%641] : memref<324xf32, #tpu.memory_space<smem>>
      %643 = vector.broadcast %642 : f32 to vector<2x512xf32>
      %644 = arith.mulf %643, %637 : vector<2x512xf32>
      %645 = arith.addf %arg10, %644 : vector<2x512xf32>
      %c9_i32_153 = arith.constant 9 : i32
      %646 = arith.muli %arg9, %c9_i32_153 : i32
      %c9_i32_154 = arith.constant 9 : i32
      %647 = arith.addi %c9_i32_154, %646 : i32
      %c1_i32_155 = arith.constant 1 : i32
      %648 = arith.addi %647, %c1_i32_155 : i32
      %649 = arith.index_cast %648 : i32 to index
      %650 = memref.load %arg2[%649] : memref<324xf32, #tpu.memory_space<smem>>
      %651 = vector.broadcast %650 : f32 to vector<2x512xf32>
      %652 = arith.mulf %651, %637 : vector<2x512xf32>
      %653 = arith.addf %arg11, %652 : vector<2x512xf32>
      %c9_i32_156 = arith.constant 9 : i32
      %654 = arith.muli %arg9, %c9_i32_156 : i32
      %c9_i32_157 = arith.constant 9 : i32
      %655 = arith.addi %c9_i32_157, %654 : i32
      %c2_i32_158 = arith.constant 2 : i32
      %656 = arith.addi %655, %c2_i32_158 : i32
      %657 = arith.index_cast %656 : i32 to index
      %658 = memref.load %arg2[%657] : memref<324xf32, #tpu.memory_space<smem>>
      %659 = vector.broadcast %658 : f32 to vector<2x512xf32>
      %660 = arith.mulf %659, %637 : vector<2x512xf32>
      %661 = arith.addf %arg12, %660 : vector<2x512xf32>
      %c9_i32_159 = arith.constant 9 : i32
      %662 = arith.muli %arg9, %c9_i32_159 : i32
      %c9_i32_160 = arith.constant 9 : i32
      %663 = arith.addi %c9_i32_160, %662 : i32
      %c3_i32_161 = arith.constant 3 : i32
      %664 = arith.addi %663, %c3_i32_161 : i32
      %665 = arith.index_cast %664 : i32 to index
      %666 = memref.load %arg2[%665] : memref<324xf32, #tpu.memory_space<smem>>
      %667 = vector.broadcast %666 : f32 to vector<2x512xf32>
      %668 = arith.mulf %667, %637 : vector<2x512xf32>
      %669 = arith.addf %arg13, %668 : vector<2x512xf32>
      %c9_i32_162 = arith.constant 9 : i32
      %670 = arith.muli %arg9, %c9_i32_162 : i32
      %c9_i32_163 = arith.constant 9 : i32
      %671 = arith.addi %c9_i32_163, %670 : i32
      %c4_i32_164 = arith.constant 4 : i32
      %672 = arith.addi %671, %c4_i32_164 : i32
      %673 = arith.index_cast %672 : i32 to index
      %674 = memref.load %arg2[%673] : memref<324xf32, #tpu.memory_space<smem>>
      %675 = vector.broadcast %674 : f32 to vector<2x512xf32>
      %676 = arith.mulf %675, %637 : vector<2x512xf32>
      %677 = arith.addf %arg14, %676 : vector<2x512xf32>
      %c9_i32_165 = arith.constant 9 : i32
      %678 = arith.muli %arg9, %c9_i32_165 : i32
      %c9_i32_166 = arith.constant 9 : i32
      %679 = arith.addi %c9_i32_166, %678 : i32
      %c5_i32_167 = arith.constant 5 : i32
      %680 = arith.addi %679, %c5_i32_167 : i32
      %681 = arith.index_cast %680 : i32 to index
      %682 = memref.load %arg2[%681] : memref<324xf32, #tpu.memory_space<smem>>
      %683 = vector.broadcast %682 : f32 to vector<2x512xf32>
      %684 = arith.mulf %683, %637 : vector<2x512xf32>
      %685 = arith.addf %arg15, %684 : vector<2x512xf32>
      %c9_i32_168 = arith.constant 9 : i32
      %686 = arith.muli %arg9, %c9_i32_168 : i32
      %c9_i32_169 = arith.constant 9 : i32
      %687 = arith.addi %c9_i32_169, %686 : i32
      %c6_i32_170 = arith.constant 6 : i32
      %688 = arith.addi %687, %c6_i32_170 : i32
      %689 = arith.index_cast %688 : i32 to index
      %690 = memref.load %arg2[%689] : memref<324xf32, #tpu.memory_space<smem>>
      %691 = vector.broadcast %690 : f32 to vector<2x512xf32>
      %692 = arith.mulf %691, %637 : vector<2x512xf32>
      %693 = arith.addf %arg16, %692 : vector<2x512xf32>
      %c9_i32_171 = arith.constant 9 : i32
      %694 = arith.muli %arg9, %c9_i32_171 : i32
      %c9_i32_172 = arith.constant 9 : i32
      %695 = arith.addi %c9_i32_172, %694 : i32
      %c7_i32_173 = arith.constant 7 : i32
      %696 = arith.addi %695, %c7_i32_173 : i32
      %697 = arith.index_cast %696 : i32 to index
      %698 = memref.load %arg2[%697] : memref<324xf32, #tpu.memory_space<smem>>
      %699 = vector.broadcast %698 : f32 to vector<2x512xf32>
      %700 = arith.mulf %699, %637 : vector<2x512xf32>
      %701 = arith.addf %arg17, %700 : vector<2x512xf32>
      %c9_i32_174 = arith.constant 9 : i32
      %702 = arith.muli %arg9, %c9_i32_174 : i32
      %c9_i32_175 = arith.constant 9 : i32
      %703 = arith.addi %c9_i32_175, %702 : i32
      %c8_i32_176 = arith.constant 8 : i32
      %704 = arith.addi %703, %c8_i32_176 : i32
      %705 = arith.index_cast %704 : i32 to index
      %706 = memref.load %arg2[%705] : memref<324xf32, #tpu.memory_space<smem>>
      %707 = vector.broadcast %706 : f32 to vector<2x512xf32>
      %708 = arith.mulf %707, %637 : vector<2x512xf32>
      %709 = arith.addf %arg18, %708 : vector<2x512xf32>
      scf.yield %645, %653, %661, %669, %677, %685, %693, %701, %709 : vector<2x512xf32>, vector<2x512xf32>, vector<2x512xf32>, vector<2x512xf32>, vector<2x512xf32>, vector<2x512xf32>, vector<2x512xf32>, vector<2x512xf32>, vector<2x512xf32>
    }
    %c2_i32_42 = arith.constant 2 : i32
    %152 = vector.extract_strided_slice %151#0 {offsets = [0, 466], sizes = [2, 46], strides = [1, 1]} : vector<2x512xf32> to vector<2x46xf32>
    %153 = vector.extract_strided_slice %151#0 {offsets = [0, 0], sizes = [2, 466], strides = [1, 1]} : vector<2x512xf32> to vector<2x466xf32>
    %154 = tpu.concatenate %152, %153 in 1 : vector<2x46xf32>, vector<2x466xf32> -> vector<2x512xf32>
    %155 = arith.addf %151#4, %154 : vector<2x512xf32>
    %156 = vector.extract_strided_slice %151#1 {offsets = [0, 468], sizes = [2, 44], strides = [1, 1]} : vector<2x512xf32> to vector<2x44xf32>
    %157 = vector.extract_strided_slice %151#1 {offsets = [0, 0], sizes = [2, 468], strides = [1, 1]} : vector<2x512xf32> to vector<2x468xf32>
    %158 = tpu.concatenate %156, %157 in 1 : vector<2x44xf32>, vector<2x468xf32> -> vector<2x512xf32>
    %159 = arith.addf %155, %158 : vector<2x512xf32>
    %160 = vector.extract_strided_slice %151#2 {offsets = [0, 470], sizes = [2, 42], strides = [1, 1]} : vector<2x512xf32> to vector<2x42xf32>
    %161 = vector.extract_strided_slice %151#2 {offsets = [0, 0], sizes = [2, 470], strides = [1, 1]} : vector<2x512xf32> to vector<2x470xf32>
    %162 = tpu.concatenate %160, %161 in 1 : vector<2x42xf32>, vector<2x470xf32> -> vector<2x512xf32>
    %163 = arith.addf %159, %162 : vector<2x512xf32>
    %164 = vector.extract_strided_slice %151#3 {offsets = [0, 510], sizes = [2, 2], strides = [1, 1]} : vector<2x512xf32> to vector<2x2xf32>
    %165 = vector.extract_strided_slice %151#3 {offsets = [0, 0], sizes = [2, 510], strides = [1, 1]} : vector<2x512xf32> to vector<2x510xf32>
    %166 = tpu.concatenate %164, %165 in 1 : vector<2x2xf32>, vector<2x510xf32> -> vector<2x512xf32>
    %167 = arith.addf %163, %166 : vector<2x512xf32>
    %168 = vector.extract_strided_slice %151#5 {offsets = [0, 2], sizes = [2, 510], strides = [1, 1]} : vector<2x512xf32> to vector<2x510xf32>
    %169 = vector.extract_strided_slice %151#5 {offsets = [0, 0], sizes = [2, 2], strides = [1, 1]} : vector<2x512xf32> to vector<2x2xf32>
    %170 = tpu.concatenate %168, %169 in 1 : vector<2x510xf32>, vector<2x2xf32> -> vector<2x512xf32>
    %171 = arith.addf %167, %170 : vector<2x512xf32>
    %172 = vector.extract_strided_slice %151#6 {offsets = [0, 42], sizes = [2, 470], strides = [1, 1]} : vector<2x512xf32> to vector<2x470xf32>
    %173 = vector.extract_strided_slice %151#6 {offsets = [0, 0], sizes = [2, 42], strides = [1, 1]} : vector<2x512xf32> to vector<2x42xf32>
    %174 = tpu.concatenate %172, %173 in 1 : vector<2x470xf32>, vector<2x42xf32> -> vector<2x512xf32>
    %175 = arith.addf %171, %174 : vector<2x512xf32>
    %176 = vector.extract_strided_slice %151#7 {offsets = [0, 44], sizes = [2, 468], strides = [1, 1]} : vector<2x512xf32> to vector<2x468xf32>
    %177 = vector.extract_strided_slice %151#7 {offsets = [0, 0], sizes = [2, 44], strides = [1, 1]} : vector<2x512xf32> to vector<2x44xf32>
    %178 = tpu.concatenate %176, %177 in 1 : vector<2x468xf32>, vector<2x44xf32> -> vector<2x512xf32>
    %179 = arith.addf %175, %178 : vector<2x512xf32>
    %180 = vector.extract_strided_slice %151#8 {offsets = [0, 46], sizes = [2, 466], strides = [1, 1]} : vector<2x512xf32> to vector<2x466xf32>
    %181 = vector.extract_strided_slice %151#8 {offsets = [0, 0], sizes = [2, 46], strides = [1, 1]} : vector<2x512xf32> to vector<2x46xf32>
    %182 = tpu.concatenate %180, %181 in 1 : vector<2x466xf32>, vector<2x46xf32> -> vector<2x512xf32>
    %183 = arith.addf %179, %182 : vector<2x512xf32>
    %184 = arith.mulf %183, %1 : vector<2x512xf32>
    %185 = vector.shape_cast %184 : vector<2x512xf32> to vector<1x2x512xf32>
    %cst_43 = arith.constant dense<0.000000e+00> : vector<1xf32>
    %186 = vector.multi_reduction <add>, %185, %cst_43 [1, 2] : vector<1x2x512xf32> to vector<1xf32>
    %187 = vector.shape_cast %186 : vector<1xf32> to vector<1x1x1xf32>
    %188 = vector.extract %187[0, 0, 0] : f32 from vector<1x1x1xf32>
    %cst_44 = arith.constant 0.001953125 : f32
    %189 = arith.mulf %188, %cst_44 : f32
    %190 = vector.broadcast %189 : f32 to vector<2x512xf32>
    %191 = arith.subf %183, %190 : vector<2x512xf32>
    %192 = arith.mulf %191, %1 : vector<2x512xf32>
    %193 = arith.mulf %192, %192 : vector<2x512xf32>
    %194 = vector.shape_cast %193 : vector<2x512xf32> to vector<1x2x512xf32>
    %cst_45 = arith.constant dense<0.000000e+00> : vector<1xf32>
    %195 = vector.multi_reduction <add>, %194, %cst_45 [1, 2] : vector<1x2x512xf32> to vector<1xf32>
    %196 = vector.shape_cast %195 : vector<1xf32> to vector<1x1x1xf32>
    %197 = vector.extract %196[0, 0, 0] : f32 from vector<1x1x1xf32>
    %cst_46 = arith.constant 0.001953125 : f32
    %198 = arith.mulf %197, %cst_46 : f32
    %c1_47 = arith.constant 1 : index
    %199 = memref.load %arg3[%c1_47] : memref<8xf32, #tpu.memory_space<smem>>
    %cst_48 = arith.constant 9.99999974E-6 : f32
    %200 = arith.addf %198, %cst_48 : f32
    %201 = math.rsqrt %200 : f32
    %202 = arith.mulf %199, %201 : f32
    %203 = vector.broadcast %202 : f32 to vector<2x512xf32>
    %204 = arith.mulf %192, %203 : vector<2x512xf32>
    %c1_49 = arith.constant 1 : index
    %205 = memref.load %arg4[%c1_49] : memref<8xf32, #tpu.memory_space<smem>>
    %206 = vector.broadcast %205 : f32 to vector<2x512xf32>
    %207 = arith.addf %204, %206 : vector<2x512xf32>
    %cst_50 = arith.constant 0.000000e+00 : f32
    %208 = vector.broadcast %cst_50 : f32 to vector<2x512xf32>
    %209 = arith.maximumf %207, %208 : vector<2x512xf32>
    %210 = arith.mulf %209, %1 : vector<2x512xf32>
    %c2 = arith.constant 2 : index
    %c0_51 = arith.constant 0 : index
    %c0_52 = arith.constant 0 : index
    %211 = vector.load %arg8[%c2, %c0_51, %c0_52] : memref<9x2x512xf32, #tpu.memory_space<vmem>>, vector<1x2x512xf32>
    %212 = vector.shape_cast %211 : vector<1x2x512xf32> to vector<2x512xf32>
    %213 = vector.shape_cast %210 : vector<2x512xf32> to vector<1x2x512xf32>
    tpu.vector_store %arg8[%c2, %c0_51, %c0_52], %213 {strides = array<i32>} : memref<9x2x512xf32, #tpu.memory_space<vmem>>, vector<1x2x512xf32>,
    %c2_53 = arith.constant 2 : index
    %214 = memref.load %arg5[%c2_53] : memref<9xf32, #tpu.memory_space<smem>>
    %215 = vector.broadcast %214 : f32 to vector<2x512xf32>
    %216 = arith.mulf %215, %210 : vector<2x512xf32>
    %217 = arith.addf %149, %216 : vector<2x512xf32>
    %c0_i32_54 = arith.constant 0 : i32
    %c3_i32_55 = arith.constant 3 : i32
    %218 = arith.addi %c0_i32_54, %c3_i32_55 : i32
    %c1_i32_56 = arith.constant 1 : i32
    %219:9 = scf.for %arg9 = %c0_i32_54 to %218 step %c1_i32_56 iter_args(%arg10 = %8, %arg11 = %8, %arg12 = %8, %arg13 = %8, %arg14 = %8, %arg15 = %8, %arg16 = %8, %arg17 = %8, %arg18 = %8) -> (vector<2x512xf32>, vector<2x512xf32>, vector<2x512xf32>, vector<2x512xf32>, vector<2x512xf32>, vector<2x512xf32>, vector<2x512xf32>, vector<2x512xf32>, vector<2x512xf32>)  : i32 {
      %635 = arith.index_cast %arg9 : i32 to index
      %c0_148 = arith.constant 0 : index
      %c0_149 = arith.constant 0 : index
      %636 = vector.load %arg8[%635, %c0_148, %c0_149] : memref<9x2x512xf32, #tpu.memory_space<vmem>>, vector<1x2x512xf32>
      %637 = vector.shape_cast %636 : vector<1x2x512xf32> to vector<2x512xf32>
      %c9_i32_150 = arith.constant 9 : i32
      %638 = arith.muli %arg9, %c9_i32_150 : i32
      %c27_i32 = arith.constant 27 : i32
      %639 = arith.addi %c27_i32, %638 : i32
      %c0_i32_151 = arith.constant 0 : i32
      %640 = arith.addi %639, %c0_i32_151 : i32
      %641 = arith.index_cast %640 : i32 to index
      %642 = memref.load %arg2[%641] : memref<324xf32, #tpu.memory_space<smem>>
      %643 = vector.broadcast %642 : f32 to vector<2x512xf32>
      %644 = arith.mulf %643, %637 : vector<2x512xf32>
      %645 = arith.addf %arg10, %644 : vector<2x512xf32>
      %c9_i32_152 = arith.constant 9 : i32
      %646 = arith.muli %arg9, %c9_i32_152 : i32
      %c27_i32_153 = arith.constant 27 : i32
      %647 = arith.addi %c27_i32_153, %646 : i32
      %c1_i32_154 = arith.constant 1 : i32
      %648 = arith.addi %647, %c1_i32_154 : i32
      %649 = arith.index_cast %648 : i32 to index
      %650 = memref.load %arg2[%649] : memref<324xf32, #tpu.memory_space<smem>>
      %651 = vector.broadcast %650 : f32 to vector<2x512xf32>
      %652 = arith.mulf %651, %637 : vector<2x512xf32>
      %653 = arith.addf %arg11, %652 : vector<2x512xf32>
      %c9_i32_155 = arith.constant 9 : i32
      %654 = arith.muli %arg9, %c9_i32_155 : i32
      %c27_i32_156 = arith.constant 27 : i32
      %655 = arith.addi %c27_i32_156, %654 : i32
      %c2_i32_157 = arith.constant 2 : i32
      %656 = arith.addi %655, %c2_i32_157 : i32
      %657 = arith.index_cast %656 : i32 to index
      %658 = memref.load %arg2[%657] : memref<324xf32, #tpu.memory_space<smem>>
      %659 = vector.broadcast %658 : f32 to vector<2x512xf32>
      %660 = arith.mulf %659, %637 : vector<2x512xf32>
      %661 = arith.addf %arg12, %660 : vector<2x512xf32>
      %c9_i32_158 = arith.constant 9 : i32
      %662 = arith.muli %arg9, %c9_i32_158 : i32
      %c27_i32_159 = arith.constant 27 : i32
      %663 = arith.addi %c27_i32_159, %662 : i32
      %c3_i32_160 = arith.constant 3 : i32
      %664 = arith.addi %663, %c3_i32_160 : i32
      %665 = arith.index_cast %664 : i32 to index
      %666 = memref.load %arg2[%665] : memref<324xf32, #tpu.memory_space<smem>>
      %667 = vector.broadcast %666 : f32 to vector<2x512xf32>
      %668 = arith.mulf %667, %637 : vector<2x512xf32>
      %669 = arith.addf %arg13, %668 : vector<2x512xf32>
      %c9_i32_161 = arith.constant 9 : i32
      %670 = arith.muli %arg9, %c9_i32_161 : i32
      %c27_i32_162 = arith.constant 27 : i32
      %671 = arith.addi %c27_i32_162, %670 : i32
      %c4_i32_163 = arith.constant 4 : i32
      %672 = arith.addi %671, %c4_i32_163 : i32
      %673 = arith.index_cast %672 : i32 to index
      %674 = memref.load %arg2[%673] : memref<324xf32, #tpu.memory_space<smem>>
      %675 = vector.broadcast %674 : f32 to vector<2x512xf32>
      %676 = arith.mulf %675, %637 : vector<2x512xf32>
      %677 = arith.addf %arg14, %676 : vector<2x512xf32>
      %c9_i32_164 = arith.constant 9 : i32
      %678 = arith.muli %arg9, %c9_i32_164 : i32
      %c27_i32_165 = arith.constant 27 : i32
      %679 = arith.addi %c27_i32_165, %678 : i32
      %c5_i32_166 = arith.constant 5 : i32
      %680 = arith.addi %679, %c5_i32_166 : i32
      %681 = arith.index_cast %680 : i32 to index
      %682 = memref.load %arg2[%681] : memref<324xf32, #tpu.memory_space<smem>>
      %683 = vector.broadcast %682 : f32 to vector<2x512xf32>
      %684 = arith.mulf %683, %637 : vector<2x512xf32>
      %685 = arith.addf %arg15, %684 : vector<2x512xf32>
      %c9_i32_167 = arith.constant 9 : i32
      %686 = arith.muli %arg9, %c9_i32_167 : i32
      %c27_i32_168 = arith.constant 27 : i32
      %687 = arith.addi %c27_i32_168, %686 : i32
      %c6_i32_169 = arith.constant 6 : i32
      %688 = arith.addi %687, %c6_i32_169 : i32
      %689 = arith.index_cast %688 : i32 to index
      %690 = memref.load %arg2[%689] : memref<324xf32, #tpu.memory_space<smem>>
      %691 = vector.broadcast %690 : f32 to vector<2x512xf32>
      %692 = arith.mulf %691, %637 : vector<2x512xf32>
      %693 = arith.addf %arg16, %692 : vector<2x512xf32>
      %c9_i32_170 = arith.constant 9 : i32
      %694 = arith.muli %arg9, %c9_i32_170 : i32
      %c27_i32_171 = arith.constant 27 : i32
      %695 = arith.addi %c27_i32_171, %694 : i32
      %c7_i32_172 = arith.constant 7 : i32
      %696 = arith.addi %695, %c7_i32_172 : i32
      %697 = arith.index_cast %696 : i32 to index
      %698 = memref.load %arg2[%697] : memref<324xf32, #tpu.memory_space<smem>>
      %699 = vector.broadcast %698 : f32 to vector<2x512xf32>
      %700 = arith.mulf %699, %637 : vector<2x512xf32>
      %701 = arith.addf %arg17, %700 : vector<2x512xf32>
      %c9_i32_173 = arith.constant 9 : i32
      %702 = arith.muli %arg9, %c9_i32_173 : i32
      %c27_i32_174 = arith.constant 27 : i32
      %703 = arith.addi %c27_i32_174, %702 : i32
      %c8_i32_175 = arith.constant 8 : i32
      %704 = arith.addi %703, %c8_i32_175 : i32
      %705 = arith.index_cast %704 : i32 to index
      %706 = memref.load %arg2[%705] : memref<324xf32, #tpu.memory_space<smem>>
      %707 = vector.broadcast %706 : f32 to vector<2x512xf32>
      %708 = arith.mulf %707, %637 : vector<2x512xf32>
      %709 = arith.addf %arg18, %708 : vector<2x512xf32>
      scf.yield %645, %653, %661, %669, %677, %685, %693, %701, %709 : vector<2x512xf32>, vector<2x512xf32>, vector<2x512xf32>, vector<2x512xf32>, vector<2x512xf32>, vector<2x512xf32>, vector<2x512xf32>, vector<2x512xf32>, vector<2x512xf32>
    }
    %c3_i32_57 = arith.constant 3 : i32
    %220 = vector.extract_strided_slice %219#0 {offsets = [0, 443], sizes = [2, 69], strides = [1, 1]} : vector<2x512xf32> to vector<2x69xf32>
    %221 = vector.extract_strided_slice %219#0 {offsets = [0, 0], sizes = [2, 443], strides = [1, 1]} : vector<2x512xf32> to vector<2x443xf32>
    %222 = tpu.concatenate %220, %221 in 1 : vector<2x69xf32>, vector<2x443xf32> -> vector<2x512xf32>
    %223 = arith.addf %219#4, %222 : vector<2x512xf32>
    %224 = vector.extract_strided_slice %219#1 {offsets = [0, 446], sizes = [2, 66], strides = [1, 1]} : vector<2x512xf32> to vector<2x66xf32>
    %225 = vector.extract_strided_slice %219#1 {offsets = [0, 0], sizes = [2, 446], strides = [1, 1]} : vector<2x512xf32> to vector<2x446xf32>
    %226 = tpu.concatenate %224, %225 in 1 : vector<2x66xf32>, vector<2x446xf32> -> vector<2x512xf32>
    %227 = arith.addf %223, %226 : vector<2x512xf32>
    %228 = vector.extract_strided_slice %219#2 {offsets = [0, 449], sizes = [2, 63], strides = [1, 1]} : vector<2x512xf32> to vector<2x63xf32>
    %229 = vector.extract_strided_slice %219#2 {offsets = [0, 0], sizes = [2, 449], strides = [1, 1]} : vector<2x512xf32> to vector<2x449xf32>
    %230 = tpu.concatenate %228, %229 in 1 : vector<2x63xf32>, vector<2x449xf32> -> vector<2x512xf32>
    %231 = arith.addf %227, %230 : vector<2x512xf32>
    %232 = vector.extract_strided_slice %219#3 {offsets = [0, 509], sizes = [2, 3], strides = [1, 1]} : vector<2x512xf32> to vector<2x3xf32>
    %233 = vector.extract_strided_slice %219#3 {offsets = [0, 0], sizes = [2, 509], strides = [1, 1]} : vector<2x512xf32> to vector<2x509xf32>
    %234 = tpu.concatenate %232, %233 in 1 : vector<2x3xf32>, vector<2x509xf32> -> vector<2x512xf32>
    %235 = arith.addf %231, %234 : vector<2x512xf32>
    %236 = vector.extract_strided_slice %219#5 {offsets = [0, 3], sizes = [2, 509], strides = [1, 1]} : vector<2x512xf32> to vector<2x509xf32>
    %237 = vector.extract_strided_slice %219#5 {offsets = [0, 0], sizes = [2, 3], strides = [1, 1]} : vector<2x512xf32> to vector<2x3xf32>
    %238 = tpu.concatenate %236, %237 in 1 : vector<2x509xf32>, vector<2x3xf32> -> vector<2x512xf32>
    %239 = arith.addf %235, %238 : vector<2x512xf32>
    %240 = vector.extract_strided_slice %219#6 {offsets = [0, 63], sizes = [2, 449], strides = [1, 1]} : vector<2x512xf32> to vector<2x449xf32>
    %241 = vector.extract_strided_slice %219#6 {offsets = [0, 0], sizes = [2, 63], strides = [1, 1]} : vector<2x512xf32> to vector<2x63xf32>
    %242 = tpu.concatenate %240, %241 in 1 : vector<2x449xf32>, vector<2x63xf32> -> vector<2x512xf32>
    %243 = arith.addf %239, %242 : vector<2x512xf32>
    %244 = vector.extract_strided_slice %219#7 {offsets = [0, 66], sizes = [2, 446], strides = [1, 1]} : vector<2x512xf32> to vector<2x446xf32>
    %245 = vector.extract_strided_slice %219#7 {offsets = [0, 0], sizes = [2, 66], strides = [1, 1]} : vector<2x512xf32> to vector<2x66xf32>
    %246 = tpu.concatenate %244, %245 in 1 : vector<2x446xf32>, vector<2x66xf32> -> vector<2x512xf32>
    %247 = arith.addf %243, %246 : vector<2x512xf32>
    %248 = vector.extract_strided_slice %219#8 {offsets = [0, 69], sizes = [2, 443], strides = [1, 1]} : vector<2x512xf32> to vector<2x443xf32>
    %249 = vector.extract_strided_slice %219#8 {offsets = [0, 0], sizes = [2, 69], strides = [1, 1]} : vector<2x512xf32> to vector<2x69xf32>
    %250 = tpu.concatenate %248, %249 in 1 : vector<2x443xf32>, vector<2x69xf32> -> vector<2x512xf32>
    %251 = arith.addf %247, %250 : vector<2x512xf32>
    %252 = arith.mulf %251, %1 : vector<2x512xf32>
    %253 = vector.shape_cast %252 : vector<2x512xf32> to vector<1x2x512xf32>
    %cst_58 = arith.constant dense<0.000000e+00> : vector<1xf32>
    %254 = vector.multi_reduction <add>, %253, %cst_58 [1, 2] : vector<1x2x512xf32> to vector<1xf32>
    %255 = vector.shape_cast %254 : vector<1xf32> to vector<1x1x1xf32>
    %256 = vector.extract %255[0, 0, 0] : f32 from vector<1x1x1xf32>
    %cst_59 = arith.constant 0.001953125 : f32
    %257 = arith.mulf %256, %cst_59 : f32
    %258 = vector.broadcast %257 : f32 to vector<2x512xf32>
    %259 = arith.subf %251, %258 : vector<2x512xf32>
    %260 = arith.mulf %259, %1 : vector<2x512xf32>
    %261 = arith.mulf %260, %260 : vector<2x512xf32>
    %262 = vector.shape_cast %261 : vector<2x512xf32> to vector<1x2x512xf32>
    %cst_60 = arith.constant dense<0.000000e+00> : vector<1xf32>
    %263 = vector.multi_reduction <add>, %262, %cst_60 [1, 2] : vector<1x2x512xf32> to vector<1xf32>
    %264 = vector.shape_cast %263 : vector<1xf32> to vector<1x1x1xf32>
    %265 = vector.extract %264[0, 0, 0] : f32 from vector<1x1x1xf32>
    %cst_61 = arith.constant 0.001953125 : f32
    %266 = arith.mulf %265, %cst_61 : f32
    %c2_62 = arith.constant 2 : index
    %267 = memref.load %arg3[%c2_62] : memref<8xf32, #tpu.memory_space<smem>>
    %cst_63 = arith.constant 9.99999974E-6 : f32
    %268 = arith.addf %266, %cst_63 : f32
    %269 = math.rsqrt %268 : f32
    %270 = arith.mulf %267, %269 : f32
    %271 = vector.broadcast %270 : f32 to vector<2x512xf32>
    %272 = arith.mulf %260, %271 : vector<2x512xf32>
    %c2_64 = arith.constant 2 : index
    %273 = memref.load %arg4[%c2_64] : memref<8xf32, #tpu.memory_space<smem>>
    %274 = vector.broadcast %273 : f32 to vector<2x512xf32>
    %275 = arith.addf %272, %274 : vector<2x512xf32>
    %cst_65 = arith.constant 0.000000e+00 : f32
    %276 = vector.broadcast %cst_65 : f32 to vector<2x512xf32>
    %277 = arith.maximumf %275, %276 : vector<2x512xf32>
    %278 = arith.mulf %277, %1 : vector<2x512xf32>
    %c3 = arith.constant 3 : index
    %c0_66 = arith.constant 0 : index
    %c0_67 = arith.constant 0 : index
    %279 = vector.load %arg8[%c3, %c0_66, %c0_67] : memref<9x2x512xf32, #tpu.memory_space<vmem>>, vector<1x2x512xf32>
    %280 = vector.shape_cast %279 : vector<1x2x512xf32> to vector<2x512xf32>
    %281 = vector.shape_cast %278 : vector<2x512xf32> to vector<1x2x512xf32>
    tpu.vector_store %arg8[%c3, %c0_66, %c0_67], %281 {strides = array<i32>} : memref<9x2x512xf32, #tpu.memory_space<vmem>>, vector<1x2x512xf32>,
    %c3_68 = arith.constant 3 : index
    %282 = memref.load %arg5[%c3_68] : memref<9xf32, #tpu.memory_space<smem>>
    %283 = vector.broadcast %282 : f32 to vector<2x512xf32>
    %284 = arith.mulf %283, %278 : vector<2x512xf32>
    %285 = arith.addf %217, %284 : vector<2x512xf32>
    %c0_i32_69 = arith.constant 0 : i32
    %c4_i32_70 = arith.constant 4 : i32
    %286 = arith.addi %c0_i32_69, %c4_i32_70 : i32
    %c1_i32_71 = arith.constant 1 : i32
    %287:9 = scf.for %arg9 = %c0_i32_69 to %286 step %c1_i32_71 iter_args(%arg10 = %8, %arg11 = %8, %arg12 = %8, %arg13 = %8, %arg14 = %8, %arg15 = %8, %arg16 = %8, %arg17 = %8, %arg18 = %8) -> (vector<2x512xf32>, vector<2x512xf32>, vector<2x512xf32>, vector<2x512xf32>, vector<2x512xf32>, vector<2x512xf32>, vector<2x512xf32>, vector<2x512xf32>, vector<2x512xf32>)  : i32 {
      %635 = arith.index_cast %arg9 : i32 to index
      %c0_148 = arith.constant 0 : index
      %c0_149 = arith.constant 0 : index
      %636 = vector.load %arg8[%635, %c0_148, %c0_149] : memref<9x2x512xf32, #tpu.memory_space<vmem>>, vector<1x2x512xf32>
      %637 = vector.shape_cast %636 : vector<1x2x512xf32> to vector<2x512xf32>
      %c9_i32_150 = arith.constant 9 : i32
      %638 = arith.muli %arg9, %c9_i32_150 : i32
      %c54_i32 = arith.constant 54 : i32
      %639 = arith.addi %c54_i32, %638 : i32
      %c0_i32_151 = arith.constant 0 : i32
      %640 = arith.addi %639, %c0_i32_151 : i32
      %641 = arith.index_cast %640 : i32 to index
      %642 = memref.load %arg2[%641] : memref<324xf32, #tpu.memory_space<smem>>
      %643 = vector.broadcast %642 : f32 to vector<2x512xf32>
      %644 = arith.mulf %643, %637 : vector<2x512xf32>
      %645 = arith.addf %arg10, %644 : vector<2x512xf32>
      %c9_i32_152 = arith.constant 9 : i32
      %646 = arith.muli %arg9, %c9_i32_152 : i32
      %c54_i32_153 = arith.constant 54 : i32
      %647 = arith.addi %c54_i32_153, %646 : i32
      %c1_i32_154 = arith.constant 1 : i32
      %648 = arith.addi %647, %c1_i32_154 : i32
      %649 = arith.index_cast %648 : i32 to index
      %650 = memref.load %arg2[%649] : memref<324xf32, #tpu.memory_space<smem>>
      %651 = vector.broadcast %650 : f32 to vector<2x512xf32>
      %652 = arith.mulf %651, %637 : vector<2x512xf32>
      %653 = arith.addf %arg11, %652 : vector<2x512xf32>
      %c9_i32_155 = arith.constant 9 : i32
      %654 = arith.muli %arg9, %c9_i32_155 : i32
      %c54_i32_156 = arith.constant 54 : i32
      %655 = arith.addi %c54_i32_156, %654 : i32
      %c2_i32_157 = arith.constant 2 : i32
      %656 = arith.addi %655, %c2_i32_157 : i32
      %657 = arith.index_cast %656 : i32 to index
      %658 = memref.load %arg2[%657] : memref<324xf32, #tpu.memory_space<smem>>
      %659 = vector.broadcast %658 : f32 to vector<2x512xf32>
      %660 = arith.mulf %659, %637 : vector<2x512xf32>
      %661 = arith.addf %arg12, %660 : vector<2x512xf32>
      %c9_i32_158 = arith.constant 9 : i32
      %662 = arith.muli %arg9, %c9_i32_158 : i32
      %c54_i32_159 = arith.constant 54 : i32
      %663 = arith.addi %c54_i32_159, %662 : i32
      %c3_i32_160 = arith.constant 3 : i32
      %664 = arith.addi %663, %c3_i32_160 : i32
      %665 = arith.index_cast %664 : i32 to index
      %666 = memref.load %arg2[%665] : memref<324xf32, #tpu.memory_space<smem>>
      %667 = vector.broadcast %666 : f32 to vector<2x512xf32>
      %668 = arith.mulf %667, %637 : vector<2x512xf32>
      %669 = arith.addf %arg13, %668 : vector<2x512xf32>
      %c9_i32_161 = arith.constant 9 : i32
      %670 = arith.muli %arg9, %c9_i32_161 : i32
      %c54_i32_162 = arith.constant 54 : i32
      %671 = arith.addi %c54_i32_162, %670 : i32
      %c4_i32_163 = arith.constant 4 : i32
      %672 = arith.addi %671, %c4_i32_163 : i32
      %673 = arith.index_cast %672 : i32 to index
      %674 = memref.load %arg2[%673] : memref<324xf32, #tpu.memory_space<smem>>
      %675 = vector.broadcast %674 : f32 to vector<2x512xf32>
      %676 = arith.mulf %675, %637 : vector<2x512xf32>
      %677 = arith.addf %arg14, %676 : vector<2x512xf32>
      %c9_i32_164 = arith.constant 9 : i32
      %678 = arith.muli %arg9, %c9_i32_164 : i32
      %c54_i32_165 = arith.constant 54 : i32
      %679 = arith.addi %c54_i32_165, %678 : i32
      %c5_i32_166 = arith.constant 5 : i32
      %680 = arith.addi %679, %c5_i32_166 : i32
      %681 = arith.index_cast %680 : i32 to index
      %682 = memref.load %arg2[%681] : memref<324xf32, #tpu.memory_space<smem>>
      %683 = vector.broadcast %682 : f32 to vector<2x512xf32>
      %684 = arith.mulf %683, %637 : vector<2x512xf32>
      %685 = arith.addf %arg15, %684 : vector<2x512xf32>
      %c9_i32_167 = arith.constant 9 : i32
      %686 = arith.muli %arg9, %c9_i32_167 : i32
      %c54_i32_168 = arith.constant 54 : i32
      %687 = arith.addi %c54_i32_168, %686 : i32
      %c6_i32_169 = arith.constant 6 : i32
      %688 = arith.addi %687, %c6_i32_169 : i32
      %689 = arith.index_cast %688 : i32 to index
      %690 = memref.load %arg2[%689] : memref<324xf32, #tpu.memory_space<smem>>
      %691 = vector.broadcast %690 : f32 to vector<2x512xf32>
      %692 = arith.mulf %691, %637 : vector<2x512xf32>
      %693 = arith.addf %arg16, %692 : vector<2x512xf32>
      %c9_i32_170 = arith.constant 9 : i32
      %694 = arith.muli %arg9, %c9_i32_170 : i32
      %c54_i32_171 = arith.constant 54 : i32
      %695 = arith.addi %c54_i32_171, %694 : i32
      %c7_i32_172 = arith.constant 7 : i32
      %696 = arith.addi %695, %c7_i32_172 : i32
      %697 = arith.index_cast %696 : i32 to index
      %698 = memref.load %arg2[%697] : memref<324xf32, #tpu.memory_space<smem>>
      %699 = vector.broadcast %698 : f32 to vector<2x512xf32>
      %700 = arith.mulf %699, %637 : vector<2x512xf32>
      %701 = arith.addf %arg17, %700 : vector<2x512xf32>
      %c9_i32_173 = arith.constant 9 : i32
      %702 = arith.muli %arg9, %c9_i32_173 : i32
      %c54_i32_174 = arith.constant 54 : i32
      %703 = arith.addi %c54_i32_174, %702 : i32
      %c8_i32_175 = arith.constant 8 : i32
      %704 = arith.addi %703, %c8_i32_175 : i32
      %705 = arith.index_cast %704 : i32 to index
      %706 = memref.load %arg2[%705] : memref<324xf32, #tpu.memory_space<smem>>
      %707 = vector.broadcast %706 : f32 to vector<2x512xf32>
      %708 = arith.mulf %707, %637 : vector<2x512xf32>
      %709 = arith.addf %arg18, %708 : vector<2x512xf32>
      scf.yield %645, %653, %661, %669, %677, %685, %693, %701, %709 : vector<2x512xf32>, vector<2x512xf32>, vector<2x512xf32>, vector<2x512xf32>, vector<2x512xf32>, vector<2x512xf32>, vector<2x512xf32>, vector<2x512xf32>, vector<2x512xf32>
    }
    %c4_i32_72 = arith.constant 4 : i32
    %288 = vector.extract_strided_slice %287#0 {offsets = [0, 489], sizes = [2, 23], strides = [1, 1]} : vector<2x512xf32> to vector<2x23xf32>
    %289 = vector.extract_strided_slice %287#0 {offsets = [0, 0], sizes = [2, 489], strides = [1, 1]} : vector<2x512xf32> to vector<2x489xf32>
    %290 = tpu.concatenate %288, %289 in 1 : vector<2x23xf32>, vector<2x489xf32> -> vector<2x512xf32>
    %291 = arith.addf %287#4, %290 : vector<2x512xf32>
    %292 = vector.extract_strided_slice %287#1 {offsets = [0, 490], sizes = [2, 22], strides = [1, 1]} : vector<2x512xf32> to vector<2x22xf32>
    %293 = vector.extract_strided_slice %287#1 {offsets = [0, 0], sizes = [2, 490], strides = [1, 1]} : vector<2x512xf32> to vector<2x490xf32>
    %294 = tpu.concatenate %292, %293 in 1 : vector<2x22xf32>, vector<2x490xf32> -> vector<2x512xf32>
    %295 = arith.addf %291, %294 : vector<2x512xf32>
    %296 = vector.extract_strided_slice %287#2 {offsets = [0, 491], sizes = [2, 21], strides = [1, 1]} : vector<2x512xf32> to vector<2x21xf32>
    %297 = vector.extract_strided_slice %287#2 {offsets = [0, 0], sizes = [2, 491], strides = [1, 1]} : vector<2x512xf32> to vector<2x491xf32>
    %298 = tpu.concatenate %296, %297 in 1 : vector<2x21xf32>, vector<2x491xf32> -> vector<2x512xf32>
    %299 = arith.addf %295, %298 : vector<2x512xf32>
    %300 = vector.extract_strided_slice %287#3 {offsets = [0, 511], sizes = [2, 1], strides = [1, 1]} : vector<2x512xf32> to vector<2x1xf32>
    %301 = vector.extract_strided_slice %287#3 {offsets = [0, 0], sizes = [2, 511], strides = [1, 1]} : vector<2x512xf32> to vector<2x511xf32>
    %302 = tpu.concatenate %300, %301 in 1 : vector<2x1xf32>, vector<2x511xf32> -> vector<2x512xf32>
    %303 = arith.addf %299, %302 : vector<2x512xf32>
    %304 = vector.extract_strided_slice %287#5 {offsets = [0, 1], sizes = [2, 511], strides = [1, 1]} : vector<2x512xf32> to vector<2x511xf32>
    %305 = vector.extract_strided_slice %287#5 {offsets = [0, 0], sizes = [2, 1], strides = [1, 1]} : vector<2x512xf32> to vector<2x1xf32>
    %306 = tpu.concatenate %304, %305 in 1 : vector<2x511xf32>, vector<2x1xf32> -> vector<2x512xf32>
    %307 = arith.addf %303, %306 : vector<2x512xf32>
    %308 = vector.extract_strided_slice %287#6 {offsets = [0, 21], sizes = [2, 491], strides = [1, 1]} : vector<2x512xf32> to vector<2x491xf32>
    %309 = vector.extract_strided_slice %287#6 {offsets = [0, 0], sizes = [2, 21], strides = [1, 1]} : vector<2x512xf32> to vector<2x21xf32>
    %310 = tpu.concatenate %308, %309 in 1 : vector<2x491xf32>, vector<2x21xf32> -> vector<2x512xf32>
    %311 = arith.addf %307, %310 : vector<2x512xf32>
    %312 = vector.extract_strided_slice %287#7 {offsets = [0, 22], sizes = [2, 490], strides = [1, 1]} : vector<2x512xf32> to vector<2x490xf32>
    %313 = vector.extract_strided_slice %287#7 {offsets = [0, 0], sizes = [2, 22], strides = [1, 1]} : vector<2x512xf32> to vector<2x22xf32>
    %314 = tpu.concatenate %312, %313 in 1 : vector<2x490xf32>, vector<2x22xf32> -> vector<2x512xf32>
    %315 = arith.addf %311, %314 : vector<2x512xf32>
    %316 = vector.extract_strided_slice %287#8 {offsets = [0, 23], sizes = [2, 489], strides = [1, 1]} : vector<2x512xf32> to vector<2x489xf32>
    %317 = vector.extract_strided_slice %287#8 {offsets = [0, 0], sizes = [2, 23], strides = [1, 1]} : vector<2x512xf32> to vector<2x23xf32>
    %318 = tpu.concatenate %316, %317 in 1 : vector<2x489xf32>, vector<2x23xf32> -> vector<2x512xf32>
    %319 = arith.addf %315, %318 : vector<2x512xf32>
    %320 = arith.mulf %319, %1 : vector<2x512xf32>
    %321 = vector.shape_cast %320 : vector<2x512xf32> to vector<1x2x512xf32>
    %cst_73 = arith.constant dense<0.000000e+00> : vector<1xf32>
    %322 = vector.multi_reduction <add>, %321, %cst_73 [1, 2] : vector<1x2x512xf32> to vector<1xf32>
    %323 = vector.shape_cast %322 : vector<1xf32> to vector<1x1x1xf32>
    %324 = vector.extract %323[0, 0, 0] : f32 from vector<1x1x1xf32>
    %cst_74 = arith.constant 0.001953125 : f32
    %325 = arith.mulf %324, %cst_74 : f32
    %326 = vector.broadcast %325 : f32 to vector<2x512xf32>
    %327 = arith.subf %319, %326 : vector<2x512xf32>
    %328 = arith.mulf %327, %1 : vector<2x512xf32>
    %329 = arith.mulf %328, %328 : vector<2x512xf32>
    %330 = vector.shape_cast %329 : vector<2x512xf32> to vector<1x2x512xf32>
    %cst_75 = arith.constant dense<0.000000e+00> : vector<1xf32>
    %331 = vector.multi_reduction <add>, %330, %cst_75 [1, 2] : vector<1x2x512xf32> to vector<1xf32>
    %332 = vector.shape_cast %331 : vector<1xf32> to vector<1x1x1xf32>
    %333 = vector.extract %332[0, 0, 0] : f32 from vector<1x1x1xf32>
    %cst_76 = arith.constant 0.001953125 : f32
    %334 = arith.mulf %333, %cst_76 : f32
    %c3_77 = arith.constant 3 : index
    %335 = memref.load %arg3[%c3_77] : memref<8xf32, #tpu.memory_space<smem>>
    %cst_78 = arith.constant 9.99999974E-6 : f32
    %336 = arith.addf %334, %cst_78 : f32
    %337 = math.rsqrt %336 : f32
    %338 = arith.mulf %335, %337 : f32
    %339 = vector.broadcast %338 : f32 to vector<2x512xf32>
    %340 = arith.mulf %328, %339 : vector<2x512xf32>
    %c3_79 = arith.constant 3 : index
    %341 = memref.load %arg4[%c3_79] : memref<8xf32, #tpu.memory_space<smem>>
    %342 = vector.broadcast %341 : f32 to vector<2x512xf32>
    %343 = arith.addf %340, %342 : vector<2x512xf32>
    %cst_80 = arith.constant 0.000000e+00 : f32
    %344 = vector.broadcast %cst_80 : f32 to vector<2x512xf32>
    %345 = arith.maximumf %343, %344 : vector<2x512xf32>
    %346 = arith.mulf %345, %1 : vector<2x512xf32>
    %c4 = arith.constant 4 : index
    %c0_81 = arith.constant 0 : index
    %c0_82 = arith.constant 0 : index
    %347 = vector.load %arg8[%c4, %c0_81, %c0_82] : memref<9x2x512xf32, #tpu.memory_space<vmem>>, vector<1x2x512xf32>
    %348 = vector.shape_cast %347 : vector<1x2x512xf32> to vector<2x512xf32>
    %349 = vector.shape_cast %346 : vector<2x512xf32> to vector<1x2x512xf32>
    tpu.vector_store %arg8[%c4, %c0_81, %c0_82], %349 {strides = array<i32>} : memref<9x2x512xf32, #tpu.memory_space<vmem>>, vector<1x2x512xf32>,
    %c4_83 = arith.constant 4 : index
    %350 = memref.load %arg5[%c4_83] : memref<9xf32, #tpu.memory_space<smem>>
    %351 = vector.broadcast %350 : f32 to vector<2x512xf32>
    %352 = arith.mulf %351, %346 : vector<2x512xf32>
    %353 = arith.addf %285, %352 : vector<2x512xf32>
    %c0_i32_84 = arith.constant 0 : i32
    %c5_i32_85 = arith.constant 5 : i32
    %354 = arith.addi %c0_i32_84, %c5_i32_85 : i32
    %c1_i32_86 = arith.constant 1 : i32
    %355:9 = scf.for %arg9 = %c0_i32_84 to %354 step %c1_i32_86 iter_args(%arg10 = %8, %arg11 = %8, %arg12 = %8, %arg13 = %8, %arg14 = %8, %arg15 = %8, %arg16 = %8, %arg17 = %8, %arg18 = %8) -> (vector<2x512xf32>, vector<2x512xf32>, vector<2x512xf32>, vector<2x512xf32>, vector<2x512xf32>, vector<2x512xf32>, vector<2x512xf32>, vector<2x512xf32>, vector<2x512xf32>)  : i32 {
      %635 = arith.index_cast %arg9 : i32 to index
      %c0_148 = arith.constant 0 : index
      %c0_149 = arith.constant 0 : index
      %636 = vector.load %arg8[%635, %c0_148, %c0_149] : memref<9x2x512xf32, #tpu.memory_space<vmem>>, vector<1x2x512xf32>
      %637 = vector.shape_cast %636 : vector<1x2x512xf32> to vector<2x512xf32>
      %c9_i32_150 = arith.constant 9 : i32
      %638 = arith.muli %arg9, %c9_i32_150 : i32
      %c90_i32 = arith.constant 90 : i32
      %639 = arith.addi %c90_i32, %638 : i32
      %c0_i32_151 = arith.constant 0 : i32
      %640 = arith.addi %639, %c0_i32_151 : i32
      %641 = arith.index_cast %640 : i32 to index
      %642 = memref.load %arg2[%641] : memref<324xf32, #tpu.memory_space<smem>>
      %643 = vector.broadcast %642 : f32 to vector<2x512xf32>
      %644 = arith.mulf %643, %637 : vector<2x512xf32>
      %645 = arith.addf %arg10, %644 : vector<2x512xf32>
      %c9_i32_152 = arith.constant 9 : i32
      %646 = arith.muli %arg9, %c9_i32_152 : i32
      %c90_i32_153 = arith.constant 90 : i32
      %647 = arith.addi %c90_i32_153, %646 : i32
      %c1_i32_154 = arith.constant 1 : i32
      %648 = arith.addi %647, %c1_i32_154 : i32
      %649 = arith.index_cast %648 : i32 to index
      %650 = memref.load %arg2[%649] : memref<324xf32, #tpu.memory_space<smem>>
      %651 = vector.broadcast %650 : f32 to vector<2x512xf32>
      %652 = arith.mulf %651, %637 : vector<2x512xf32>
      %653 = arith.addf %arg11, %652 : vector<2x512xf32>
      %c9_i32_155 = arith.constant 9 : i32
      %654 = arith.muli %arg9, %c9_i32_155 : i32
      %c90_i32_156 = arith.constant 90 : i32
      %655 = arith.addi %c90_i32_156, %654 : i32
      %c2_i32_157 = arith.constant 2 : i32
      %656 = arith.addi %655, %c2_i32_157 : i32
      %657 = arith.index_cast %656 : i32 to index
      %658 = memref.load %arg2[%657] : memref<324xf32, #tpu.memory_space<smem>>
      %659 = vector.broadcast %658 : f32 to vector<2x512xf32>
      %660 = arith.mulf %659, %637 : vector<2x512xf32>
      %661 = arith.addf %arg12, %660 : vector<2x512xf32>
      %c9_i32_158 = arith.constant 9 : i32
      %662 = arith.muli %arg9, %c9_i32_158 : i32
      %c90_i32_159 = arith.constant 90 : i32
      %663 = arith.addi %c90_i32_159, %662 : i32
      %c3_i32_160 = arith.constant 3 : i32
      %664 = arith.addi %663, %c3_i32_160 : i32
      %665 = arith.index_cast %664 : i32 to index
      %666 = memref.load %arg2[%665] : memref<324xf32, #tpu.memory_space<smem>>
      %667 = vector.broadcast %666 : f32 to vector<2x512xf32>
      %668 = arith.mulf %667, %637 : vector<2x512xf32>
      %669 = arith.addf %arg13, %668 : vector<2x512xf32>
      %c9_i32_161 = arith.constant 9 : i32
      %670 = arith.muli %arg9, %c9_i32_161 : i32
      %c90_i32_162 = arith.constant 90 : i32
      %671 = arith.addi %c90_i32_162, %670 : i32
      %c4_i32_163 = arith.constant 4 : i32
      %672 = arith.addi %671, %c4_i32_163 : i32
      %673 = arith.index_cast %672 : i32 to index
      %674 = memref.load %arg2[%673] : memref<324xf32, #tpu.memory_space<smem>>
      %675 = vector.broadcast %674 : f32 to vector<2x512xf32>
      %676 = arith.mulf %675, %637 : vector<2x512xf32>
      %677 = arith.addf %arg14, %676 : vector<2x512xf32>
      %c9_i32_164 = arith.constant 9 : i32
      %678 = arith.muli %arg9, %c9_i32_164 : i32
      %c90_i32_165 = arith.constant 90 : i32
      %679 = arith.addi %c90_i32_165, %678 : i32
      %c5_i32_166 = arith.constant 5 : i32
      %680 = arith.addi %679, %c5_i32_166 : i32
      %681 = arith.index_cast %680 : i32 to index
      %682 = memref.load %arg2[%681] : memref<324xf32, #tpu.memory_space<smem>>
      %683 = vector.broadcast %682 : f32 to vector<2x512xf32>
      %684 = arith.mulf %683, %637 : vector<2x512xf32>
      %685 = arith.addf %arg15, %684 : vector<2x512xf32>
      %c9_i32_167 = arith.constant 9 : i32
      %686 = arith.muli %arg9, %c9_i32_167 : i32
      %c90_i32_168 = arith.constant 90 : i32
      %687 = arith.addi %c90_i32_168, %686 : i32
      %c6_i32_169 = arith.constant 6 : i32
      %688 = arith.addi %687, %c6_i32_169 : i32
      %689 = arith.index_cast %688 : i32 to index
      %690 = memref.load %arg2[%689] : memref<324xf32, #tpu.memory_space<smem>>
      %691 = vector.broadcast %690 : f32 to vector<2x512xf32>
      %692 = arith.mulf %691, %637 : vector<2x512xf32>
      %693 = arith.addf %arg16, %692 : vector<2x512xf32>
      %c9_i32_170 = arith.constant 9 : i32
      %694 = arith.muli %arg9, %c9_i32_170 : i32
      %c90_i32_171 = arith.constant 90 : i32
      %695 = arith.addi %c90_i32_171, %694 : i32
      %c7_i32_172 = arith.constant 7 : i32
      %696 = arith.addi %695, %c7_i32_172 : i32
      %697 = arith.index_cast %696 : i32 to index
      %698 = memref.load %arg2[%697] : memref<324xf32, #tpu.memory_space<smem>>
      %699 = vector.broadcast %698 : f32 to vector<2x512xf32>
      %700 = arith.mulf %699, %637 : vector<2x512xf32>
      %701 = arith.addf %arg17, %700 : vector<2x512xf32>
      %c9_i32_173 = arith.constant 9 : i32
      %702 = arith.muli %arg9, %c9_i32_173 : i32
      %c90_i32_174 = arith.constant 90 : i32
      %703 = arith.addi %c90_i32_174, %702 : i32
      %c8_i32_175 = arith.constant 8 : i32
      %704 = arith.addi %703, %c8_i32_175 : i32
      %705 = arith.index_cast %704 : i32 to index
      %706 = memref.load %arg2[%705] : memref<324xf32, #tpu.memory_space<smem>>
      %707 = vector.broadcast %706 : f32 to vector<2x512xf32>
      %708 = arith.mulf %707, %637 : vector<2x512xf32>
      %709 = arith.addf %arg18, %708 : vector<2x512xf32>
      scf.yield %645, %653, %661, %669, %677, %685, %693, %701, %709 : vector<2x512xf32>, vector<2x512xf32>, vector<2x512xf32>, vector<2x512xf32>, vector<2x512xf32>, vector<2x512xf32>, vector<2x512xf32>, vector<2x512xf32>, vector<2x512xf32>
    }
    %c5_i32_87 = arith.constant 5 : i32
    %356 = vector.extract_strided_slice %355#0 {offsets = [0, 466], sizes = [2, 46], strides = [1, 1]} : vector<2x512xf32> to vector<2x46xf32>
    %357 = vector.extract_strided_slice %355#0 {offsets = [0, 0], sizes = [2, 466], strides = [1, 1]} : vector<2x512xf32> to vector<2x466xf32>
    %358 = tpu.concatenate %356, %357 in 1 : vector<2x46xf32>, vector<2x466xf32> -> vector<2x512xf32>
    %359 = arith.addf %355#4, %358 : vector<2x512xf32>
    %360 = vector.extract_strided_slice %355#1 {offsets = [0, 468], sizes = [2, 44], strides = [1, 1]} : vector<2x512xf32> to vector<2x44xf32>
    %361 = vector.extract_strided_slice %355#1 {offsets = [0, 0], sizes = [2, 468], strides = [1, 1]} : vector<2x512xf32> to vector<2x468xf32>
    %362 = tpu.concatenate %360, %361 in 1 : vector<2x44xf32>, vector<2x468xf32> -> vector<2x512xf32>
    %363 = arith.addf %359, %362 : vector<2x512xf32>
    %364 = vector.extract_strided_slice %355#2 {offsets = [0, 470], sizes = [2, 42], strides = [1, 1]} : vector<2x512xf32> to vector<2x42xf32>
    %365 = vector.extract_strided_slice %355#2 {offsets = [0, 0], sizes = [2, 470], strides = [1, 1]} : vector<2x512xf32> to vector<2x470xf32>
    %366 = tpu.concatenate %364, %365 in 1 : vector<2x42xf32>, vector<2x470xf32> -> vector<2x512xf32>
    %367 = arith.addf %363, %366 : vector<2x512xf32>
    %368 = vector.extract_strided_slice %355#3 {offsets = [0, 510], sizes = [2, 2], strides = [1, 1]} : vector<2x512xf32> to vector<2x2xf32>
    %369 = vector.extract_strided_slice %355#3 {offsets = [0, 0], sizes = [2, 510], strides = [1, 1]} : vector<2x512xf32> to vector<2x510xf32>
    %370 = tpu.concatenate %368, %369 in 1 : vector<2x2xf32>, vector<2x510xf32> -> vector<2x512xf32>
    %371 = arith.addf %367, %370 : vector<2x512xf32>
    %372 = vector.extract_strided_slice %355#5 {offsets = [0, 2], sizes = [2, 510], strides = [1, 1]} : vector<2x512xf32> to vector<2x510xf32>
    %373 = vector.extract_strided_slice %355#5 {offsets = [0, 0], sizes = [2, 2], strides = [1, 1]} : vector<2x512xf32> to vector<2x2xf32>
    %374 = tpu.concatenate %372, %373 in 1 : vector<2x510xf32>, vector<2x2xf32> -> vector<2x512xf32>
    %375 = arith.addf %371, %374 : vector<2x512xf32>
    %376 = vector.extract_strided_slice %355#6 {offsets = [0, 42], sizes = [2, 470], strides = [1, 1]} : vector<2x512xf32> to vector<2x470xf32>
    %377 = vector.extract_strided_slice %355#6 {offsets = [0, 0], sizes = [2, 42], strides = [1, 1]} : vector<2x512xf32> to vector<2x42xf32>
    %378 = tpu.concatenate %376, %377 in 1 : vector<2x470xf32>, vector<2x42xf32> -> vector<2x512xf32>
    %379 = arith.addf %375, %378 : vector<2x512xf32>
    %380 = vector.extract_strided_slice %355#7 {offsets = [0, 44], sizes = [2, 468], strides = [1, 1]} : vector<2x512xf32> to vector<2x468xf32>
    %381 = vector.extract_strided_slice %355#7 {offsets = [0, 0], sizes = [2, 44], strides = [1, 1]} : vector<2x512xf32> to vector<2x44xf32>
    %382 = tpu.concatenate %380, %381 in 1 : vector<2x468xf32>, vector<2x44xf32> -> vector<2x512xf32>
    %383 = arith.addf %379, %382 : vector<2x512xf32>
    %384 = vector.extract_strided_slice %355#8 {offsets = [0, 46], sizes = [2, 466], strides = [1, 1]} : vector<2x512xf32> to vector<2x466xf32>
    %385 = vector.extract_strided_slice %355#8 {offsets = [0, 0], sizes = [2, 46], strides = [1, 1]} : vector<2x512xf32> to vector<2x46xf32>
    %386 = tpu.concatenate %384, %385 in 1 : vector<2x466xf32>, vector<2x46xf32> -> vector<2x512xf32>
    %387 = arith.addf %383, %386 : vector<2x512xf32>
    %388 = arith.mulf %387, %1 : vector<2x512xf32>
    %389 = vector.shape_cast %388 : vector<2x512xf32> to vector<1x2x512xf32>
    %cst_88 = arith.constant dense<0.000000e+00> : vector<1xf32>
    %390 = vector.multi_reduction <add>, %389, %cst_88 [1, 2] : vector<1x2x512xf32> to vector<1xf32>
    %391 = vector.shape_cast %390 : vector<1xf32> to vector<1x1x1xf32>
    %392 = vector.extract %391[0, 0, 0] : f32 from vector<1x1x1xf32>
    %cst_89 = arith.constant 0.001953125 : f32
    %393 = arith.mulf %392, %cst_89 : f32
    %394 = vector.broadcast %393 : f32 to vector<2x512xf32>
    %395 = arith.subf %387, %394 : vector<2x512xf32>
    %396 = arith.mulf %395, %1 : vector<2x512xf32>
    %397 = arith.mulf %396, %396 : vector<2x512xf32>
    %398 = vector.shape_cast %397 : vector<2x512xf32> to vector<1x2x512xf32>
    %cst_90 = arith.constant dense<0.000000e+00> : vector<1xf32>
    %399 = vector.multi_reduction <add>, %398, %cst_90 [1, 2] : vector<1x2x512xf32> to vector<1xf32>
    %400 = vector.shape_cast %399 : vector<1xf32> to vector<1x1x1xf32>
    %401 = vector.extract %400[0, 0, 0] : f32 from vector<1x1x1xf32>
    %cst_91 = arith.constant 0.001953125 : f32
    %402 = arith.mulf %401, %cst_91 : f32
    %c4_92 = arith.constant 4 : index
    %403 = memref.load %arg3[%c4_92] : memref<8xf32, #tpu.memory_space<smem>>
    %cst_93 = arith.constant 9.99999974E-6 : f32
    %404 = arith.addf %402, %cst_93 : f32
    %405 = math.rsqrt %404 : f32
    %406 = arith.mulf %403, %405 : f32
    %407 = vector.broadcast %406 : f32 to vector<2x512xf32>
    %408 = arith.mulf %396, %407 : vector<2x512xf32>
    %c4_94 = arith.constant 4 : index
    %409 = memref.load %arg4[%c4_94] : memref<8xf32, #tpu.memory_space<smem>>
    %410 = vector.broadcast %409 : f32 to vector<2x512xf32>
    %411 = arith.addf %408, %410 : vector<2x512xf32>
    %cst_95 = arith.constant 0.000000e+00 : f32
    %412 = vector.broadcast %cst_95 : f32 to vector<2x512xf32>
    %413 = arith.maximumf %411, %412 : vector<2x512xf32>
    %414 = arith.mulf %413, %1 : vector<2x512xf32>
    %c5 = arith.constant 5 : index
    %c0_96 = arith.constant 0 : index
    %c0_97 = arith.constant 0 : index
    %415 = vector.load %arg8[%c5, %c0_96, %c0_97] : memref<9x2x512xf32, #tpu.memory_space<vmem>>, vector<1x2x512xf32>
    %416 = vector.shape_cast %415 : vector<1x2x512xf32> to vector<2x512xf32>
    %417 = vector.shape_cast %414 : vector<2x512xf32> to vector<1x2x512xf32>
    tpu.vector_store %arg8[%c5, %c0_96, %c0_97], %417 {strides = array<i32>} : memref<9x2x512xf32, #tpu.memory_space<vmem>>, vector<1x2x512xf32>,
    %c5_98 = arith.constant 5 : index
    %418 = memref.load %arg5[%c5_98] : memref<9xf32, #tpu.memory_space<smem>>
    %419 = vector.broadcast %418 : f32 to vector<2x512xf32>
    %420 = arith.mulf %419, %414 : vector<2x512xf32>
    %421 = arith.addf %353, %420 : vector<2x512xf32>
    %c0_i32_99 = arith.constant 0 : i32
    %c6_i32_100 = arith.constant 6 : i32
    %422 = arith.addi %c0_i32_99, %c6_i32_100 : i32
    %c1_i32_101 = arith.constant 1 : i32
    %423:9 = scf.for %arg9 = %c0_i32_99 to %422 step %c1_i32_101 iter_args(%arg10 = %8, %arg11 = %8, %arg12 = %8, %arg13 = %8, %arg14 = %8, %arg15 = %8, %arg16 = %8, %arg17 = %8, %arg18 = %8) -> (vector<2x512xf32>, vector<2x512xf32>, vector<2x512xf32>, vector<2x512xf32>, vector<2x512xf32>, vector<2x512xf32>, vector<2x512xf32>, vector<2x512xf32>, vector<2x512xf32>)  : i32 {
      %635 = arith.index_cast %arg9 : i32 to index
      %c0_148 = arith.constant 0 : index
      %c0_149 = arith.constant 0 : index
      %636 = vector.load %arg8[%635, %c0_148, %c0_149] : memref<9x2x512xf32, #tpu.memory_space<vmem>>, vector<1x2x512xf32>
      %637 = vector.shape_cast %636 : vector<1x2x512xf32> to vector<2x512xf32>
      %c9_i32_150 = arith.constant 9 : i32
      %638 = arith.muli %arg9, %c9_i32_150 : i32
      %c135_i32 = arith.constant 135 : i32
      %639 = arith.addi %c135_i32, %638 : i32
      %c0_i32_151 = arith.constant 0 : i32
      %640 = arith.addi %639, %c0_i32_151 : i32
      %641 = arith.index_cast %640 : i32 to index
      %642 = memref.load %arg2[%641] : memref<324xf32, #tpu.memory_space<smem>>
      %643 = vector.broadcast %642 : f32 to vector<2x512xf32>
      %644 = arith.mulf %643, %637 : vector<2x512xf32>
      %645 = arith.addf %arg10, %644 : vector<2x512xf32>
      %c9_i32_152 = arith.constant 9 : i32
      %646 = arith.muli %arg9, %c9_i32_152 : i32
      %c135_i32_153 = arith.constant 135 : i32
      %647 = arith.addi %c135_i32_153, %646 : i32
      %c1_i32_154 = arith.constant 1 : i32
      %648 = arith.addi %647, %c1_i32_154 : i32
      %649 = arith.index_cast %648 : i32 to index
      %650 = memref.load %arg2[%649] : memref<324xf32, #tpu.memory_space<smem>>
      %651 = vector.broadcast %650 : f32 to vector<2x512xf32>
      %652 = arith.mulf %651, %637 : vector<2x512xf32>
      %653 = arith.addf %arg11, %652 : vector<2x512xf32>
      %c9_i32_155 = arith.constant 9 : i32
      %654 = arith.muli %arg9, %c9_i32_155 : i32
      %c135_i32_156 = arith.constant 135 : i32
      %655 = arith.addi %c135_i32_156, %654 : i32
      %c2_i32_157 = arith.constant 2 : i32
      %656 = arith.addi %655, %c2_i32_157 : i32
      %657 = arith.index_cast %656 : i32 to index
      %658 = memref.load %arg2[%657] : memref<324xf32, #tpu.memory_space<smem>>
      %659 = vector.broadcast %658 : f32 to vector<2x512xf32>
      %660 = arith.mulf %659, %637 : vector<2x512xf32>
      %661 = arith.addf %arg12, %660 : vector<2x512xf32>
      %c9_i32_158 = arith.constant 9 : i32
      %662 = arith.muli %arg9, %c9_i32_158 : i32
      %c135_i32_159 = arith.constant 135 : i32
      %663 = arith.addi %c135_i32_159, %662 : i32
      %c3_i32_160 = arith.constant 3 : i32
      %664 = arith.addi %663, %c3_i32_160 : i32
      %665 = arith.index_cast %664 : i32 to index
      %666 = memref.load %arg2[%665] : memref<324xf32, #tpu.memory_space<smem>>
      %667 = vector.broadcast %666 : f32 to vector<2x512xf32>
      %668 = arith.mulf %667, %637 : vector<2x512xf32>
      %669 = arith.addf %arg13, %668 : vector<2x512xf32>
      %c9_i32_161 = arith.constant 9 : i32
      %670 = arith.muli %arg9, %c9_i32_161 : i32
      %c135_i32_162 = arith.constant 135 : i32
      %671 = arith.addi %c135_i32_162, %670 : i32
      %c4_i32_163 = arith.constant 4 : i32
      %672 = arith.addi %671, %c4_i32_163 : i32
      %673 = arith.index_cast %672 : i32 to index
      %674 = memref.load %arg2[%673] : memref<324xf32, #tpu.memory_space<smem>>
      %675 = vector.broadcast %674 : f32 to vector<2x512xf32>
      %676 = arith.mulf %675, %637 : vector<2x512xf32>
      %677 = arith.addf %arg14, %676 : vector<2x512xf32>
      %c9_i32_164 = arith.constant 9 : i32
      %678 = arith.muli %arg9, %c9_i32_164 : i32
      %c135_i32_165 = arith.constant 135 : i32
      %679 = arith.addi %c135_i32_165, %678 : i32
      %c5_i32_166 = arith.constant 5 : i32
      %680 = arith.addi %679, %c5_i32_166 : i32
      %681 = arith.index_cast %680 : i32 to index
      %682 = memref.load %arg2[%681] : memref<324xf32, #tpu.memory_space<smem>>
      %683 = vector.broadcast %682 : f32 to vector<2x512xf32>
      %684 = arith.mulf %683, %637 : vector<2x512xf32>
      %685 = arith.addf %arg15, %684 : vector<2x512xf32>
      %c9_i32_167 = arith.constant 9 : i32
      %686 = arith.muli %arg9, %c9_i32_167 : i32
      %c135_i32_168 = arith.constant 135 : i32
      %687 = arith.addi %c135_i32_168, %686 : i32
      %c6_i32_169 = arith.constant 6 : i32
      %688 = arith.addi %687, %c6_i32_169 : i32
      %689 = arith.index_cast %688 : i32 to index
      %690 = memref.load %arg2[%689] : memref<324xf32, #tpu.memory_space<smem>>
      %691 = vector.broadcast %690 : f32 to vector<2x512xf32>
      %692 = arith.mulf %691, %637 : vector<2x512xf32>
      %693 = arith.addf %arg16, %692 : vector<2x512xf32>
      %c9_i32_170 = arith.constant 9 : i32
      %694 = arith.muli %arg9, %c9_i32_170 : i32
      %c135_i32_171 = arith.constant 135 : i32
      %695 = arith.addi %c135_i32_171, %694 : i32
      %c7_i32_172 = arith.constant 7 : i32
      %696 = arith.addi %695, %c7_i32_172 : i32
      %697 = arith.index_cast %696 : i32 to index
      %698 = memref.load %arg2[%697] : memref<324xf32, #tpu.memory_space<smem>>
      %699 = vector.broadcast %698 : f32 to vector<2x512xf32>
      %700 = arith.mulf %699, %637 : vector<2x512xf32>
      %701 = arith.addf %arg17, %700 : vector<2x512xf32>
      %c9_i32_173 = arith.constant 9 : i32
      %702 = arith.muli %arg9, %c9_i32_173 : i32
      %c135_i32_174 = arith.constant 135 : i32
      %703 = arith.addi %c135_i32_174, %702 : i32
      %c8_i32_175 = arith.constant 8 : i32
      %704 = arith.addi %703, %c8_i32_175 : i32
      %705 = arith.index_cast %704 : i32 to index
      %706 = memref.load %arg2[%705] : memref<324xf32, #tpu.memory_space<smem>>
      %707 = vector.broadcast %706 : f32 to vector<2x512xf32>
      %708 = arith.mulf %707, %637 : vector<2x512xf32>
      %709 = arith.addf %arg18, %708 : vector<2x512xf32>
      scf.yield %645, %653, %661, %669, %677, %685, %693, %701, %709 : vector<2x512xf32>, vector<2x512xf32>, vector<2x512xf32>, vector<2x512xf32>, vector<2x512xf32>, vector<2x512xf32>, vector<2x512xf32>, vector<2x512xf32>, vector<2x512xf32>
    }
    %c6_i32_102 = arith.constant 6 : i32
    %424 = vector.extract_strided_slice %423#0 {offsets = [0, 443], sizes = [2, 69], strides = [1, 1]} : vector<2x512xf32> to vector<2x69xf32>
    %425 = vector.extract_strided_slice %423#0 {offsets = [0, 0], sizes = [2, 443], strides = [1, 1]} : vector<2x512xf32> to vector<2x443xf32>
    %426 = tpu.concatenate %424, %425 in 1 : vector<2x69xf32>, vector<2x443xf32> -> vector<2x512xf32>
    %427 = arith.addf %423#4, %426 : vector<2x512xf32>
    %428 = vector.extract_strided_slice %423#1 {offsets = [0, 446], sizes = [2, 66], strides = [1, 1]} : vector<2x512xf32> to vector<2x66xf32>
    %429 = vector.extract_strided_slice %423#1 {offsets = [0, 0], sizes = [2, 446], strides = [1, 1]} : vector<2x512xf32> to vector<2x446xf32>
    %430 = tpu.concatenate %428, %429 in 1 : vector<2x66xf32>, vector<2x446xf32> -> vector<2x512xf32>
    %431 = arith.addf %427, %430 : vector<2x512xf32>
    %432 = vector.extract_strided_slice %423#2 {offsets = [0, 449], sizes = [2, 63], strides = [1, 1]} : vector<2x512xf32> to vector<2x63xf32>
    %433 = vector.extract_strided_slice %423#2 {offsets = [0, 0], sizes = [2, 449], strides = [1, 1]} : vector<2x512xf32> to vector<2x449xf32>
    %434 = tpu.concatenate %432, %433 in 1 : vector<2x63xf32>, vector<2x449xf32> -> vector<2x512xf32>
    %435 = arith.addf %431, %434 : vector<2x512xf32>
    %436 = vector.extract_strided_slice %423#3 {offsets = [0, 509], sizes = [2, 3], strides = [1, 1]} : vector<2x512xf32> to vector<2x3xf32>
    %437 = vector.extract_strided_slice %423#3 {offsets = [0, 0], sizes = [2, 509], strides = [1, 1]} : vector<2x512xf32> to vector<2x509xf32>
    %438 = tpu.concatenate %436, %437 in 1 : vector<2x3xf32>, vector<2x509xf32> -> vector<2x512xf32>
    %439 = arith.addf %435, %438 : vector<2x512xf32>
    %440 = vector.extract_strided_slice %423#5 {offsets = [0, 3], sizes = [2, 509], strides = [1, 1]} : vector<2x512xf32> to vector<2x509xf32>
    %441 = vector.extract_strided_slice %423#5 {offsets = [0, 0], sizes = [2, 3], strides = [1, 1]} : vector<2x512xf32> to vector<2x3xf32>
    %442 = tpu.concatenate %440, %441 in 1 : vector<2x509xf32>, vector<2x3xf32> -> vector<2x512xf32>
    %443 = arith.addf %439, %442 : vector<2x512xf32>
    %444 = vector.extract_strided_slice %423#6 {offsets = [0, 63], sizes = [2, 449], strides = [1, 1]} : vector<2x512xf32> to vector<2x449xf32>
    %445 = vector.extract_strided_slice %423#6 {offsets = [0, 0], sizes = [2, 63], strides = [1, 1]} : vector<2x512xf32> to vector<2x63xf32>
    %446 = tpu.concatenate %444, %445 in 1 : vector<2x449xf32>, vector<2x63xf32> -> vector<2x512xf32>
    %447 = arith.addf %443, %446 : vector<2x512xf32>
    %448 = vector.extract_strided_slice %423#7 {offsets = [0, 66], sizes = [2, 446], strides = [1, 1]} : vector<2x512xf32> to vector<2x446xf32>
    %449 = vector.extract_strided_slice %423#7 {offsets = [0, 0], sizes = [2, 66], strides = [1, 1]} : vector<2x512xf32> to vector<2x66xf32>
    %450 = tpu.concatenate %448, %449 in 1 : vector<2x446xf32>, vector<2x66xf32> -> vector<2x512xf32>
    %451 = arith.addf %447, %450 : vector<2x512xf32>
    %452 = vector.extract_strided_slice %423#8 {offsets = [0, 69], sizes = [2, 443], strides = [1, 1]} : vector<2x512xf32> to vector<2x443xf32>
    %453 = vector.extract_strided_slice %423#8 {offsets = [0, 0], sizes = [2, 69], strides = [1, 1]} : vector<2x512xf32> to vector<2x69xf32>
    %454 = tpu.concatenate %452, %453 in 1 : vector<2x443xf32>, vector<2x69xf32> -> vector<2x512xf32>
    %455 = arith.addf %451, %454 : vector<2x512xf32>
    %456 = arith.mulf %455, %1 : vector<2x512xf32>
    %457 = vector.shape_cast %456 : vector<2x512xf32> to vector<1x2x512xf32>
    %cst_103 = arith.constant dense<0.000000e+00> : vector<1xf32>
    %458 = vector.multi_reduction <add>, %457, %cst_103 [1, 2] : vector<1x2x512xf32> to vector<1xf32>
    %459 = vector.shape_cast %458 : vector<1xf32> to vector<1x1x1xf32>
    %460 = vector.extract %459[0, 0, 0] : f32 from vector<1x1x1xf32>
    %cst_104 = arith.constant 0.001953125 : f32
    %461 = arith.mulf %460, %cst_104 : f32
    %462 = vector.broadcast %461 : f32 to vector<2x512xf32>
    %463 = arith.subf %455, %462 : vector<2x512xf32>
    %464 = arith.mulf %463, %1 : vector<2x512xf32>
    %465 = arith.mulf %464, %464 : vector<2x512xf32>
    %466 = vector.shape_cast %465 : vector<2x512xf32> to vector<1x2x512xf32>
    %cst_105 = arith.constant dense<0.000000e+00> : vector<1xf32>
    %467 = vector.multi_reduction <add>, %466, %cst_105 [1, 2] : vector<1x2x512xf32> to vector<1xf32>
    %468 = vector.shape_cast %467 : vector<1xf32> to vector<1x1x1xf32>
    %469 = vector.extract %468[0, 0, 0] : f32 from vector<1x1x1xf32>
    %cst_106 = arith.constant 0.001953125 : f32
    %470 = arith.mulf %469, %cst_106 : f32
    %c5_107 = arith.constant 5 : index
    %471 = memref.load %arg3[%c5_107] : memref<8xf32, #tpu.memory_space<smem>>
    %cst_108 = arith.constant 9.99999974E-6 : f32
    %472 = arith.addf %470, %cst_108 : f32
    %473 = math.rsqrt %472 : f32
    %474 = arith.mulf %471, %473 : f32
    %475 = vector.broadcast %474 : f32 to vector<2x512xf32>
    %476 = arith.mulf %464, %475 : vector<2x512xf32>
    %c5_109 = arith.constant 5 : index
    %477 = memref.load %arg4[%c5_109] : memref<8xf32, #tpu.memory_space<smem>>
    %478 = vector.broadcast %477 : f32 to vector<2x512xf32>
    %479 = arith.addf %476, %478 : vector<2x512xf32>
    %cst_110 = arith.constant 0.000000e+00 : f32
    %480 = vector.broadcast %cst_110 : f32 to vector<2x512xf32>
    %481 = arith.maximumf %479, %480 : vector<2x512xf32>
    %482 = arith.mulf %481, %1 : vector<2x512xf32>
    %c6 = arith.constant 6 : index
    %c0_111 = arith.constant 0 : index
    %c0_112 = arith.constant 0 : index
    %483 = vector.load %arg8[%c6, %c0_111, %c0_112] : memref<9x2x512xf32, #tpu.memory_space<vmem>>, vector<1x2x512xf32>
    %484 = vector.shape_cast %483 : vector<1x2x512xf32> to vector<2x512xf32>
    %485 = vector.shape_cast %482 : vector<2x512xf32> to vector<1x2x512xf32>
    tpu.vector_store %arg8[%c6, %c0_111, %c0_112], %485 {strides = array<i32>} : memref<9x2x512xf32, #tpu.memory_space<vmem>>, vector<1x2x512xf32>,
    %c6_113 = arith.constant 6 : index
    %486 = memref.load %arg5[%c6_113] : memref<9xf32, #tpu.memory_space<smem>>
    %487 = vector.broadcast %486 : f32 to vector<2x512xf32>
    %488 = arith.mulf %487, %482 : vector<2x512xf32>
    %489 = arith.addf %421, %488 : vector<2x512xf32>
    %c0_i32_114 = arith.constant 0 : i32
    %c7_i32_115 = arith.constant 7 : i32
    %490 = arith.addi %c0_i32_114, %c7_i32_115 : i32
    %c1_i32_116 = arith.constant 1 : i32
    %491:9 = scf.for %arg9 = %c0_i32_114 to %490 step %c1_i32_116 iter_args(%arg10 = %8, %arg11 = %8, %arg12 = %8, %arg13 = %8, %arg14 = %8, %arg15 = %8, %arg16 = %8, %arg17 = %8, %arg18 = %8) -> (vector<2x512xf32>, vector<2x512xf32>, vector<2x512xf32>, vector<2x512xf32>, vector<2x512xf32>, vector<2x512xf32>, vector<2x512xf32>, vector<2x512xf32>, vector<2x512xf32>)  : i32 {
      %635 = arith.index_cast %arg9 : i32 to index
      %c0_148 = arith.constant 0 : index
      %c0_149 = arith.constant 0 : index
      %636 = vector.load %arg8[%635, %c0_148, %c0_149] : memref<9x2x512xf32, #tpu.memory_space<vmem>>, vector<1x2x512xf32>
      %637 = vector.shape_cast %636 : vector<1x2x512xf32> to vector<2x512xf32>
      %c9_i32_150 = arith.constant 9 : i32
      %638 = arith.muli %arg9, %c9_i32_150 : i32
      %c189_i32 = arith.constant 189 : i32
      %639 = arith.addi %c189_i32, %638 : i32
      %c0_i32_151 = arith.constant 0 : i32
      %640 = arith.addi %639, %c0_i32_151 : i32
      %641 = arith.index_cast %640 : i32 to index
      %642 = memref.load %arg2[%641] : memref<324xf32, #tpu.memory_space<smem>>
      %643 = vector.broadcast %642 : f32 to vector<2x512xf32>
      %644 = arith.mulf %643, %637 : vector<2x512xf32>
      %645 = arith.addf %arg10, %644 : vector<2x512xf32>
      %c9_i32_152 = arith.constant 9 : i32
      %646 = arith.muli %arg9, %c9_i32_152 : i32
      %c189_i32_153 = arith.constant 189 : i32
      %647 = arith.addi %c189_i32_153, %646 : i32
      %c1_i32_154 = arith.constant 1 : i32
      %648 = arith.addi %647, %c1_i32_154 : i32
      %649 = arith.index_cast %648 : i32 to index
      %650 = memref.load %arg2[%649] : memref<324xf32, #tpu.memory_space<smem>>
      %651 = vector.broadcast %650 : f32 to vector<2x512xf32>
      %652 = arith.mulf %651, %637 : vector<2x512xf32>
      %653 = arith.addf %arg11, %652 : vector<2x512xf32>
      %c9_i32_155 = arith.constant 9 : i32
      %654 = arith.muli %arg9, %c9_i32_155 : i32
      %c189_i32_156 = arith.constant 189 : i32
      %655 = arith.addi %c189_i32_156, %654 : i32
      %c2_i32_157 = arith.constant 2 : i32
      %656 = arith.addi %655, %c2_i32_157 : i32
      %657 = arith.index_cast %656 : i32 to index
      %658 = memref.load %arg2[%657] : memref<324xf32, #tpu.memory_space<smem>>
      %659 = vector.broadcast %658 : f32 to vector<2x512xf32>
      %660 = arith.mulf %659, %637 : vector<2x512xf32>
      %661 = arith.addf %arg12, %660 : vector<2x512xf32>
      %c9_i32_158 = arith.constant 9 : i32
      %662 = arith.muli %arg9, %c9_i32_158 : i32
      %c189_i32_159 = arith.constant 189 : i32
      %663 = arith.addi %c189_i32_159, %662 : i32
      %c3_i32_160 = arith.constant 3 : i32
      %664 = arith.addi %663, %c3_i32_160 : i32
      %665 = arith.index_cast %664 : i32 to index
      %666 = memref.load %arg2[%665] : memref<324xf32, #tpu.memory_space<smem>>
      %667 = vector.broadcast %666 : f32 to vector<2x512xf32>
      %668 = arith.mulf %667, %637 : vector<2x512xf32>
      %669 = arith.addf %arg13, %668 : vector<2x512xf32>
      %c9_i32_161 = arith.constant 9 : i32
      %670 = arith.muli %arg9, %c9_i32_161 : i32
      %c189_i32_162 = arith.constant 189 : i32
      %671 = arith.addi %c189_i32_162, %670 : i32
      %c4_i32_163 = arith.constant 4 : i32
      %672 = arith.addi %671, %c4_i32_163 : i32
      %673 = arith.index_cast %672 : i32 to index
      %674 = memref.load %arg2[%673] : memref<324xf32, #tpu.memory_space<smem>>
      %675 = vector.broadcast %674 : f32 to vector<2x512xf32>
      %676 = arith.mulf %675, %637 : vector<2x512xf32>
      %677 = arith.addf %arg14, %676 : vector<2x512xf32>
      %c9_i32_164 = arith.constant 9 : i32
      %678 = arith.muli %arg9, %c9_i32_164 : i32
      %c189_i32_165 = arith.constant 189 : i32
      %679 = arith.addi %c189_i32_165, %678 : i32
      %c5_i32_166 = arith.constant 5 : i32
      %680 = arith.addi %679, %c5_i32_166 : i32
      %681 = arith.index_cast %680 : i32 to index
      %682 = memref.load %arg2[%681] : memref<324xf32, #tpu.memory_space<smem>>
      %683 = vector.broadcast %682 : f32 to vector<2x512xf32>
      %684 = arith.mulf %683, %637 : vector<2x512xf32>
      %685 = arith.addf %arg15, %684 : vector<2x512xf32>
      %c9_i32_167 = arith.constant 9 : i32
      %686 = arith.muli %arg9, %c9_i32_167 : i32
      %c189_i32_168 = arith.constant 189 : i32
      %687 = arith.addi %c189_i32_168, %686 : i32
      %c6_i32_169 = arith.constant 6 : i32
      %688 = arith.addi %687, %c6_i32_169 : i32
      %689 = arith.index_cast %688 : i32 to index
      %690 = memref.load %arg2[%689] : memref<324xf32, #tpu.memory_space<smem>>
      %691 = vector.broadcast %690 : f32 to vector<2x512xf32>
      %692 = arith.mulf %691, %637 : vector<2x512xf32>
      %693 = arith.addf %arg16, %692 : vector<2x512xf32>
      %c9_i32_170 = arith.constant 9 : i32
      %694 = arith.muli %arg9, %c9_i32_170 : i32
      %c189_i32_171 = arith.constant 189 : i32
      %695 = arith.addi %c189_i32_171, %694 : i32
      %c7_i32_172 = arith.constant 7 : i32
      %696 = arith.addi %695, %c7_i32_172 : i32
      %697 = arith.index_cast %696 : i32 to index
      %698 = memref.load %arg2[%697] : memref<324xf32, #tpu.memory_space<smem>>
      %699 = vector.broadcast %698 : f32 to vector<2x512xf32>
      %700 = arith.mulf %699, %637 : vector<2x512xf32>
      %701 = arith.addf %arg17, %700 : vector<2x512xf32>
      %c9_i32_173 = arith.constant 9 : i32
      %702 = arith.muli %arg9, %c9_i32_173 : i32
      %c189_i32_174 = arith.constant 189 : i32
      %703 = arith.addi %c189_i32_174, %702 : i32
      %c8_i32_175 = arith.constant 8 : i32
      %704 = arith.addi %703, %c8_i32_175 : i32
      %705 = arith.index_cast %704 : i32 to index
      %706 = memref.load %arg2[%705] : memref<324xf32, #tpu.memory_space<smem>>
      %707 = vector.broadcast %706 : f32 to vector<2x512xf32>
      %708 = arith.mulf %707, %637 : vector<2x512xf32>
      %709 = arith.addf %arg18, %708 : vector<2x512xf32>
      scf.yield %645, %653, %661, %669, %677, %685, %693, %701, %709 : vector<2x512xf32>, vector<2x512xf32>, vector<2x512xf32>, vector<2x512xf32>, vector<2x512xf32>, vector<2x512xf32>, vector<2x512xf32>, vector<2x512xf32>, vector<2x512xf32>
    }
    %c7_i32_117 = arith.constant 7 : i32
    %492 = vector.extract_strided_slice %491#0 {offsets = [0, 489], sizes = [2, 23], strides = [1, 1]} : vector<2x512xf32> to vector<2x23xf32>
    %493 = vector.extract_strided_slice %491#0 {offsets = [0, 0], sizes = [2, 489], strides = [1, 1]} : vector<2x512xf32> to vector<2x489xf32>
    %494 = tpu.concatenate %492, %493 in 1 : vector<2x23xf32>, vector<2x489xf32> -> vector<2x512xf32>
    %495 = arith.addf %491#4, %494 : vector<2x512xf32>
    %496 = vector.extract_strided_slice %491#1 {offsets = [0, 490], sizes = [2, 22], strides = [1, 1]} : vector<2x512xf32> to vector<2x22xf32>
    %497 = vector.extract_strided_slice %491#1 {offsets = [0, 0], sizes = [2, 490], strides = [1, 1]} : vector<2x512xf32> to vector<2x490xf32>
    %498 = tpu.concatenate %496, %497 in 1 : vector<2x22xf32>, vector<2x490xf32> -> vector<2x512xf32>
    %499 = arith.addf %495, %498 : vector<2x512xf32>
    %500 = vector.extract_strided_slice %491#2 {offsets = [0, 491], sizes = [2, 21], strides = [1, 1]} : vector<2x512xf32> to vector<2x21xf32>
    %501 = vector.extract_strided_slice %491#2 {offsets = [0, 0], sizes = [2, 491], strides = [1, 1]} : vector<2x512xf32> to vector<2x491xf32>
    %502 = tpu.concatenate %500, %501 in 1 : vector<2x21xf32>, vector<2x491xf32> -> vector<2x512xf32>
    %503 = arith.addf %499, %502 : vector<2x512xf32>
    %504 = vector.extract_strided_slice %491#3 {offsets = [0, 511], sizes = [2, 1], strides = [1, 1]} : vector<2x512xf32> to vector<2x1xf32>
    %505 = vector.extract_strided_slice %491#3 {offsets = [0, 0], sizes = [2, 511], strides = [1, 1]} : vector<2x512xf32> to vector<2x511xf32>
    %506 = tpu.concatenate %504, %505 in 1 : vector<2x1xf32>, vector<2x511xf32> -> vector<2x512xf32>
    %507 = arith.addf %503, %506 : vector<2x512xf32>
    %508 = vector.extract_strided_slice %491#5 {offsets = [0, 1], sizes = [2, 511], strides = [1, 1]} : vector<2x512xf32> to vector<2x511xf32>
    %509 = vector.extract_strided_slice %491#5 {offsets = [0, 0], sizes = [2, 1], strides = [1, 1]} : vector<2x512xf32> to vector<2x1xf32>
    %510 = tpu.concatenate %508, %509 in 1 : vector<2x511xf32>, vector<2x1xf32> -> vector<2x512xf32>
    %511 = arith.addf %507, %510 : vector<2x512xf32>
    %512 = vector.extract_strided_slice %491#6 {offsets = [0, 21], sizes = [2, 491], strides = [1, 1]} : vector<2x512xf32> to vector<2x491xf32>
    %513 = vector.extract_strided_slice %491#6 {offsets = [0, 0], sizes = [2, 21], strides = [1, 1]} : vector<2x512xf32> to vector<2x21xf32>
    %514 = tpu.concatenate %512, %513 in 1 : vector<2x491xf32>, vector<2x21xf32> -> vector<2x512xf32>
    %515 = arith.addf %511, %514 : vector<2x512xf32>
    %516 = vector.extract_strided_slice %491#7 {offsets = [0, 22], sizes = [2, 490], strides = [1, 1]} : vector<2x512xf32> to vector<2x490xf32>
    %517 = vector.extract_strided_slice %491#7 {offsets = [0, 0], sizes = [2, 22], strides = [1, 1]} : vector<2x512xf32> to vector<2x22xf32>
    %518 = tpu.concatenate %516, %517 in 1 : vector<2x490xf32>, vector<2x22xf32> -> vector<2x512xf32>
    %519 = arith.addf %515, %518 : vector<2x512xf32>
    %520 = vector.extract_strided_slice %491#8 {offsets = [0, 23], sizes = [2, 489], strides = [1, 1]} : vector<2x512xf32> to vector<2x489xf32>
    %521 = vector.extract_strided_slice %491#8 {offsets = [0, 0], sizes = [2, 23], strides = [1, 1]} : vector<2x512xf32> to vector<2x23xf32>
    %522 = tpu.concatenate %520, %521 in 1 : vector<2x489xf32>, vector<2x23xf32> -> vector<2x512xf32>
    %523 = arith.addf %519, %522 : vector<2x512xf32>
    %524 = arith.mulf %523, %1 : vector<2x512xf32>
    %525 = vector.shape_cast %524 : vector<2x512xf32> to vector<1x2x512xf32>
    %cst_118 = arith.constant dense<0.000000e+00> : vector<1xf32>
    %526 = vector.multi_reduction <add>, %525, %cst_118 [1, 2] : vector<1x2x512xf32> to vector<1xf32>
    %527 = vector.shape_cast %526 : vector<1xf32> to vector<1x1x1xf32>
    %528 = vector.extract %527[0, 0, 0] : f32 from vector<1x1x1xf32>
    %cst_119 = arith.constant 0.001953125 : f32
    %529 = arith.mulf %528, %cst_119 : f32
    %530 = vector.broadcast %529 : f32 to vector<2x512xf32>
    %531 = arith.subf %523, %530 : vector<2x512xf32>
    %532 = arith.mulf %531, %1 : vector<2x512xf32>
    %533 = arith.mulf %532, %532 : vector<2x512xf32>
    %534 = vector.shape_cast %533 : vector<2x512xf32> to vector<1x2x512xf32>
    %cst_120 = arith.constant dense<0.000000e+00> : vector<1xf32>
    %535 = vector.multi_reduction <add>, %534, %cst_120 [1, 2] : vector<1x2x512xf32> to vector<1xf32>
    %536 = vector.shape_cast %535 : vector<1xf32> to vector<1x1x1xf32>
    %537 = vector.extract %536[0, 0, 0] : f32 from vector<1x1x1xf32>
    %cst_121 = arith.constant 0.001953125 : f32
    %538 = arith.mulf %537, %cst_121 : f32
    %c6_122 = arith.constant 6 : index
    %539 = memref.load %arg3[%c6_122] : memref<8xf32, #tpu.memory_space<smem>>
    %cst_123 = arith.constant 9.99999974E-6 : f32
    %540 = arith.addf %538, %cst_123 : f32
    %541 = math.rsqrt %540 : f32
    %542 = arith.mulf %539, %541 : f32
    %543 = vector.broadcast %542 : f32 to vector<2x512xf32>
    %544 = arith.mulf %532, %543 : vector<2x512xf32>
    %c6_124 = arith.constant 6 : index
    %545 = memref.load %arg4[%c6_124] : memref<8xf32, #tpu.memory_space<smem>>
    %546 = vector.broadcast %545 : f32 to vector<2x512xf32>
    %547 = arith.addf %544, %546 : vector<2x512xf32>
    %cst_125 = arith.constant 0.000000e+00 : f32
    %548 = vector.broadcast %cst_125 : f32 to vector<2x512xf32>
    %549 = arith.maximumf %547, %548 : vector<2x512xf32>
    %550 = arith.mulf %549, %1 : vector<2x512xf32>
    %c7 = arith.constant 7 : index
    %c0_126 = arith.constant 0 : index
    %c0_127 = arith.constant 0 : index
    %551 = vector.load %arg8[%c7, %c0_126, %c0_127] : memref<9x2x512xf32, #tpu.memory_space<vmem>>, vector<1x2x512xf32>
    %552 = vector.shape_cast %551 : vector<1x2x512xf32> to vector<2x512xf32>
    %553 = vector.shape_cast %550 : vector<2x512xf32> to vector<1x2x512xf32>
    tpu.vector_store %arg8[%c7, %c0_126, %c0_127], %553 {strides = array<i32>} : memref<9x2x512xf32, #tpu.memory_space<vmem>>, vector<1x2x512xf32>,
    %c7_128 = arith.constant 7 : index
    %554 = memref.load %arg5[%c7_128] : memref<9xf32, #tpu.memory_space<smem>>
    %555 = vector.broadcast %554 : f32 to vector<2x512xf32>
    %556 = arith.mulf %555, %550 : vector<2x512xf32>
    %557 = arith.addf %489, %556 : vector<2x512xf32>
    %c0_i32_129 = arith.constant 0 : i32
    %c8_i32_130 = arith.constant 8 : i32
    %558 = arith.addi %c0_i32_129, %c8_i32_130 : i32
    %c1_i32_131 = arith.constant 1 : i32
    %559:9 = scf.for %arg9 = %c0_i32_129 to %558 step %c1_i32_131 iter_args(%arg10 = %8, %arg11 = %8, %arg12 = %8, %arg13 = %8, %arg14 = %8, %arg15 = %8, %arg16 = %8, %arg17 = %8, %arg18 = %8) -> (vector<2x512xf32>, vector<2x512xf32>, vector<2x512xf32>, vector<2x512xf32>, vector<2x512xf32>, vector<2x512xf32>, vector<2x512xf32>, vector<2x512xf32>, vector<2x512xf32>)  : i32 {
      %635 = arith.index_cast %arg9 : i32 to index
      %c0_148 = arith.constant 0 : index
      %c0_149 = arith.constant 0 : index
      %636 = vector.load %arg8[%635, %c0_148, %c0_149] : memref<9x2x512xf32, #tpu.memory_space<vmem>>, vector<1x2x512xf32>
      %637 = vector.shape_cast %636 : vector<1x2x512xf32> to vector<2x512xf32>
      %c9_i32_150 = arith.constant 9 : i32
      %638 = arith.muli %arg9, %c9_i32_150 : i32
      %c252_i32 = arith.constant 252 : i32
      %639 = arith.addi %c252_i32, %638 : i32
      %c0_i32_151 = arith.constant 0 : i32
      %640 = arith.addi %639, %c0_i32_151 : i32
      %641 = arith.index_cast %640 : i32 to index
      %642 = memref.load %arg2[%641] : memref<324xf32, #tpu.memory_space<smem>>
      %643 = vector.broadcast %642 : f32 to vector<2x512xf32>
      %644 = arith.mulf %643, %637 : vector<2x512xf32>
      %645 = arith.addf %arg10, %644 : vector<2x512xf32>
      %c9_i32_152 = arith.constant 9 : i32
      %646 = arith.muli %arg9, %c9_i32_152 : i32
      %c252_i32_153 = arith.constant 252 : i32
      %647 = arith.addi %c252_i32_153, %646 : i32
      %c1_i32_154 = arith.constant 1 : i32
      %648 = arith.addi %647, %c1_i32_154 : i32
      %649 = arith.index_cast %648 : i32 to index
      %650 = memref.load %arg2[%649] : memref<324xf32, #tpu.memory_space<smem>>
      %651 = vector.broadcast %650 : f32 to vector<2x512xf32>
      %652 = arith.mulf %651, %637 : vector<2x512xf32>
      %653 = arith.addf %arg11, %652 : vector<2x512xf32>
      %c9_i32_155 = arith.constant 9 : i32
      %654 = arith.muli %arg9, %c9_i32_155 : i32
      %c252_i32_156 = arith.constant 252 : i32
      %655 = arith.addi %c252_i32_156, %654 : i32
      %c2_i32_157 = arith.constant 2 : i32
      %656 = arith.addi %655, %c2_i32_157 : i32
      %657 = arith.index_cast %656 : i32 to index
      %658 = memref.load %arg2[%657] : memref<324xf32, #tpu.memory_space<smem>>
      %659 = vector.broadcast %658 : f32 to vector<2x512xf32>
      %660 = arith.mulf %659, %637 : vector<2x512xf32>
      %661 = arith.addf %arg12, %660 : vector<2x512xf32>
      %c9_i32_158 = arith.constant 9 : i32
      %662 = arith.muli %arg9, %c9_i32_158 : i32
      %c252_i32_159 = arith.constant 252 : i32
      %663 = arith.addi %c252_i32_159, %662 : i32
      %c3_i32_160 = arith.constant 3 : i32
      %664 = arith.addi %663, %c3_i32_160 : i32
      %665 = arith.index_cast %664 : i32 to index
      %666 = memref.load %arg2[%665] : memref<324xf32, #tpu.memory_space<smem>>
      %667 = vector.broadcast %666 : f32 to vector<2x512xf32>
      %668 = arith.mulf %667, %637 : vector<2x512xf32>
      %669 = arith.addf %arg13, %668 : vector<2x512xf32>
      %c9_i32_161 = arith.constant 9 : i32
      %670 = arith.muli %arg9, %c9_i32_161 : i32
      %c252_i32_162 = arith.constant 252 : i32
      %671 = arith.addi %c252_i32_162, %670 : i32
      %c4_i32_163 = arith.constant 4 : i32
      %672 = arith.addi %671, %c4_i32_163 : i32
      %673 = arith.index_cast %672 : i32 to index
      %674 = memref.load %arg2[%673] : memref<324xf32, #tpu.memory_space<smem>>
      %675 = vector.broadcast %674 : f32 to vector<2x512xf32>
      %676 = arith.mulf %675, %637 : vector<2x512xf32>
      %677 = arith.addf %arg14, %676 : vector<2x512xf32>
      %c9_i32_164 = arith.constant 9 : i32
      %678 = arith.muli %arg9, %c9_i32_164 : i32
      %c252_i32_165 = arith.constant 252 : i32
      %679 = arith.addi %c252_i32_165, %678 : i32
      %c5_i32_166 = arith.constant 5 : i32
      %680 = arith.addi %679, %c5_i32_166 : i32
      %681 = arith.index_cast %680 : i32 to index
      %682 = memref.load %arg2[%681] : memref<324xf32, #tpu.memory_space<smem>>
      %683 = vector.broadcast %682 : f32 to vector<2x512xf32>
      %684 = arith.mulf %683, %637 : vector<2x512xf32>
      %685 = arith.addf %arg15, %684 : vector<2x512xf32>
      %c9_i32_167 = arith.constant 9 : i32
      %686 = arith.muli %arg9, %c9_i32_167 : i32
      %c252_i32_168 = arith.constant 252 : i32
      %687 = arith.addi %c252_i32_168, %686 : i32
      %c6_i32_169 = arith.constant 6 : i32
      %688 = arith.addi %687, %c6_i32_169 : i32
      %689 = arith.index_cast %688 : i32 to index
      %690 = memref.load %arg2[%689] : memref<324xf32, #tpu.memory_space<smem>>
      %691 = vector.broadcast %690 : f32 to vector<2x512xf32>
      %692 = arith.mulf %691, %637 : vector<2x512xf32>
      %693 = arith.addf %arg16, %692 : vector<2x512xf32>
      %c9_i32_170 = arith.constant 9 : i32
      %694 = arith.muli %arg9, %c9_i32_170 : i32
      %c252_i32_171 = arith.constant 252 : i32
      %695 = arith.addi %c252_i32_171, %694 : i32
      %c7_i32_172 = arith.constant 7 : i32
      %696 = arith.addi %695, %c7_i32_172 : i32
      %697 = arith.index_cast %696 : i32 to index
      %698 = memref.load %arg2[%697] : memref<324xf32, #tpu.memory_space<smem>>
      %699 = vector.broadcast %698 : f32 to vector<2x512xf32>
      %700 = arith.mulf %699, %637 : vector<2x512xf32>
      %701 = arith.addf %arg17, %700 : vector<2x512xf32>
      %c9_i32_173 = arith.constant 9 : i32
      %702 = arith.muli %arg9, %c9_i32_173 : i32
      %c252_i32_174 = arith.constant 252 : i32
      %703 = arith.addi %c252_i32_174, %702 : i32
      %c8_i32_175 = arith.constant 8 : i32
      %704 = arith.addi %703, %c8_i32_175 : i32
      %705 = arith.index_cast %704 : i32 to index
      %706 = memref.load %arg2[%705] : memref<324xf32, #tpu.memory_space<smem>>
      %707 = vector.broadcast %706 : f32 to vector<2x512xf32>
      %708 = arith.mulf %707, %637 : vector<2x512xf32>
      %709 = arith.addf %arg18, %708 : vector<2x512xf32>
      scf.yield %645, %653, %661, %669, %677, %685, %693, %701, %709 : vector<2x512xf32>, vector<2x512xf32>, vector<2x512xf32>, vector<2x512xf32>, vector<2x512xf32>, vector<2x512xf32>, vector<2x512xf32>, vector<2x512xf32>, vector<2x512xf32>
    }
    %c8_i32_132 = arith.constant 8 : i32
    %560 = vector.extract_strided_slice %559#0 {offsets = [0, 466], sizes = [2, 46], strides = [1, 1]} : vector<2x512xf32> to vector<2x46xf32>
    %561 = vector.extract_strided_slice %559#0 {offsets = [0, 0], sizes = [2, 466], strides = [1, 1]} : vector<2x512xf32> to vector<2x466xf32>
    %562 = tpu.concatenate %560, %561 in 1 : vector<2x46xf32>, vector<2x466xf32> -> vector<2x512xf32>
    %563 = arith.addf %559#4, %562 : vector<2x512xf32>
    %564 = vector.extract_strided_slice %559#1 {offsets = [0, 468], sizes = [2, 44], strides = [1, 1]} : vector<2x512xf32> to vector<2x44xf32>
    %565 = vector.extract_strided_slice %559#1 {offsets = [0, 0], sizes = [2, 468], strides = [1, 1]} : vector<2x512xf32> to vector<2x468xf32>
    %566 = tpu.concatenate %564, %565 in 1 : vector<2x44xf32>, vector<2x468xf32> -> vector<2x512xf32>
    %567 = arith.addf %563, %566 : vector<2x512xf32>
    %568 = vector.extract_strided_slice %559#2 {offsets = [0, 470], sizes = [2, 42], strides = [1, 1]} : vector<2x512xf32> to vector<2x42xf32>
    %569 = vector.extract_strided_slice %559#2 {offsets = [0, 0], sizes = [2, 470], strides = [1, 1]} : vector<2x512xf32> to vector<2x470xf32>
    %570 = tpu.concatenate %568, %569 in 1 : vector<2x42xf32>, vector<2x470xf32> -> vector<2x512xf32>
    %571 = arith.addf %567, %570 : vector<2x512xf32>
    %572 = vector.extract_strided_slice %559#3 {offsets = [0, 510], sizes = [2, 2], strides = [1, 1]} : vector<2x512xf32> to vector<2x2xf32>
    %573 = vector.extract_strided_slice %559#3 {offsets = [0, 0], sizes = [2, 510], strides = [1, 1]} : vector<2x512xf32> to vector<2x510xf32>
    %574 = tpu.concatenate %572, %573 in 1 : vector<2x2xf32>, vector<2x510xf32> -> vector<2x512xf32>
    %575 = arith.addf %571, %574 : vector<2x512xf32>
    %576 = vector.extract_strided_slice %559#5 {offsets = [0, 2], sizes = [2, 510], strides = [1, 1]} : vector<2x512xf32> to vector<2x510xf32>
    %577 = vector.extract_strided_slice %559#5 {offsets = [0, 0], sizes = [2, 2], strides = [1, 1]} : vector<2x512xf32> to vector<2x2xf32>
    %578 = tpu.concatenate %576, %577 in 1 : vector<2x510xf32>, vector<2x2xf32> -> vector<2x512xf32>
    %579 = arith.addf %575, %578 : vector<2x512xf32>
    %580 = vector.extract_strided_slice %559#6 {offsets = [0, 42], sizes = [2, 470], strides = [1, 1]} : vector<2x512xf32> to vector<2x470xf32>
    %581 = vector.extract_strided_slice %559#6 {offsets = [0, 0], sizes = [2, 42], strides = [1, 1]} : vector<2x512xf32> to vector<2x42xf32>
    %582 = tpu.concatenate %580, %581 in 1 : vector<2x470xf32>, vector<2x42xf32> -> vector<2x512xf32>
    %583 = arith.addf %579, %582 : vector<2x512xf32>
    %584 = vector.extract_strided_slice %559#7 {offsets = [0, 44], sizes = [2, 468], strides = [1, 1]} : vector<2x512xf32> to vector<2x468xf32>
    %585 = vector.extract_strided_slice %559#7 {offsets = [0, 0], sizes = [2, 44], strides = [1, 1]} : vector<2x512xf32> to vector<2x44xf32>
    %586 = tpu.concatenate %584, %585 in 1 : vector<2x468xf32>, vector<2x44xf32> -> vector<2x512xf32>
    %587 = arith.addf %583, %586 : vector<2x512xf32>
    %588 = vector.extract_strided_slice %559#8 {offsets = [0, 46], sizes = [2, 466], strides = [1, 1]} : vector<2x512xf32> to vector<2x466xf32>
    %589 = vector.extract_strided_slice %559#8 {offsets = [0, 0], sizes = [2, 46], strides = [1, 1]} : vector<2x512xf32> to vector<2x46xf32>
    %590 = tpu.concatenate %588, %589 in 1 : vector<2x466xf32>, vector<2x46xf32> -> vector<2x512xf32>
    %591 = arith.addf %587, %590 : vector<2x512xf32>
    %592 = arith.mulf %591, %1 : vector<2x512xf32>
    %593 = vector.shape_cast %592 : vector<2x512xf32> to vector<1x2x512xf32>
    %cst_133 = arith.constant dense<0.000000e+00> : vector<1xf32>
    %594 = vector.multi_reduction <add>, %593, %cst_133 [1, 2] : vector<1x2x512xf32> to vector<1xf32>
    %595 = vector.shape_cast %594 : vector<1xf32> to vector<1x1x1xf32>
    %596 = vector.extract %595[0, 0, 0] : f32 from vector<1x1x1xf32>
    %cst_134 = arith.constant 0.001953125 : f32
    %597 = arith.mulf %596, %cst_134 : f32
    %598 = vector.broadcast %597 : f32 to vector<2x512xf32>
    %599 = arith.subf %591, %598 : vector<2x512xf32>
    %600 = arith.mulf %599, %1 : vector<2x512xf32>
    %601 = arith.mulf %600, %600 : vector<2x512xf32>
    %602 = vector.shape_cast %601 : vector<2x512xf32> to vector<1x2x512xf32>
    %cst_135 = arith.constant dense<0.000000e+00> : vector<1xf32>
    %603 = vector.multi_reduction <add>, %602, %cst_135 [1, 2] : vector<1x2x512xf32> to vector<1xf32>
    %604 = vector.shape_cast %603 : vector<1xf32> to vector<1x1x1xf32>
    %605 = vector.extract %604[0, 0, 0] : f32 from vector<1x1x1xf32>
    %cst_136 = arith.constant 0.001953125 : f32
    %606 = arith.mulf %605, %cst_136 : f32
    %c7_137 = arith.constant 7 : index
    %607 = memref.load %arg3[%c7_137] : memref<8xf32, #tpu.memory_space<smem>>
    %cst_138 = arith.constant 9.99999974E-6 : f32
    %608 = arith.addf %606, %cst_138 : f32
    %609 = math.rsqrt %608 : f32
    %610 = arith.mulf %607, %609 : f32
    %611 = vector.broadcast %610 : f32 to vector<2x512xf32>
    %612 = arith.mulf %600, %611 : vector<2x512xf32>
    %c7_139 = arith.constant 7 : index
    %613 = memref.load %arg4[%c7_139] : memref<8xf32, #tpu.memory_space<smem>>
    %614 = vector.broadcast %613 : f32 to vector<2x512xf32>
    %615 = arith.addf %612, %614 : vector<2x512xf32>
    %cst_140 = arith.constant 0.000000e+00 : f32
    %616 = vector.broadcast %cst_140 : f32 to vector<2x512xf32>
    %617 = arith.maximumf %615, %616 : vector<2x512xf32>
    %618 = arith.mulf %617, %1 : vector<2x512xf32>
    %c8 = arith.constant 8 : index
    %c0_141 = arith.constant 0 : index
    %c0_142 = arith.constant 0 : index
    %619 = vector.load %arg8[%c8, %c0_141, %c0_142] : memref<9x2x512xf32, #tpu.memory_space<vmem>>, vector<1x2x512xf32>
    %620 = vector.shape_cast %619 : vector<1x2x512xf32> to vector<2x512xf32>
    %621 = vector.shape_cast %618 : vector<2x512xf32> to vector<1x2x512xf32>
    tpu.vector_store %arg8[%c8, %c0_141, %c0_142], %621 {strides = array<i32>} : memref<9x2x512xf32, #tpu.memory_space<vmem>>, vector<1x2x512xf32>,
    %c8_143 = arith.constant 8 : index
    %622 = memref.load %arg5[%c8_143] : memref<9xf32, #tpu.memory_space<smem>>
    %623 = vector.broadcast %622 : f32 to vector<2x512xf32>
    %624 = arith.mulf %623, %618 : vector<2x512xf32>
    %625 = arith.addf %557, %624 : vector<2x512xf32>
    %c0_144 = arith.constant 0 : index
    %626 = memref.load %arg6[%c0_144] : memref<1xf32, #tpu.memory_space<smem>>
    %627 = vector.broadcast %626 : f32 to vector<2x512xf32>
    %628 = arith.addf %625, %627 : vector<2x512xf32>
    %629 = arith.negf %628 : vector<2x512xf32>
    %630 = math.exp %629 : vector<2x512xf32>
    %cst_145 = arith.constant 1.000000e+00 : f32
    %631 = vector.broadcast %cst_145 : f32 to vector<2x512xf32>
    %632 = arith.addf %631, %630 : vector<2x512xf32>
    %633 = arith.divf %631, %632 : vector<2x512xf32>
    %c0_146 = arith.constant 0 : index
    %c0_147 = arith.constant 0 : index
    %634 = vector.load %arg7[%c0_146, %c0_147] : memref<2x512xf32, #tpu.memory_space<vmem>>, vector<2x512xf32>
    tpu.vector_store %arg7[%c0_146, %c0_147], %633 {strides = array<i32>} : memref<2x512xf32, #tpu.memory_space<vmem>>, vector<2x512xf32>,
    return
  }
}

</mosaic_0001>

<llo_original>
// kernel: msdnet_forward.1
$region0: #{msdnet_forward.1}
  #allocation0 [shape = 'u32[]', space=smem, size = 0x4, offset = 0x4, fixed_abs, tag = 'smem constant byte address 0x4 - core index']
  #allocation1 [shape = 'u32[144,128]{1,0:T(1,128)}', space=vmem, size = 0x12000, scoped, tag = 'internal scratch']
  #allocation2 [shape = 'f32[9,2,512]{2,1,0:T(2,128)}', space=vmem, size = 0x9000, scoped, tag = 'scratch operand']
  #allocation3 [shape = 'f32[1]{0:T(128)S(6)}', space=smem, size = 0x200, scoped, tag = 'scoped memory for msdnet_forward.1']
  %s0 = inlined_call_operand.vmem [shape: f32[2,512], index: 0, kind: input, shape index: {}]
  %s1 = inlined_call_operand.vmem [shape: f32[2,512], index: 1, kind: input, shape index: {}]
  %s2 = inlined_call_operand.vmem [shape: f32[324], index: 2, kind: input, shape index: {}]
  %s3 = inlined_call_operand.vmem [shape: f32[8], index: 3, kind: input, shape index: {}]
  %s4 = inlined_call_operand.vmem [shape: f32[8], index: 4, kind: input, shape index: {}]
  %s5 = inlined_call_operand.vmem [shape: f32[9], index: 5, kind: input, shape index: {}]
  %s6 = inlined_call_operand.<no memory space> [shape: f32[1], index: 6, kind: input, shape index: {}]
  %s7 = inlined_call_operand.vmem [shape: f32[2,512], index: 7, kind: output, shape index: {}]
  %s8 = sld [smem:[#allocation0]]
  $region103: #{msdnet_forward.1} parent=0
    _
  %s10 = ssub.s32 1, %s8
  %s11 = scalar_select 0, %s10, %s8
  %12 = sst [smem:[#allocation3]] %s6
  $region1: #{msdnet_forward.1} parent=0
    #allocation4 [shape = 'u8[1536]{0}', space=smem, size = 0x600, scoped, tag = 'input window, operand 2, single buffered']
    #allocation5 [shape = 's32[1]{0}', space=sflag, size = 0x4, scoped, tag = 'scoped memory for msdnet_forward.1']
    #allocation6 [shape = 'u8[512]{0}', space=smem, size = 0x200, scoped, tag = 'input window, operand 3, single buffered']
    #allocation7 [shape = 's32[1]{0}', space=sflag, size = 0x4, scoped, tag = 'scoped memory for msdnet_forward.1']
    #allocation8 [shape = 'u8[512]{0}', space=smem, size = 0x200, scoped, tag = 'input window, operand 4, single buffered']
    #allocation9 [shape = 'u8[512]{0}', space=smem, size = 0x200, scoped, tag = 'input window, operand 5, single buffered']
    #allocation10 [shape = 's32[1]{0}', space=sflag, size = 0x4, scoped, tag = 'scoped memory for msdnet_forward.1']
    %13 = vsyncpa [#allocation5], 0
    %14 = vsyncpa [#allocation7], 0
    %15 = vsyncpa [#allocation10], 0
    // Predicated region
    $region2: #{msdnet_forward.1} parent=1 // pred_check
      _
    $region3: #{msdnet_forward.1} parent=1 // pred_check_branch
      %17 = sbr.rel (0) target = $region5
    $region4: #{msdnet_forward.1} parent=1 // pred_region
      _
    $region5: #{msdnet_forward.1} parent=1 // pred_fallthru
      _
    // Predicated region
    $region6: #{msdnet_forward.1} parent=1 // pred_check
      _
    $region7: #{msdnet_forward.1} parent=1 // pred_check_branch
      %19 = sbr.rel (0) target = $region9
    $region8: #{msdnet_forward.1} parent=1 // pred_region
      _
    $region9: #{msdnet_forward.1} parent=1 // pred_fallthru
      _
    // Predicated region
    $region10: #{msdnet_forward.1} parent=1 // pred_check
      _
    $region11: #{msdnet_forward.1} parent=1 // pred_check_branch
      %21 = sbr.rel (0) target = $region13
    $region12: #{msdnet_forward.1} parent=1 // pred_region
      %s23 = ssub.s32 48, 48
      %24 = vsyncadd [#allocation5], %s23
      %s26 = sshll.u32 %s2, 4
      %s27 = int_to_ptr.vmem [resolvable:$true] %s26
      %29 = dma.vmem_to_smem %s27, 48, [#allocation4], [#allocation5]
    $region13: #{msdnet_forward.1} parent=1 // pred_fallthru
      _
    // Predicated region
    $region14: #{msdnet_forward.1} parent=1 // pred_check
      _
    $region15: #{msdnet_forward.1} parent=1 // pred_check_branch
      %31 = sbr.rel (0) target = $region17
    $region16: #{msdnet_forward.1} parent=1 // pred_region
      %s33 = ssub.s32 16, 16
      %34 = vsyncadd [#allocation7], %s33
      %s36 = sshll.u32 %s3, 4
      %s37 = int_to_ptr.vmem [resolvable:$true] %s36
      %39 = dma.vmem_to_smem %s37, 16, [#allocation6], [#allocation7]
    $region17: #{msdnet_forward.1} parent=1 // pred_fallthru
      _
    // Predicated region
    $region18: #{msdnet_forward.1} parent=1 // pred_check
      _
    $region19: #{msdnet_forward.1} parent=1 // pred_check_branch
      %41 = sbr.rel (0) target = $region21
    $region20: #{msdnet_forward.1} parent=1 // pred_region
      %s43 = ssub.s32 16, 16
      %44 = vsyncadd [#allocation7], %s43
      %s46 = sshll.u32 %s4, 4
      %s47 = int_to_ptr.vmem [resolvable:$true] %s46
      %49 = dma.vmem_to_smem %s47, 16, [#allocation8], [#allocation7]
    $region21: #{msdnet_forward.1} parent=1 // pred_fallthru
      _
    // Predicated region
    $region22: #{msdnet_forward.1} parent=1 // pred_check
      _
    $region23: #{msdnet_forward.1} parent=1 // pred_check_branch
      %51 = sbr.rel (0) target = $region25
    $region24: #{msdnet_forward.1} parent=1 // pred_region
      %s53 = ssub.s32 16, 16
      %54 = vsyncadd [#allocation10], %s53
      %s56 = sshll.u32 %s5, 4
      %s57 = int_to_ptr.vmem [resolvable:$true] %s56
      %59 = dma.vmem_to_smem %s57, 16, [#allocation9], [#allocation10]
    $region25: #{msdnet_forward.1} parent=1 // pred_fallthru
      _
    // Predicated region
    $region26: #{msdnet_forward.1} parent=1 // pred_check
      _
    $region27: #{msdnet_forward.1} parent=1 // pred_check_branch
      %61 = sbr.rel (0) target = $region29
    $region28: #{msdnet_forward.1} parent=1 // pred_region
      _
    $region29: #{msdnet_forward.1} parent=1 // pred_fallthru
      _
    // Predicated region
    $region30: #{msdnet_forward.1} parent=1 // pred_check
      _
    $region31: #{msdnet_forward.1} parent=1 // pred_check_branch
      %63 = sbr.rel (0) target = $region33
    $region32: #{msdnet_forward.1} parent=1 // pred_region
      %64 = dma.done [#allocation5], 48
    $region33: #{msdnet_forward.1} parent=1 // pred_fallthru
      _
    // Predicated region
    $region34: #{msdnet_forward.1} parent=1 // pred_check
      _
    $region35: #{msdnet_forward.1} parent=1 // pred_check_branch
      %66 = sbr.rel (0) target = $region37
    $region36: #{msdnet_forward.1} parent=1 // pred_region
      %67 = dma.done [#allocation7], 16
    $region37: #{msdnet_forward.1} parent=1 // pred_fallthru
      _
    // Predicated region
    $region38: #{msdnet_forward.1} parent=1 // pred_check
      _
    $region39: #{msdnet_forward.1} parent=1 // pred_check_branch
      %69 = sbr.rel (0) target = $region41
    $region40: #{msdnet_forward.1} parent=1 // pred_region
      %70 = dma.done [#allocation7], 16
    $region41: #{msdnet_forward.1} parent=1 // pred_fallthru
      _
    // Predicated region
    $region42: #{msdnet_forward.1} parent=1 // pred_check
      _
    $region43: #{msdnet_forward.1} parent=1 // pred_check_branch
      %72 = sbr.rel (0) target = $region45
    $region44: #{msdnet_forward.1} parent=1 // pred_region
      %73 = dma.done [#allocation10], 16
    $region45: #{msdnet_forward.1} parent=1 // pred_fallthru
      _
    %74 = sfence
    %v75 = vld [vmem:[%s0] sm:$0xff]
    %v76 = vld [vmem:[%s1] sm:$0xff]
    %77 = vst [vmem:[#allocation2] sm:$0xff] %v75
    %s78 = sld [smem:[#allocation9]]
    %v79 = vstv %s78
    %v80 = vmul.f32 %v79, %v75
    %v81 = vld [vmem:[#allocation2] sm:$0xff]
    %s82 = sld [smem:[#allocation4]]
    %v83 = vstv %s82
    %v84 = vmul.f32 %v83, %v81
    %v85 = vadd.f32 %v84, 0.0
    %s86 = sld [smem:[#allocation4 + $0x1]]
    %v87 = vstv %s86
    %v88 = vmul.f32 %v87, %v81
    %v89 = vadd.f32 %v88, 0.0
    %s90 = sld [smem:[#allocation4 + $0x2]]
    %v91 = vstv %s90
    %v92 = vmul.f32 %v91, %v81
    %v93 = vadd.f32 %v92, 0.0
    %s94 = sld [smem:[#allocation4 + $0x3]]
    %v95 = vstv %s94
    %v96 = vmul.f32 %v95, %v81
    %v97 = vadd.f32 %v96, 0.0
    %s98 = sld [smem:[#allocation4 + $0x4]]
    %v99 = vstv %s98
    %v100 = vmul.f32 %v99, %v81
    %v101 = vadd.f32 %v100, 0.0
    %s102 = sld [smem:[#allocation4 + $0x5]]
    %v103 = vstv %s102
    %v104 = vmul.f32 %v103, %v81
    %v105 = vadd.f32 %v104, 0.0
    %s106 = sld [smem:[#allocation4 + $0x6]]
    %v107 = vstv %s106
    %v108 = vmul.f32 %v107, %v81
    %v109 = vadd.f32 %v108, 0.0
    %s110 = sld [smem:[#allocation4 + $0x7]]
    %v111 = vstv %s110
    %v112 = vmul.f32 %v111, %v81
    %v113 = vadd.f32 %v112, 0.0
    %s114 = sld [smem:[#allocation4 + $0x8]]
    %v115 = vstv %s114
    %v116 = vmul.f32 %v115, %v81
    %v117 = vadd.f32 %v116, 0.0
    %v119 = vcombine.high %v85, %v85
    %v121 = vunpack.c.l.s4 1983009808
    %v122 = vunpack.c.0.s8 %v121
    %v123 = vlaneseq
    %v124 = vshrl.u32 %v123, 7
    %v125 = vsub.s32 %v122, %v124
    %v126 = vrot.slane %v85, %v125
    %v128 = vunpack.c.l.s4 1983009808
    %v129 = vunpack.c.0.s8 %v128
    %v130 = vlaneseq
    %v131 = vshrl.u32 %v130, 7
    %v132 = vsub.s32 %v129, %v131
    %v133 = vrot.slane %v119, %v132
    %v134 = vcombine.high %v133, %v133
    %135 = vrot.lane.b32.xlu0 %v134, 23
    %v136 = vpop.permute.xlu0 %135
    %v138 = vcombine.high %v126, %v126
    %139 = vrot.lane.b32.xlu0 %v126, 23
    %v140 = vpop.permute.xlu0 %139
    %141 = vrot.lane.b32.xlu0 %v138, 23
    %v142 = vpop.permute.xlu0 %141
    %143 = vrot.lane.b32.xlu0 %v133, 23
    %v144 = vpop.permute.xlu0 %143
    %vm145 = vcmask 187392
    %v146 = vsel %vm145, %v140, %v142
    %v147 = vsel %vm145, %v142, %v144
    %v148 = vsel %vm145, %v144, %v136
    %v150 = vsel %vm145, %v136, %v140
    %v152 = vcombine.low %v150, %v146
    %v153 = vcombine.low %v147, %v148
    %v155 = vunpack.c.l.s4 1983009808
    %v156 = vunpack.c.0.s8 %v155
    %v157 = vlaneseq
    %v158 = vshrl.u32 %v157, 7
    %v159 = vsub.s32 %v156, %v158
    %v160 = vrot.slane %v152, %v159
    %v162 = vunpack.c.l.s4 1983009808
    %v163 = vunpack.c.0.s8 %v162
    %v164 = vlaneseq
    %v165 = vshrl.u32 %v164, 7
    %v166 = vsub.s32 %v163, %v165
    %v167 = vrot.slane %v153, %v166
    %v168 = vcombine.low %v160, %v167
    %v170 = vadd.f32 %v101, %v168
    %v172 = vcombine.high %v89, %v89
    %v174 = vunpack.c.l.s4 1983009808
    %v175 = vunpack.c.0.s8 %v174
    %v176 = vlaneseq
    %v177 = vshrl.u32 %v176, 7
    %v178 = vsub.s32 %v175, %v177
    %v179 = vrot.slane %v89, %v178
    %v181 = vunpack.c.l.s4 1983009808
    %v182 = vunpack.c.0.s8 %v181
    %v183 = vlaneseq
    %v184 = vshrl.u32 %v183, 7
    %v185 = vsub.s32 %v182, %v184
    %v186 = vrot.slane %v172, %v185
    %v187 = vcombine.high %v186, %v186
    %188 = vrot.lane.b32.xlu0 %v187, 22
    %v189 = vpop.permute.xlu0 %188
    %v191 = vcombine.high %v179, %v179
    %192 = vrot.lane.b32.xlu0 %v179, 22
    %v193 = vpop.permute.xlu0 %192
    %194 = vrot.lane.b32.xlu0 %v191, 22
    %v195 = vpop.permute.xlu0 %194
    %196 = vrot.lane.b32.xlu0 %v186, 22
    %v197 = vpop.permute.xlu0 %196
    %vm198 = vcmask 179200
    %v199 = vsel %vm198, %v193, %v195
    %v200 = vsel %vm198, %v195, %v197
    %v201 = vsel %vm198, %v197, %v189
    %v203 = vsel %vm198, %v189, %v193
    %v205 = vcombine.low %v203, %v199
    %v206 = vcombine.low %v200, %v201
    %v208 = vunpack.c.l.s4 1983009808
    %v209 = vunpack.c.0.s8 %v208
    %v210 = vlaneseq
    %v211 = vshrl.u32 %v210, 7
    %v212 = vsub.s32 %v209, %v211
    %v213 = vrot.slane %v205, %v212
    %v215 = vunpack.c.l.s4 1983009808
    %v216 = vunpack.c.0.s8 %v215
    %v217 = vlaneseq
    %v218 = vshrl.u32 %v217, 7
    %v219 = vsub.s32 %v216, %v218
    %v220 = vrot.slane %v206, %v219
    %v221 = vcombine.low %v213, %v220
    %v223 = vadd.f32 %v170, %v221
    %v225 = vcombine.high %v93, %v93
    %v227 = vunpack.c.l.s4 1983009808
    %v228 = vunpack.c.0.s8 %v227
    %v229 = vlaneseq
    %v230 = vshrl.u32 %v229, 7
    %v231 = vsub.s32 %v228, %v230
    %v232 = vrot.slane %v93, %v231
    %v234 = vunpack.c.l.s4 1983009808
    %v235 = vunpack.c.0.s8 %v234
    %v236 = vlaneseq
    %v237 = vshrl.u32 %v236, 7
    %v238 = vsub.s32 %v235, %v237
    %v239 = vrot.slane %v225, %v238
    %v240 = vcombine.high %v239, %v239
    %241 = vrot.lane.b32.xlu0 %v240, 21
    %v242 = vpop.permute.xlu0 %241
    %v244 = vcombine.high %v232, %v232
    %245 = vrot.lane.b32.xlu0 %v232, 21
    %v246 = vpop.permute.xlu0 %245
    %247 = vrot.lane.b32.xlu0 %v244, 21
    %v248 = vpop.permute.xlu0 %247
    %249 = vrot.lane.b32.xlu0 %v239, 21
    %v250 = vpop.permute.xlu0 %249
    %vm251 = vcmask 171008
    %v252 = vsel %vm251, %v246, %v248
    %v253 = vsel %vm251, %v248, %v250
    %v254 = vsel %vm251, %v250, %v242
    %v256 = vsel %vm251, %v242, %v246
    %v258 = vcombine.low %v256, %v252
    %v259 = vcombine.low %v253, %v254
    %v261 = vunpack.c.l.s4 1983009808
    %v262 = vunpack.c.0.s8 %v261
    %v263 = vlaneseq
    %v264 = vshrl.u32 %v263, 7
    %v265 = vsub.s32 %v262, %v264
    %v266 = vrot.slane %v258, %v265
    %v268 = vunpack.c.l.s4 1983009808
    %v269 = vunpack.c.0.s8 %v268
    %v270 = vlaneseq
    %v271 = vshrl.u32 %v270, 7
    %v272 = vsub.s32 %v269, %v271
    %v273 = vrot.slane %v259, %v272
    %v274 = vcombine.low %v266, %v273
    %v276 = vadd.f32 %v223, %v274
    %v278 = vcombine.high %v97, %v97
    %v280 = vunpack.c.l.s4 1983009808
    %v281 = vunpack.c.0.s8 %v280
    %v282 = vlaneseq
    %v283 = vshrl.u32 %v282, 7
    %v284 = vsub.s32 %v281, %v283
    %v285 = vrot.slane %v97, %v284
    %v287 = vunpack.c.l.s4 1983009808
    %v288 = vunpack.c.0.s8 %v287
    %v289 = vlaneseq
    %v290 = vshrl.u32 %v289, 7
    %v291 = vsub.s32 %v288, %v290
    %v292 = vrot.slane %v278, %v291
    %v293 = vcombine.high %v292, %v292
    %294 = vrot.lane.b32.xlu0 %v293, 1
    %v295 = vpop.permute.xlu0 %294
    %v297 = vcombine.high %v285, %v285
    %298 = vrot.lane.b32.xlu0 %v285, 1
    %v299 = vpop.permute.xlu0 %298
    %300 = vrot.lane.b32.xlu0 %v297, 1
    %v301 = vpop.permute.xlu0 %300
    %302 = vrot.lane.b32.xlu0 %v292, 1
    %v303 = vpop.permute.xlu0 %302
    %vm304 = vcmask 7168
    %v305 = vsel %vm304, %v299, %v301
    %v306 = vsel %vm304, %v301, %v303
    %v307 = vsel %vm304, %v303, %v295
    %v309 = vsel %vm304, %v295, %v299
    %v311 = vcombine.low %v309, %v305
    %v312 = vcombine.low %v306, %v307
    %v314 = vunpack.c.l.s4 1983009808
    %v315 = vunpack.c.0.s8 %v314
    %v316 = vlaneseq
    %v317 = vshrl.u32 %v316, 7
    %v318 = vsub.s32 %v315, %v317
    %v319 = vrot.slane %v311, %v318
    %v321 = vunpack.c.l.s4 1983009808
    %v322 = vunpack.c.0.s8 %v321
    %v323 = vlaneseq
    %v324 = vshrl.u32 %v323, 7
    %v325 = vsub.s32 %v322, %v324
    %v326 = vrot.slane %v312, %v325
    %v327 = vcombine.low %v319, %v326
    %v329 = vadd.f32 %v276, %v327
    %v331 = vcombine.high %v105, %v105
    %v333 = vunpack.c.l.s4 1983009808
    %v334 = vunpack.c.0.s8 %v333
    %v335 = vlaneseq
    %v336 = vshrl.u32 %v335, 7
    %v337 = vsub.s32 %v334, %v336
    %v338 = vrot.slane %v105, %v337
    %v340 = vunpack.c.l.s4 1983009808
    %v341 = vunpack.c.0.s8 %v340
    %v342 = vlaneseq
    %v343 = vshrl.u32 %v342, 7
    %v344 = vsub.s32 %v341, %v343
    %v345 = vrot.slane %v331, %v344
    %v346 = vcombine.high %v338, %v338
    %v347 = vcombine.high %v345, %v345
    %348 = vrot.lane.b32.xlu0 %v338, 127
    %v349 = vpop.permute.xlu0 %348
    %350 = vrot.lane.b32.xlu0 %v346, 127
    %v351 = vpop.permute.xlu0 %350
    %352 = vrot.lane.b32.xlu0 %v345, 127
    %v353 = vpop.permute.xlu0 %352
    %354 = vrot.lane.b32.xlu0 %v347, 127
    %v355 = vpop.permute.xlu0 %354
    %vm356 = vcmask 1039360
    %v357 = vsel %vm356, %v349, %v351
    %v358 = vsel %vm356, %v351, %v353
    %v359 = vsel %vm356, %v353, %v355
    %v362 = vsel %vm356, %v355, %v349
    %v364 = vcombine.low %v357, %v358
    %v365 = vcombine.low %v359, %v362
    %v367 = vunpack.c.l.s4 1983009808
    %v368 = vunpack.c.0.s8 %v367
    %v369 = vlaneseq
    %v370 = vshrl.u32 %v369, 7
    %v371 = vsub.s32 %v368, %v370
    %v372 = vrot.slane %v364, %v371
    %v374 = vunpack.c.l.s4 1983009808
    %v375 = vunpack.c.0.s8 %v374
    %v376 = vlaneseq
    %v377 = vshrl.u32 %v376, 7
    %v378 = vsub.s32 %v375, %v377
    %v379 = vrot.slane %v365, %v378
    %v380 = vcombine.low %v372, %v379
    %v382 = vadd.f32 %v329, %v380
    %v384 = vcombine.high %v109, %v109
    %v386 = vunpack.c.l.s4 1983009808
    %v387 = vunpack.c.0.s8 %v386
    %v388 = vlaneseq
    %v389 = vshrl.u32 %v388, 7
    %v390 = vsub.s32 %v387, %v389
    %v391 = vrot.slane %v109, %v390
    %v393 = vunpack.c.l.s4 1983009808
    %v394 = vunpack.c.0.s8 %v393
    %v395 = vlaneseq
    %v396 = vshrl.u32 %v395, 7
    %v397 = vsub.s32 %v394, %v396
    %v398 = vrot.slane %v384, %v397
    %v399 = vcombine.high %v391, %v391
    %v400 = vcombine.high %v398, %v398
    %401 = vrot.lane.b32.xlu0 %v391, 107
    %v402 = vpop.permute.xlu0 %401
    %403 = vrot.lane.b32.xlu0 %v399, 107
    %v404 = vpop.permute.xlu0 %403
    %405 = vrot.lane.b32.xlu0 %v398, 107
    %v406 = vpop.permute.xlu0 %405
    %407 = vrot.lane.b32.xlu0 %v400, 107
    %v408 = vpop.permute.xlu0 %407
    %vm409 = vcmask 875520
    %v410 = vsel %vm409, %v402, %v404
    %v411 = vsel %vm409, %v404, %v406
    %v412 = vsel %vm409, %v406, %v408
    %v415 = vsel %vm409, %v408, %v402
    %v417 = vcombine.low %v410, %v411
    %v418 = vcombine.low %v412, %v415
    %v420 = vunpack.c.l.s4 1983009808
    %v421 = vunpack.c.0.s8 %v420
    %v422 = vlaneseq
    %v423 = vshrl.u32 %v422, 7
    %v424 = vsub.s32 %v421, %v423
    %v425 = vrot.slane %v417, %v424
    %v427 = vunpack.c.l.s4 1983009808
    %v428 = vunpack.c.0.s8 %v427
    %v429 = vlaneseq
    %v430 = vshrl.u32 %v429, 7
    %v431 = vsub.s32 %v428, %v430
    %v432 = vrot.slane %v418, %v431
    %v433 = vcombine.low %v425, %v432
    %v435 = vadd.f32 %v382, %v433
    %v437 = vcombine.high %v113, %v113
    %v439 = vunpack.c.l.s4 1983009808
    %v440 = vunpack.c.0.s8 %v439
    %v441 = vlaneseq
    %v442 = vshrl.u32 %v441, 7
    %v443 = vsub.s32 %v440, %v442
    %v444 = vrot.slane %v113, %v443
    %v446 = vunpack.c.l.s4 1983009808
    %v447 = vunpack.c.0.s8 %v446
    %v448 = vlaneseq
    %v449 = vshrl.u32 %v448, 7
    %v450 = vsub.s32 %v447, %v449
    %v451 = vrot.slane %v437, %v450
    %v452 = vcombine.high %v444, %v444
    %v453 = vcombine.high %v451, %v451
    %454 = vrot.lane.b32.xlu0 %v444, 106
    %v455 = vpop.permute.xlu0 %454
    %456 = vrot.lane.b32.xlu0 %v452, 106
    %v457 = vpop.permute.xlu0 %456
    %458 = vrot.lane.b32.xlu0 %v451, 106
    %v459 = vpop.permute.xlu0 %458
    %460 = vrot.lane.b32.xlu0 %v453, 106
    %v461 = vpop.permute.xlu0 %460
    %vm462 = vcmask 867328
    %v463 = vsel %vm462, %v455, %v457
    %v464 = vsel %vm462, %v457, %v459
    %v465 = vsel %vm462, %v459, %v461
    %v468 = vsel %vm462, %v461, %v455
    %v470 = vcombine.low %v463, %v464
    %v471 = vcombine.low %v465, %v468
    %v473 = vunpack.c.l.s4 1983009808
    %v474 = vunpack.c.0.s8 %v473
    %v475 = vlaneseq
    %v476 = vshrl.u32 %v475, 7
    %v477 = vsub.s32 %v474, %v476
    %v478 = vrot.slane %v470, %v477
    %v480 = vunpack.c.l.s4 1983009808
    %v481 = vunpack.c.0.s8 %v480
    %v482 = vlaneseq
    %v483 = vshrl.u32 %v482, 7
    %v484 = vsub.s32 %v481, %v483
    %v485 = vrot.slane %v471, %v484
    %v486 = vcombine.low %v478, %v485
    %v488 = vadd.f32 %v435, %v486
    %v490 = vcombine.high %v117, %v117
    %v492 = vunpack.c.l.s4 1983009808
    %v493 = vunpack.c.0.s8 %v492
    %v494 = vlaneseq
    %v495 = vshrl.u32 %v494, 7
    %v496 = vsub.s32 %v493, %v495
    %v497 = vrot.slane %v117, %v496
    %v499 = vunpack.c.l.s4 1983009808
    %v500 = vunpack.c.0.s8 %v499
    %v501 = vlaneseq
    %v502 = vshrl.u32 %v501, 7
    %v503 = vsub.s32 %v500, %v502
    %v504 = vrot.slane %v490, %v503
    %v505 = vcombine.high %v497, %v497
    %v506 = vcombine.high %v504, %v504
    %507 = vrot.lane.b32.xlu0 %v497, 105
    %v508 = vpop.permute.xlu0 %507
    %509 = vrot.lane.b32.xlu0 %v505, 105
    %v510 = vpop.permute.xlu0 %509
    %511 = vrot.lane.b32.xlu0 %v504, 105
    %v512 = vpop.permute.xlu0 %511
    %513 = vrot.lane.b32.xlu0 %v506, 105
    %v514 = vpop.permute.xlu0 %513
    %vm515 = vcmask 859136
    %v516 = vsel %vm515, %v508, %v510
    %v517 = vsel %vm515, %v510, %v512
    %v518 = vsel %vm515, %v512, %v514
    %v521 = vsel %vm515, %v514, %v508
    %v523 = vcombine.low %v516, %v517
    %v524 = vcombine.low %v518, %v521
    %v526 = vunpack.c.l.s4 1983009808
    %v527 = vunpack.c.0.s8 %v526
    %v528 = vlaneseq
    %v529 = vshrl.u32 %v528, 7
    %v530 = vsub.s32 %v527, %v529
    %v531 = vrot.slane %v523, %v530
    %v533 = vunpack.c.l.s4 1983009808
    %v534 = vunpack.c.0.s8 %v533
    %v535 = vlaneseq
    %v536 = vshrl.u32 %v535, 7
    %v537 = vsub.s32 %v534, %v536
    %v538 = vrot.slane %v524, %v537
    %v539 = vcombine.low %v531, %v538
    %v541 = vadd.f32 %v488, %v539
    %v542 = vmul.f32 %v541, %v76
    %v544 = vcombine.high %v542, %v542
    %v546 = vunpack.c.l.s4 1983009808
    %v547 = vunpack.c.0.s8 %v546
    %v548 = vlaneseq
    %v549 = vshrl.u32 %v548, 7
    %v550 = vsub.s32 %v547, %v549
    %v551 = vrot.slane %v542, %v550
    %v553 = vunpack.c.l.s4 1983009808
    %v554 = vunpack.c.0.s8 %v553
    %v555 = vlaneseq
    %v556 = vshrl.u32 %v555, 7
    %v557 = vsub.s32 %v554, %v556
    %v558 = vrot.slane %v544, %v557
    %v559 = vcombine.high %v551, %v551
    %v560 = vcombine.high %v558, %v558
    %vm565 = vcmask 1041408
    %v566 = vsel %vm565, %v551, 0.0
    %v567 = vsel %vm565, %v559, 0.0
    %v568 = vadd.f32 %v566, %v567
    %v569 = vsel %vm565, %v558, 0.0
    %v570 = vadd.f32 %v568, %v569
    %v571 = vsel %vm565, %v560, 0.0
    %v572 = vadd.f32 %v570, %v571
    %573 = vadd.xlane.f32.xlu0 %v572
    %v574 = vpop.xlane.xlu0 %573
    %v575 = vrot.slane %v574, 4
    %v576 = vadd.f32 %v574, %v575
    %v577 = vrot.slane %v576, 2
    %v578 = vadd.f32 %v576, %v577
    %v579 = vrot.slane %v578, 1
    %v580 = vadd.f32 %v578, %v579
    %s581 = vtos %v580
    %s582 = smul.f32 %s581, 0.001953125
    %v583 = vstv %s582
    %v584 = vsub.f32 %v541, %v583
    %v585 = vmul.f32 %v584, %v76
    %v586 = vmul.f32 %v585, %v585
    %v588 = vcombine.high %v586, %v586
    %v590 = vunpack.c.l.s4 1983009808
    %v591 = vunpack.c.0.s8 %v590
    %v592 = vlaneseq
    %v593 = vshrl.u32 %v592, 7
    %v594 = vsub.s32 %v591, %v593
    %v595 = vrot.slane %v586, %v594
    %v597 = vunpack.c.l.s4 1983009808
    %v598 = vunpack.c.0.s8 %v597
    %v599 = vlaneseq
    %v600 = vshrl.u32 %v599, 7
    %v601 = vsub.s32 %v598, %v600
    %v602 = vrot.slane %v588, %v601
    %v603 = vcombine.high %v595, %v595
    %v604 = vcombine.high %v602, %v602
    %v609 = vsel %vm565, %v595, 0.0
    %v610 = vsel %vm565, %v603, 0.0
    %v611 = vadd.f32 %v609, %v610
    %v612 = vsel %vm565, %v602, 0.0
    %v613 = vadd.f32 %v611, %v612
    %v614 = vsel %vm565, %v604, 0.0
    %v615 = vadd.f32 %v613, %v614
    %616 = vadd.xlane.f32.xlu0 %v615
    %v617 = vpop.xlane.xlu0 %616
    %v618 = vrot.slane %v617, 4
    %v619 = vadd.f32 %v617, %v618
    %v620 = vrot.slane %v619, 2
    %v621 = vadd.f32 %v619, %v620
    %v622 = vrot.slane %v621, 1
    %v623 = vadd.f32 %v621, %v622
    %s624 = vtos %v623
    %s625 = smul.f32 %s624, 0.001953125
    %s626 = sld [smem:[#allocation6]]
    %s627 = sadd.f32 %s625, 1e-05
    %v628 = vstv %s627
    %v629 = vrsqrt.pop %v628
    %s630 = vtos %v629
    %s631 = smul.f32 %s626, %s630
    %v632 = vstv %s631
    %v633 = vmul.f32 %v585, %v632
    %s634 = sld [smem:[#allocation8]]
    %v635 = vstv %s634
    %v636 = vadd.f32 %v633, %v635
    %v637 = vmax.f32 %v636, 0.0
    %v638 = vmul.f32 %v637, %v76
    %s639 = scalar_lea.vmem [#allocation2], 8
    %640 = vst [vmem:[%s639] sm:$0xff] %v638
    %s641 = sld [smem:[#allocation9 + $0x1]]
    %v642 = vstv %s641
    %v643 = vmul.f32 %v642, %v638
    %v644 = vadd.f32 %v80, %v643
    loop: start=0, step=1, limit=2
    $region46: #{msdnet_forward.1} parent=1 // loop_pre_header
      _
    $region47: #{msdnet_forward.1} parent=1 // loop_header
      %s646 = sphi 0, %s650
      %p647 = scmp.ge.s32.totalorder %s646, 2
      %v651 = vphi 0.0, %v669
      %v652 = vphi 0.0, %v674
      %v653 = vphi 0.0, %v679
      %v654 = vphi 0.0, %v684
      %v655 = vphi 0.0, %v689
      %v656 = vphi 0.0, %v694
      %v657 = vphi 0.0, %v699
      %v658 = vphi 0.0, %v704
      %v659 = vphi 0.0, %v709
    $region48: #{msdnet_forward.1} parent=1 // loop_header_branch
      %649 = sbr.rel (%p647) target = $region52
    $region49: #{msdnet_forward.1} parent=1 // loop_body
      %s660 = smul.u32 %s646, 4
      %s661 = smul.addr %s660, 2
      %s662 = scalar_lea.vmem [#allocation2], %s661
      %v663 = vld [vmem:[%s662] sm:$0xff]
      %s664 = smul.u32 %s646, 9
      %s665 = sadd.s32 %s664, 9
      %s666 = sld [smem:[#allocation4 + %s665]]
      %v667 = vstv %s666
      %v668 = vmul.f32 %v667, %v663
      %v669 = vadd.f32 %v651, %v668
      %s670 = sadd.s32 %s664, 10
      %s671 = sld [smem:[#allocation4 + %s670]]
      %v672 = vstv %s671
      %v673 = vmul.f32 %v672, %v663
      %v674 = vadd.f32 %v652, %v673
      %s675 = sadd.s32 %s664, 11
      %s676 = sld [smem:[#allocation4 + %s675]]
      %v677 = vstv %s676
      %v678 = vmul.f32 %v677, %v663
      %v679 = vadd.f32 %v653, %v678
      %s680 = sadd.s32 %s664, 12
      %s681 = sld [smem:[#allocation4 + %s680]]
      %v682 = vstv %s681
      %v683 = vmul.f32 %v682, %v663
      %v684 = vadd.f32 %v654, %v683
      %s685 = sadd.s32 %s664, 13
      %s686 = sld [smem:[#allocation4 + %s685]]
      %v687 = vstv %s686
      %v688 = vmul.f32 %v687, %v663
      %v689 = vadd.f32 %v655, %v688
      %s690 = sadd.s32 %s664, 14
      %s691 = sld [smem:[#allocation4 + %s690]]
      %v692 = vstv %s691
      %v693 = vmul.f32 %v692, %v663
      %v694 = vadd.f32 %v656, %v693
      %s695 = sadd.s32 %s664, 15
      %s696 = sld [smem:[#allocation4 + %s695]]
      %v697 = vstv %s696
      %v698 = vmul.f32 %v697, %v663
      %v699 = vadd.f32 %v657, %v698
      %s700 = sadd.s32 %s664, 16
      %s701 = sld [smem:[#allocation4 + %s700]]
      %v702 = vstv %s701
      %v703 = vmul.f32 %v702, %v663
      %v704 = vadd.f32 %v658, %v703
      %s705 = sadd.s32 %s664, 17
      %s706 = sld [smem:[#allocation4 + %s705]]
      %v707 = vstv %s706
      %v708 = vmul.f32 %v707, %v663
      %v709 = vadd.f32 %v659, %v708
    $region50: #{msdnet_forward.1} parent=1 // loop_footer
      %s650 = sadd.s32 1, %s646
    $region51: #{msdnet_forward.1} parent=1 // loop_footer_branch
      %645 = sbr.rel target = $region47
    $region52: #{msdnet_forward.1} parent=1 // loop_exit
      _
    %v711 = vcombine.high %v651, %v651
    %v713 = vunpack.c.l.s4 1983009808
    %v714 = vunpack.c.0.s8 %v713
    %v715 = vlaneseq
    %v716 = vshrl.u32 %v715, 7
    %v717 = vsub.s32 %v714, %v716
    %v718 = vrot.slane %v651, %v717
    %v720 = vunpack.c.l.s4 1983009808
    %v721 = vunpack.c.0.s8 %v720
    %v722 = vlaneseq
    %v723 = vshrl.u32 %v722, 7
    %v724 = vsub.s32 %v721, %v723
    %v725 = vrot.slane %v711, %v724
    %v726 = vcombine.high %v725, %v725
    %727 = vrot.lane.b32.xlu0 %v726, 46
    %v728 = vpop.permute.xlu0 %727
    %v730 = vcombine.high %v718, %v718
    %731 = vrot.lane.b32.xlu0 %v718, 46
    %v732 = vpop.permute.xlu0 %731
    %733 = vrot.lane.b32.xlu0 %v730, 46
    %v734 = vpop.permute.xlu0 %733
    %735 = vrot.lane.b32.xlu0 %v725, 46
    %v736 = vpop.permute.xlu0 %735
    %vm737 = vcmask 375808
    %v738 = vsel %vm737, %v732, %v734
    %v739 = vsel %vm737, %v734, %v736
    %v740 = vsel %vm737, %v736, %v728
    %v742 = vsel %vm737, %v728, %v732
    %v744 = vcombine.low %v742, %v738
    %v745 = vcombine.low %v739, %v740
    %v747 = vunpack.c.l.s4 1983009808
    %v748 = vunpack.c.0.s8 %v747
    %v749 = vlaneseq
    %v750 = vshrl.u32 %v749, 7
    %v751 = vsub.s32 %v748, %v750
    %v752 = vrot.slane %v744, %v751
    %v754 = vunpack.c.l.s4 1983009808
    %v755 = vunpack.c.0.s8 %v754
    %v756 = vlaneseq
    %v757 = vshrl.u32 %v756, 7
    %v758 = vsub.s32 %v755, %v757
    %v759 = vrot.slane %v745, %v758
    %v760 = vcombine.low %v752, %v759
    %v762 = vadd.f32 %v655, %v760
    %v764 = vcombine.high %v652, %v652
    %v766 = vunpack.c.l.s4 1983009808
    %v767 = vunpack.c.0.s8 %v766
    %v768 = vlaneseq
    %v769 = vshrl.u32 %v768, 7
    %v770 = vsub.s32 %v767, %v769
    %v771 = vrot.slane %v652, %v770
    %v773 = vunpack.c.l.s4 1983009808
    %v774 = vunpack.c.0.s8 %v773
    %v775 = vlaneseq
    %v776 = vshrl.u32 %v775, 7
    %v777 = vsub.s32 %v774, %v776
    %v778 = vrot.slane %v764, %v777
    %v779 = vcombine.high %v778, %v778
    %780 = vrot.lane.b32.xlu0 %v779, 44
    %v781 = vpop.permute.xlu0 %780
    %v783 = vcombine.high %v771, %v771
    %784 = vrot.lane.b32.xlu0 %v771, 44
    %v785 = vpop.permute.xlu0 %784
    %786 = vrot.lane.b32.xlu0 %v783, 44
    %v787 = vpop.permute.xlu0 %786
    %788 = vrot.lane.b32.xlu0 %v778, 44
    %v789 = vpop.permute.xlu0 %788
    %vm790 = vcmask 359424
    %v791 = vsel %vm790, %v785, %v787
    %v792 = vsel %vm790, %v787, %v789
    %v793 = vsel %vm790, %v789, %v781
    %v795 = vsel %vm790, %v781, %v785
    %v797 = vcombine.low %v795, %v791
    %v798 = vcombine.low %v792, %v793
    %v800 = vunpack.c.l.s4 1983009808
    %v801 = vunpack.c.0.s8 %v800
    %v802 = vlaneseq
    %v803 = vshrl.u32 %v802, 7
    %v804 = vsub.s32 %v801, %v803
    %v805 = vrot.slane %v797, %v804
    %v807 = vunpack.c.l.s4 1983009808
    %v808 = vunpack.c.0.s8 %v807
    %v809 = vlaneseq
    %v810 = vshrl.u32 %v809, 7
    %v811 = vsub.s32 %v808, %v810
    %v812 = vrot.slane %v798, %v811
    %v813 = vcombine.low %v805, %v812
    %v815 = vadd.f32 %v762, %v813
    %v817 = vcombine.high %v653, %v653
    %v819 = vunpack.c.l.s4 1983009808
    %v820 = vunpack.c.0.s8 %v819
    %v821 = vlaneseq
    %v822 = vshrl.u32 %v821, 7
    %v823 = vsub.s32 %v820, %v822
    %v824 = vrot.slane %v653, %v823
    %v826 = vunpack.c.l.s4 1983009808
    %v827 = vunpack.c.0.s8 %v826
    %v828 = vlaneseq
    %v829 = vshrl.u32 %v828, 7
    %v830 = vsub.s32 %v827, %v829
    %v831 = vrot.slane %v817, %v830
    %v832 = vcombine.high %v831, %v831
    %833 = vrot.lane.b32.xlu0 %v832, 42
    %v834 = vpop.permute.xlu0 %833
    %v836 = vcombine.high %v824, %v824
    %837 = vrot.lane.b32.xlu0 %v824, 42
    %v838 = vpop.permute.xlu0 %837
    %839 = vrot.lane.b32.xlu0 %v836, 42
    %v840 = vpop.permute.xlu0 %839
    %841 = vrot.lane.b32.xlu0 %v831, 42
    %v842 = vpop.permute.xlu0 %841
    %vm843 = vcmask 343040
    %v844 = vsel %vm843, %v838, %v840
    %v845 = vsel %vm843, %v840, %v842
    %v846 = vsel %vm843, %v842, %v834
    %v848 = vsel %vm843, %v834, %v838
    %v850 = vcombine.low %v848, %v844
    %v851 = vcombine.low %v845, %v846
    %v853 = vunpack.c.l.s4 1983009808
    %v854 = vunpack.c.0.s8 %v853
    %v855 = vlaneseq
    %v856 = vshrl.u32 %v855, 7
    %v857 = vsub.s32 %v854, %v856
    %v858 = vrot.slane %v850, %v857
    %v860 = vunpack.c.l.s4 1983009808
    %v861 = vunpack.c.0.s8 %v860
    %v862 = vlaneseq
    %v863 = vshrl.u32 %v862, 7
    %v864 = vsub.s32 %v861, %v863
    %v865 = vrot.slane %v851, %v864
    %v866 = vcombine.low %v858, %v865
    %v868 = vadd.f32 %v815, %v866
    %v870 = vcombine.high %v654, %v654
    %v872 = vunpack.c.l.s4 1983009808
    %v873 = vunpack.c.0.s8 %v872
    %v874 = vlaneseq
    %v875 = vshrl.u32 %v874, 7
    %v876 = vsub.s32 %v873, %v875
    %v877 = vrot.slane %v654, %v876
    %v879 = vunpack.c.l.s4 1983009808
    %v880 = vunpack.c.0.s8 %v879
    %v881 = vlaneseq
    %v882 = vshrl.u32 %v881, 7
    %v883 = vsub.s32 %v880, %v882
    %v884 = vrot.slane %v870, %v883
    %v885 = vcombine.high %v884, %v884
    %886 = vrot.lane.b32.xlu0 %v885, 2
    %v887 = vpop.permute.xlu0 %886
    %v889 = vcombine.high %v877, %v877
    %890 = vrot.lane.b32.xlu0 %v877, 2
    %v891 = vpop.permute.xlu0 %890
    %892 = vrot.lane.b32.xlu0 %v889, 2
    %v893 = vpop.permute.xlu0 %892
    %894 = vrot.lane.b32.xlu0 %v884, 2
    %v895 = vpop.permute.xlu0 %894
    %vm896 = vcmask 15360
    %v897 = vsel %vm896, %v891, %v893
    %v898 = vsel %vm896, %v893, %v895
    %v899 = vsel %vm896, %v895, %v887
    %v901 = vsel %vm896, %v887, %v891
    %v903 = vcombine.low %v901, %v897
    %v904 = vcombine.low %v898, %v899
    %v906 = vunpack.c.l.s4 1983009808
    %v907 = vunpack.c.0.s8 %v906
    %v908 = vlaneseq
    %v909 = vshrl.u32 %v908, 7
    %v910 = vsub.s32 %v907, %v909
    %v911 = vrot.slane %v903, %v910
    %v913 = vunpack.c.l.s4 1983009808
    %v914 = vunpack.c.0.s8 %v913
    %v915 = vlaneseq
    %v916 = vshrl.u32 %v915, 7
    %v917 = vsub.s32 %v914, %v916
    %v918 = vrot.slane %v904, %v917
    %v919 = vcombine.low %v911, %v918
    %v921 = vadd.f32 %v868, %v919
    %v923 = vcombine.high %v656, %v656
    %v925 = vunpack.c.l.s4 1983009808
    %v926 = vunpack.c.0.s8 %v925
    %v927 = vlaneseq
    %v928 = vshrl.u32 %v927, 7
    %v929 = vsub.s32 %v926, %v928
    %v930 = vrot.slane %v656, %v929
    %v932 = vunpack.c.l.s4 1983009808
    %v933 = vunpack.c.0.s8 %v932
    %v934 = vlaneseq
    %v935 = vshrl.u32 %v934, 7
    %v936 = vsub.s32 %v933, %v935
    %v937 = vrot.slane %v923, %v936
    %v938 = vcombine.high %v930, %v930
    %v939 = vcombine.high %v937, %v937
    %940 = vrot.lane.b32.xlu0 %v930, 126
    %v941 = vpop.permute.xlu0 %940
    %942 = vrot.lane.b32.xlu0 %v938, 126
    %v943 = vpop.permute.xlu0 %942
    %944 = vrot.lane.b32.xlu0 %v937, 126
    %v945 = vpop.permute.xlu0 %944
    %946 = vrot.lane.b32.xlu0 %v939, 126
    %v947 = vpop.permute.xlu0 %946
    %vm948 = vcmask 1031168
    %v949 = vsel %vm948, %v941, %v943
    %v950 = vsel %vm948, %v943, %v945
    %v951 = vsel %vm948, %v945, %v947
    %v954 = vsel %vm948, %v947, %v941
    %v956 = vcombine.low %v949, %v950
    %v957 = vcombine.low %v951, %v954
    %v959 = vunpack.c.l.s4 1983009808
    %v960 = vunpack.c.0.s8 %v959
    %v961 = vlaneseq
    %v962 = vshrl.u32 %v961, 7
    %v963 = vsub.s32 %v960, %v962
    %v964 = vrot.slane %v956, %v963
    %v966 = vunpack.c.l.s4 1983009808
    %v967 = vunpack.c.0.s8 %v966
    %v968 = vlaneseq
    %v969 = vshrl.u32 %v968, 7
    %v970 = vsub.s32 %v967, %v969
    %v971 = vrot.slane %v957, %v970
    %v972 = vcombine.low %v964, %v971
    %v974 = vadd.f32 %v921, %v972
    %v976 = vcombine.high %v657, %v657
    %v978 = vunpack.c.l.s4 1983009808
    %v979 = vunpack.c.0.s8 %v978
    %v980 = vlaneseq
    %v981 = vshrl.u32 %v980, 7
    %v982 = vsub.s32 %v979, %v981
    %v983 = vrot.slane %v657, %v982
    %v985 = vunpack.c.l.s4 1983009808
    %v986 = vunpack.c.0.s8 %v985
    %v987 = vlaneseq
    %v988 = vshrl.u32 %v987, 7
    %v989 = vsub.s32 %v986, %v988
    %v990 = vrot.slane %v976, %v989
    %v991 = vcombine.high %v983, %v983
    %v992 = vcombine.high %v990, %v990
    %993 = vrot.lane.b32.xlu0 %v983, 86
    %v994 = vpop.permute.xlu0 %993
    %995 = vrot.lane.b32.xlu0 %v991, 86
    %v996 = vpop.permute.xlu0 %995
    %997 = vrot.lane.b32.xlu0 %v990, 86
    %v998 = vpop.permute.xlu0 %997
    %999 = vrot.lane.b32.xlu0 %v992, 86
    %v1000 = vpop.permute.xlu0 %999
    %vm1001 = vcmask 703488
    %v1002 = vsel %vm1001, %v994, %v996
    %v1003 = vsel %vm1001, %v996, %v998
    %v1004 = vsel %vm1001, %v998, %v1000
    %v1007 = vsel %vm1001, %v1000, %v994
    %v1009 = vcombine.low %v1002, %v1003
    %v1010 = vcombine.low %v1004, %v1007
    %v1012 = vunpack.c.l.s4 1983009808
    %v1013 = vunpack.c.0.s8 %v1012
    %v1014 = vlaneseq
    %v1015 = vshrl.u32 %v1014, 7
    %v1016 = vsub.s32 %v1013, %v1015
    %v1017 = vrot.slane %v1009, %v1016
    %v1019 = vunpack.c.l.s4 1983009808
    %v1020 = vunpack.c.0.s8 %v1019
    %v1021 = vlaneseq
    %v1022 = vshrl.u32 %v1021, 7
    %v1023 = vsub.s32 %v1020, %v1022
    %v1024 = vrot.slane %v1010, %v1023
    %v1025 = vcombine.low %v1017, %v1024
    %v1027 = vadd.f32 %v974, %v1025
    %v1029 = vcombine.high %v658, %v658
    %v1031 = vunpack.c.l.s4 1983009808
    %v1032 = vunpack.c.0.s8 %v1031
    %v1033 = vlaneseq
    %v1034 = vshrl.u32 %v1033, 7
    %v1035 = vsub.s32 %v1032, %v1034
    %v1036 = vrot.slane %v658, %v1035
    %v1038 = vunpack.c.l.s4 1983009808
    %v1039 = vunpack.c.0.s8 %v1038
    %v1040 = vlaneseq
    %v1041 = vshrl.u32 %v1040, 7
    %v1042 = vsub.s32 %v1039, %v1041
    %v1043 = vrot.slane %v1029, %v1042
    %v1044 = vcombine.high %v1036, %v1036
    %v1045 = vcombine.high %v1043, %v1043
    %1046 = vrot.lane.b32.xlu0 %v1036, 84
    %v1047 = vpop.permute.xlu0 %1046
    %1048 = vrot.lane.b32.xlu0 %v1044, 84
    %v1049 = vpop.permute.xlu0 %1048
    %1050 = vrot.lane.b32.xlu0 %v1043, 84
    %v1051 = vpop.permute.xlu0 %1050
    %1052 = vrot.lane.b32.xlu0 %v1045, 84
    %v1053 = vpop.permute.xlu0 %1052
    %vm1054 = vcmask 687104
    %v1055 = vsel %vm1054, %v1047, %v1049
    %v1056 = vsel %vm1054, %v1049, %v1051
    %v1057 = vsel %vm1054, %v1051, %v1053
    %v1060 = vsel %vm1054, %v1053, %v1047
    %v1062 = vcombine.low %v1055, %v1056
    %v1063 = vcombine.low %v1057, %v1060
    %v1065 = vunpack.c.l.s4 1983009808
    %v1066 = vunpack.c.0.s8 %v1065
    %v1067 = vlaneseq
    %v1068 = vshrl.u32 %v1067, 7
    %v1069 = vsub.s32 %v1066, %v1068
    %v1070 = vrot.slane %v1062, %v1069
    %v1072 = vunpack.c.l.s4 1983009808
    %v1073 = vunpack.c.0.s8 %v1072
    %v1074 = vlaneseq
    %v1075 = vshrl.u32 %v1074, 7
    %v1076 = vsub.s32 %v1073, %v1075
    %v1077 = vrot.slane %v1063, %v1076
    %v1078 = vcombine.low %v1070, %v1077
    %v1080 = vadd.f32 %v1027, %v1078
    %v1082 = vcombine.high %v659, %v659
    %v1084 = vunpack.c.l.s4 1983009808
    %v1085 = vunpack.c.0.s8 %v1084
    %v1086 = vlaneseq
    %v1087 = vshrl.u32 %v1086, 7
    %v1088 = vsub.s32 %v1085, %v1087
    %v1089 = vrot.slane %v659, %v1088
    %v1091 = vunpack.c.l.s4 1983009808
    %v1092 = vunpack.c.0.s8 %v1091
    %v1093 = vlaneseq
    %v1094 = vshrl.u32 %v1093, 7
    %v1095 = vsub.s32 %v1092, %v1094
    %v1096 = vrot.slane %v1082, %v1095
    %v1097 = vcombine.high %v1089, %v1089
    %v1098 = vcombine.high %v1096, %v1096
    %1099 = vrot.lane.b32.xlu0 %v1089, 82
    %v1100 = vpop.permute.xlu0 %1099
    %1101 = vrot.lane.b32.xlu0 %v1097, 82
    %v1102 = vpop.permute.xlu0 %1101
    %1103 = vrot.lane.b32.xlu0 %v1096, 82
    %v1104 = vpop.permute.xlu0 %1103
    %1105 = vrot.lane.b32.xlu0 %v1098, 82
    %v1106 = vpop.permute.xlu0 %1105
    %vm1107 = vcmask 670720
    %v1108 = vsel %vm1107, %v1100, %v1102
    %v1109 = vsel %vm1107, %v1102, %v1104
    %v1110 = vsel %vm1107, %v1104, %v1106
    %v1113 = vsel %vm1107, %v1106, %v1100
    %v1115 = vcombine.low %v1108, %v1109
    %v1116 = vcombine.low %v1110, %v1113
    %v1118 = vunpack.c.l.s4 1983009808
    %v1119 = vunpack.c.0.s8 %v1118
    %v1120 = vlaneseq
    %v1121 = vshrl.u32 %v1120, 7
    %v1122 = vsub.s32 %v1119, %v1121
    %v1123 = vrot.slane %v1115, %v1122
    %v1125 = vunpack.c.l.s4 1983009808
    %v1126 = vunpack.c.0.s8 %v1125
    %v1127 = vlaneseq
    %v1128 = vshrl.u32 %v1127, 7
    %v1129 = vsub.s32 %v1126, %v1128
    %v1130 = vrot.slane %v1116, %v1129
    %v1131 = vcombine.low %v1123, %v1130
    %v1133 = vadd.f32 %v1080, %v1131
    %v1134 = vmul.f32 %v1133, %v76
    %v1136 = vcombine.high %v1134, %v1134
    %v1138 = vunpack.c.l.s4 1983009808
    %v1139 = vunpack.c.0.s8 %v1138
    %v1140 = vlaneseq
    %v1141 = vshrl.u32 %v1140, 7
    %v1142 = vsub.s32 %v1139, %v1141
    %v1143 = vrot.slane %v1134, %v1142
    %v1145 = vunpack.c.l.s4 1983009808
    %v1146 = vunpack.c.0.s8 %v1145
    %v1147 = vlaneseq
    %v1148 = vshrl.u32 %v1147, 7
    %v1149 = vsub.s32 %v1146, %v1148
    %v1150 = vrot.slane %v1136, %v1149
    %v1151 = vcombine.high %v1143, %v1143
    %v1152 = vcombine.high %v1150, %v1150
    %v1157 = vsel %vm565, %v1143, 0.0
    %v1158 = vsel %vm565, %v1151, 0.0
    %v1159 = vadd.f32 %v1157, %v1158
    %v1160 = vsel %vm565, %v1150, 0.0
    %v1161 = vadd.f32 %v1159, %v1160
    %v1162 = vsel %vm565, %v1152, 0.0
    %v1163 = vadd.f32 %v1161, %v1162
    %1164 = vadd.xlane.f32.xlu0 %v1163
    %v1165 = vpop.xlane.xlu0 %1164
    %v1166 = vrot.slane %v1165, 4
    %v1167 = vadd.f32 %v1165, %v1166
    %v1168 = vrot.slane %v1167, 2
    %v1169 = vadd.f32 %v1167, %v1168
    %v1170 = vrot.slane %v1169, 1
    %v1171 = vadd.f32 %v1169, %v1170
    %s1172 = vtos %v1171
    %s1173 = smul.f32 %s1172, 0.001953125
    %v1174 = vstv %s1173
    %v1175 = vsub.f32 %v1133, %v1174
    %v1176 = vmul.f32 %v1175, %v76
    %v1177 = vmul.f32 %v1176, %v1176
    %v1179 = vcombine.high %v1177, %v1177
    %v1181 = vunpack.c.l.s4 1983009808
    %v1182 = vunpack.c.0.s8 %v1181
    %v1183 = vlaneseq
    %v1184 = vshrl.u32 %v1183, 7
    %v1185 = vsub.s32 %v1182, %v1184
    %v1186 = vrot.slane %v1177, %v1185
    %v1188 = vunpack.c.l.s4 1983009808
    %v1189 = vunpack.c.0.s8 %v1188
    %v1190 = vlaneseq
    %v1191 = vshrl.u32 %v1190, 7
    %v1192 = vsub.s32 %v1189, %v1191
    %v1193 = vrot.slane %v1179, %v1192
    %v1194 = vcombine.high %v1186, %v1186
    %v1195 = vcombine.high %v1193, %v1193
    %v1200 = vsel %vm565, %v1186, 0.0
    %v1201 = vsel %vm565, %v1194, 0.0
    %v1202 = vadd.f32 %v1200, %v1201
    %v1203 = vsel %vm565, %v1193, 0.0
    %v1204 = vadd.f32 %v1202, %v1203
    %v1205 = vsel %vm565, %v1195, 0.0
    %v1206 = vadd.f32 %v1204, %v1205
    %1207 = vadd.xlane.f32.xlu0 %v1206
    %v1208 = vpop.xlane.xlu0 %1207
    %v1209 = vrot.slane %v1208, 4
    %v1210 = vadd.f32 %v1208, %v1209
    %v1211 = vrot.slane %v1210, 2
    %v1212 = vadd.f32 %v1210, %v1211
    %v1213 = vrot.slane %v1212, 1
    %v1214 = vadd.f32 %v1212, %v1213
    %s1215 = vtos %v1214
    %s1216 = smul.f32 %s1215, 0.001953125
    %s1217 = sld [smem:[#allocation6 + $0x1]]
    %s1218 = sadd.f32 %s1216, 1e-05
    %v1219 = vstv %s1218
    %v1220 = vrsqrt.pop %v1219
    %s1221 = vtos %v1220
    %s1222 = smul.f32 %s1217, %s1221
    %v1223 = vstv %s1222
    %v1224 = vmul.f32 %v1176, %v1223
    %s1225 = sld [smem:[#allocation8 + $0x1]]
    %v1226 = vstv %s1225
    %v1227 = vadd.f32 %v1224, %v1226
    %v1228 = vmax.f32 %v1227, 0.0
    %v1229 = vmul.f32 %v1228, %v76
    %s1230 = scalar_lea.vmem [#allocation2], 16
    %1231 = vst [vmem:[%s1230] sm:$0xff] %v1229
    %s1232 = sld [smem:[#allocation9 + $0x2]]
    %v1233 = vstv %s1232
    %v1234 = vmul.f32 %v1233, %v1229
    %v1235 = vadd.f32 %v644, %v1234
    loop: start=0, step=1, limit=3
    $region53: #{msdnet_forward.1} parent=1 // loop_pre_header
      _
    $region54: #{msdnet_forward.1} parent=1 // loop_header
      %s1237 = sphi 0, %s1241
      %p1238 = scmp.ge.s32.totalorder %s1237, 3
      %v1242 = vphi 0.0, %v1260
      %v1243 = vphi 0.0, %v1265
      %v1244 = vphi 0.0, %v1270
      %v1245 = vphi 0.0, %v1275
      %v1246 = vphi 0.0, %v1280
      %v1247 = vphi 0.0, %v1285
      %v1248 = vphi 0.0, %v1290
      %v1249 = vphi 0.0, %v1295
      %v1250 = vphi 0.0, %v1300
    $region55: #{msdnet_forward.1} parent=1 // loop_header_branch
      %1240 = sbr.rel (%p1238) target = $region59
    $region56: #{msdnet_forward.1} parent=1 // loop_body
      %s1251 = smul.u32 %s1237, 4
      %s1252 = smul.addr %s1251, 2
      %s1253 = scalar_lea.vmem [#allocation2], %s1252
      %v1254 = vld [vmem:[%s1253] sm:$0xff]
      %s1255 = smul.u32 %s1237, 9
      %s1256 = sadd.s32 %s1255, 27
      %s1257 = sld [smem:[#allocation4 + %s1256]]
      %v1258 = vstv %s1257
      %v1259 = vmul.f32 %v1258, %v1254
      %v1260 = vadd.f32 %v1242, %v1259
      %s1261 = sadd.s32 %s1255, 28
      %s1262 = sld [smem:[#allocation4 + %s1261]]
      %v1263 = vstv %s1262
      %v1264 = vmul.f32 %v1263, %v1254
      %v1265 = vadd.f32 %v1243, %v1264
      %s1266 = sadd.s32 %s1255, 29
      %s1267 = sld [smem:[#allocation4 + %s1266]]
      %v1268 = vstv %s1267
      %v1269 = vmul.f32 %v1268, %v1254
      %v1270 = vadd.f32 %v1244, %v1269
      %s1271 = sadd.s32 %s1255, 30
      %s1272 = sld [smem:[#allocation4 + %s1271]]
      %v1273 = vstv %s1272
      %v1274 = vmul.f32 %v1273, %v1254
      %v1275 = vadd.f32 %v1245, %v1274
      %s1276 = sadd.s32 %s1255, 31
      %s1277 = sld [smem:[#allocation4 + %s1276]]
      %v1278 = vstv %s1277
      %v1279 = vmul.f32 %v1278, %v1254
      %v1280 = vadd.f32 %v1246, %v1279
      %s1281 = sadd.s32 %s1255, 32
      %s1282 = sld [smem:[#allocation4 + %s1281]]
      %v1283 = vstv %s1282
      %v1284 = vmul.f32 %v1283, %v1254
      %v1285 = vadd.f32 %v1247, %v1284
      %s1286 = sadd.s32 %s1255, 33
      %s1287 = sld [smem:[#allocation4 + %s1286]]
      %v1288 = vstv %s1287
      %v1289 = vmul.f32 %v1288, %v1254
      %v1290 = vadd.f32 %v1248, %v1289
      %s1291 = sadd.s32 %s1255, 34
      %s1292 = sld [smem:[#allocation4 + %s1291]]
      %v1293 = vstv %s1292
      %v1294 = vmul.f32 %v1293, %v1254
      %v1295 = vadd.f32 %v1249, %v1294
      %s1296 = sadd.s32 %s1255, 35
      %s1297 = sld [smem:[#allocation4 + %s1296]]
      %v1298 = vstv %s1297
      %v1299 = vmul.f32 %v1298, %v1254
      %v1300 = vadd.f32 %v1250, %v1299
    $region57: #{msdnet_forward.1} parent=1 // loop_footer
      %s1241 = sadd.s32 1, %s1237
    $region58: #{msdnet_forward.1} parent=1 // loop_footer_branch
      %1236 = sbr.rel target = $region54
    $region59: #{msdnet_forward.1} parent=1 // loop_exit
      _
    %v1302 = vcombine.high %v1242, %v1242
    %v1304 = vunpack.c.l.s4 1983009808
    %v1305 = vunpack.c.0.s8 %v1304
    %v1306 = vlaneseq
    %v1307 = vshrl.u32 %v1306, 7
    %v1308 = vsub.s32 %v1305, %v1307
    %v1309 = vrot.slane %v1242, %v1308
    %v1311 = vunpack.c.l.s4 1983009808
    %v1312 = vunpack.c.0.s8 %v1311
    %v1313 = vlaneseq
    %v1314 = vshrl.u32 %v1313, 7
    %v1315 = vsub.s32 %v1312, %v1314
    %v1316 = vrot.slane %v1302, %v1315
    %v1317 = vcombine.high %v1316, %v1316
    %1318 = vrot.lane.b32.xlu0 %v1317, 69
    %v1319 = vpop.permute.xlu0 %1318
    %v1321 = vcombine.high %v1309, %v1309
    %1322 = vrot.lane.b32.xlu0 %v1309, 69
    %v1323 = vpop.permute.xlu0 %1322
    %1324 = vrot.lane.b32.xlu0 %v1321, 69
    %v1325 = vpop.permute.xlu0 %1324
    %1326 = vrot.lane.b32.xlu0 %v1316, 69
    %v1327 = vpop.permute.xlu0 %1326
    %vm1328 = vcmask 564224
    %v1329 = vsel %vm1328, %v1323, %v1325
    %v1330 = vsel %vm1328, %v1325, %v1327
    %v1331 = vsel %vm1328, %v1327, %v1319
    %v1333 = vsel %vm1328, %v1319, %v1323
    %v1335 = vcombine.low %v1333, %v1329
    %v1336 = vcombine.low %v1330, %v1331
    %v1338 = vunpack.c.l.s4 1983009808
    %v1339 = vunpack.c.0.s8 %v1338
    %v1340 = vlaneseq
    %v1341 = vshrl.u32 %v1340, 7
    %v1342 = vsub.s32 %v1339, %v1341
    %v1343 = vrot.slane %v1335, %v1342
    %v1345 = vunpack.c.l.s4 1983009808
    %v1346 = vunpack.c.0.s8 %v1345
    %v1347 = vlaneseq
    %v1348 = vshrl.u32 %v1347, 7
    %v1349 = vsub.s32 %v1346, %v1348
    %v1350 = vrot.slane %v1336, %v1349
    %v1351 = vcombine.low %v1343, %v1350
    %v1353 = vadd.f32 %v1246, %v1351
    %v1355 = vcombine.high %v1243, %v1243
    %v1357 = vunpack.c.l.s4 1983009808
    %v1358 = vunpack.c.0.s8 %v1357
    %v1359 = vlaneseq
    %v1360 = vshrl.u32 %v1359, 7
    %v1361 = vsub.s32 %v1358, %v1360
    %v1362 = vrot.slane %v1243, %v1361
    %v1364 = vunpack.c.l.s4 1983009808
    %v1365 = vunpack.c.0.s8 %v1364
    %v1366 = vlaneseq
    %v1367 = vshrl.u32 %v1366, 7
    %v1368 = vsub.s32 %v1365, %v1367
    %v1369 = vrot.slane %v1355, %v1368
    %v1370 = vcombine.high %v1369, %v1369
    %1371 = vrot.lane.b32.xlu0 %v1370, 66
    %v1372 = vpop.permute.xlu0 %1371
    %v1374 = vcombine.high %v1362, %v1362
    %1375 = vrot.lane.b32.xlu0 %v1362, 66
    %v1376 = vpop.permute.xlu0 %1375
    %1377 = vrot.lane.b32.xlu0 %v1374, 66
    %v1378 = vpop.permute.xlu0 %1377
    %1379 = vrot.lane.b32.xlu0 %v1369, 66
    %v1380 = vpop.permute.xlu0 %1379
    %vm1381 = vcmask 539648
    %v1382 = vsel %vm1381, %v1376, %v1378
    %v1383 = vsel %vm1381, %v1378, %v1380
    %v1384 = vsel %vm1381, %v1380, %v1372
    %v1386 = vsel %vm1381, %v1372, %v1376
    %v1388 = vcombine.low %v1386, %v1382
    %v1389 = vcombine.low %v1383, %v1384
    %v1391 = vunpack.c.l.s4 1983009808
    %v1392 = vunpack.c.0.s8 %v1391
    %v1393 = vlaneseq
    %v1394 = vshrl.u32 %v1393, 7
    %v1395 = vsub.s32 %v1392, %v1394
    %v1396 = vrot.slane %v1388, %v1395
    %v1398 = vunpack.c.l.s4 1983009808
    %v1399 = vunpack.c.0.s8 %v1398
    %v1400 = vlaneseq
    %v1401 = vshrl.u32 %v1400, 7
    %v1402 = vsub.s32 %v1399, %v1401
    %v1403 = vrot.slane %v1389, %v1402
    %v1404 = vcombine.low %v1396, %v1403
    %v1406 = vadd.f32 %v1353, %v1404
    %v1408 = vcombine.high %v1244, %v1244
    %v1410 = vunpack.c.l.s4 1983009808
    %v1411 = vunpack.c.0.s8 %v1410
    %v1412 = vlaneseq
    %v1413 = vshrl.u32 %v1412, 7
    %v1414 = vsub.s32 %v1411, %v1413
    %v1415 = vrot.slane %v1244, %v1414
    %v1417 = vunpack.c.l.s4 1983009808
    %v1418 = vunpack.c.0.s8 %v1417
    %v1419 = vlaneseq
    %v1420 = vshrl.u32 %v1419, 7
    %v1421 = vsub.s32 %v1418, %v1420
    %v1422 = vrot.slane %v1408, %v1421
    %v1423 = vcombine.high %v1422, %v1422
    %1424 = vrot.lane.b32.xlu0 %v1423, 63
    %v1425 = vpop.permute.xlu0 %1424
    %v1427 = vcombine.high %v1415, %v1415
    %1428 = vrot.lane.b32.xlu0 %v1415, 63
    %v1429 = vpop.permute.xlu0 %1428
    %1430 = vrot.lane.b32.xlu0 %v1427, 63
    %v1431 = vpop.permute.xlu0 %1430
    %1432 = vrot.lane.b32.xlu0 %v1422, 63
    %v1433 = vpop.permute.xlu0 %1432
    %vm1434 = vcmask 515072
    %v1435 = vsel %vm1434, %v1429, %v1431
    %v1436 = vsel %vm1434, %v1431, %v1433
    %v1437 = vsel %vm1434, %v1433, %v1425
    %v1439 = vsel %vm1434, %v1425, %v1429
    %v1441 = vcombine.low %v1439, %v1435
    %v1442 = vcombine.low %v1436, %v1437
    %v1444 = vunpack.c.l.s4 1983009808
    %v1445 = vunpack.c.0.s8 %v1444
    %v1446 = vlaneseq
    %v1447 = vshrl.u32 %v1446, 7
    %v1448 = vsub.s32 %v1445, %v1447
    %v1449 = vrot.slane %v1441, %v1448
    %v1451 = vunpack.c.l.s4 1983009808
    %v1452 = vunpack.c.0.s8 %v1451
    %v1453 = vlaneseq
    %v1454 = vshrl.u32 %v1453, 7
    %v1455 = vsub.s32 %v1452, %v1454
    %v1456 = vrot.slane %v1442, %v1455
    %v1457 = vcombine.low %v1449, %v1456
    %v1459 = vadd.f32 %v1406, %v1457
    %v1461 = vcombine.high %v1245, %v1245
    %v1463 = vunpack.c.l.s4 1983009808
    %v1464 = vunpack.c.0.s8 %v1463
    %v1465 = vlaneseq
    %v1466 = vshrl.u32 %v1465, 7
    %v1467 = vsub.s32 %v1464, %v1466
    %v1468 = vrot.slane %v1245, %v1467
    %v1470 = vunpack.c.l.s4 1983009808
    %v1471 = vunpack.c.0.s8 %v1470
    %v1472 = vlaneseq
    %v1473 = vshrl.u32 %v1472, 7
    %v1474 = vsub.s32 %v1471, %v1473
    %v1475 = vrot.slane %v1461, %v1474
    %v1476 = vcombine.high %v1475, %v1475
    %1477 = vrot.lane.b32.xlu0 %v1476, 3
    %v1478 = vpop.permute.xlu0 %1477
    %v1480 = vcombine.high %v1468, %v1468
    %1481 = vrot.lane.b32.xlu0 %v1468, 3
    %v1482 = vpop.permute.xlu0 %1481
    %1483 = vrot.lane.b32.xlu0 %v1480, 3
    %v1484 = vpop.permute.xlu0 %1483
    %1485 = vrot.lane.b32.xlu0 %v1475, 3
    %v1486 = vpop.permute.xlu0 %1485
    %vm1487 = vcmask 23552
    %v1488 = vsel %vm1487, %v1482, %v1484
    %v1489 = vsel %vm1487, %v1484, %v1486
    %v1490 = vsel %vm1487, %v1486, %v1478
    %v1492 = vsel %vm1487, %v1478, %v1482
    %v1494 = vcombine.low %v1492, %v1488
    %v1495 = vcombine.low %v1489, %v1490
    %v1497 = vunpack.c.l.s4 1983009808
    %v1498 = vunpack.c.0.s8 %v1497
    %v1499 = vlaneseq
    %v1500 = vshrl.u32 %v1499, 7
    %v1501 = vsub.s32 %v1498, %v1500
    %v1502 = vrot.slane %v1494, %v1501
    %v1504 = vunpack.c.l.s4 1983009808
    %v1505 = vunpack.c.0.s8 %v1504
    %v1506 = vlaneseq
    %v1507 = vshrl.u32 %v1506, 7
    %v1508 = vsub.s32 %v1505, %v1507
    %v1509 = vrot.slane %v1495, %v1508
    %v1510 = vcombine.low %v1502, %v1509
    %v1512 = vadd.f32 %v1459, %v1510
    %v1514 = vcombine.high %v1247, %v1247
    %v1516 = vunpack.c.l.s4 1983009808
    %v1517 = vunpack.c.0.s8 %v1516
    %v1518 = vlaneseq
    %v1519 = vshrl.u32 %v1518, 7
    %v1520 = vsub.s32 %v1517, %v1519
    %v1521 = vrot.slane %v1247, %v1520
    %v1523 = vunpack.c.l.s4 1983009808
    %v1524 = vunpack.c.0.s8 %v1523
    %v1525 = vlaneseq
    %v1526 = vshrl.u32 %v1525, 7
    %v1527 = vsub.s32 %v1524, %v1526
    %v1528 = vrot.slane %v1514, %v1527
    %v1529 = vcombine.high %v1521, %v1521
    %v1530 = vcombine.high %v1528, %v1528
    %1531 = vrot.lane.b32.xlu0 %v1521, 125
    %v1532 = vpop.permute.xlu0 %1531
    %1533 = vrot.lane.b32.xlu0 %v1529, 125
    %v1534 = vpop.permute.xlu0 %1533
    %1535 = vrot.lane.b32.xlu0 %v1528, 125
    %v1536 = vpop.permute.xlu0 %1535
    %1537 = vrot.lane.b32.xlu0 %v1530, 125
    %v1538 = vpop.permute.xlu0 %1537
    %vm1539 = vcmask 1022976
    %v1540 = vsel %vm1539, %v1532, %v1534
    %v1541 = vsel %vm1539, %v1534, %v1536
    %v1542 = vsel %vm1539, %v1536, %v1538
    %v1545 = vsel %vm1539, %v1538, %v1532
    %v1547 = vcombine.low %v1540, %v1541
    %v1548 = vcombine.low %v1542, %v1545
    %v1550 = vunpack.c.l.s4 1983009808
    %v1551 = vunpack.c.0.s8 %v1550
    %v1552 = vlaneseq
    %v1553 = vshrl.u32 %v1552, 7
    %v1554 = vsub.s32 %v1551, %v1553
    %v1555 = vrot.slane %v1547, %v1554
    %v1557 = vunpack.c.l.s4 1983009808
    %v1558 = vunpack.c.0.s8 %v1557
    %v1559 = vlaneseq
    %v1560 = vshrl.u32 %v1559, 7
    %v1561 = vsub.s32 %v1558, %v1560
    %v1562 = vrot.slane %v1548, %v1561
    %v1563 = vcombine.low %v1555, %v1562
    %v1565 = vadd.f32 %v1512, %v1563
    %v1567 = vcombine.high %v1248, %v1248
    %v1569 = vunpack.c.l.s4 1983009808
    %v1570 = vunpack.c.0.s8 %v1569
    %v1571 = vlaneseq
    %v1572 = vshrl.u32 %v1571, 7
    %v1573 = vsub.s32 %v1570, %v1572
    %v1574 = vrot.slane %v1248, %v1573
    %v1576 = vunpack.c.l.s4 1983009808
    %v1577 = vunpack.c.0.s8 %v1576
    %v1578 = vlaneseq
    %v1579 = vshrl.u32 %v1578, 7
    %v1580 = vsub.s32 %v1577, %v1579
    %v1581 = vrot.slane %v1567, %v1580
    %v1582 = vcombine.high %v1574, %v1574
    %v1583 = vcombine.high %v1581, %v1581
    %1584 = vrot.lane.b32.xlu0 %v1574, 65
    %v1585 = vpop.permute.xlu0 %1584
    %1586 = vrot.lane.b32.xlu0 %v1582, 65
    %v1587 = vpop.permute.xlu0 %1586
    %1588 = vrot.lane.b32.xlu0 %v1581, 65
    %v1589 = vpop.permute.xlu0 %1588
    %1590 = vrot.lane.b32.xlu0 %v1583, 65
    %v1591 = vpop.permute.xlu0 %1590
    %vm1592 = vcmask 531456
    %v1593 = vsel %vm1592, %v1585, %v1587
    %v1594 = vsel %vm1592, %v1587, %v1589
    %v1595 = vsel %vm1592, %v1589, %v1591
    %v1598 = vsel %vm1592, %v1591, %v1585
    %v1600 = vcombine.low %v1593, %v1594
    %v1601 = vcombine.low %v1595, %v1598
    %v1603 = vunpack.c.l.s4 1983009808
    %v1604 = vunpack.c.0.s8 %v1603
    %v1605 = vlaneseq
    %v1606 = vshrl.u32 %v1605, 7
    %v1607 = vsub.s32 %v1604, %v1606
    %v1608 = vrot.slane %v1600, %v1607
    %v1610 = vunpack.c.l.s4 1983009808
    %v1611 = vunpack.c.0.s8 %v1610
    %v1612 = vlaneseq
    %v1613 = vshrl.u32 %v1612, 7
    %v1614 = vsub.s32 %v1611, %v1613
    %v1615 = vrot.slane %v1601, %v1614
    %v1616 = vcombine.low %v1608, %v1615
    %v1618 = vadd.f32 %v1565, %v1616
    %v1620 = vcombine.high %v1249, %v1249
    %v1622 = vunpack.c.l.s4 1983009808
    %v1623 = vunpack.c.0.s8 %v1622
    %v1624 = vlaneseq
    %v1625 = vshrl.u32 %v1624, 7
    %v1626 = vsub.s32 %v1623, %v1625
    %v1627 = vrot.slane %v1249, %v1626
    %v1629 = vunpack.c.l.s4 1983009808
    %v1630 = vunpack.c.0.s8 %v1629
    %v1631 = vlaneseq
    %v1632 = vshrl.u32 %v1631, 7
    %v1633 = vsub.s32 %v1630, %v1632
    %v1634 = vrot.slane %v1620, %v1633
    %v1635 = vcombine.high %v1627, %v1627
    %v1636 = vcombine.high %v1634, %v1634
    %1637 = vrot.lane.b32.xlu0 %v1627, 62
    %v1638 = vpop.permute.xlu0 %1637
    %1639 = vrot.lane.b32.xlu0 %v1635, 62
    %v1640 = vpop.permute.xlu0 %1639
    %1641 = vrot.lane.b32.xlu0 %v1634, 62
    %v1642 = vpop.permute.xlu0 %1641
    %1643 = vrot.lane.b32.xlu0 %v1636, 62
    %v1644 = vpop.permute.xlu0 %1643
    %vm1645 = vcmask 506880
    %v1646 = vsel %vm1645, %v1638, %v1640
    %v1647 = vsel %vm1645, %v1640, %v1642
    %v1648 = vsel %vm1645, %v1642, %v1644
    %v1651 = vsel %vm1645, %v1644, %v1638
    %v1653 = vcombine.low %v1646, %v1647
    %v1654 = vcombine.low %v1648, %v1651
    %v1656 = vunpack.c.l.s4 1983009808
    %v1657 = vunpack.c.0.s8 %v1656
    %v1658 = vlaneseq
    %v1659 = vshrl.u32 %v1658, 7
    %v1660 = vsub.s32 %v1657, %v1659
    %v1661 = vrot.slane %v1653, %v1660
    %v1663 = vunpack.c.l.s4 1983009808
    %v1664 = vunpack.c.0.s8 %v1663
    %v1665 = vlaneseq
    %v1666 = vshrl.u32 %v1665, 7
    %v1667 = vsub.s32 %v1664, %v1666
    %v1668 = vrot.slane %v1654, %v1667
    %v1669 = vcombine.low %v1661, %v1668
    %v1671 = vadd.f32 %v1618, %v1669
    %v1673 = vcombine.high %v1250, %v1250
    %v1675 = vunpack.c.l.s4 1983009808
    %v1676 = vunpack.c.0.s8 %v1675
    %v1677 = vlaneseq
    %v1678 = vshrl.u32 %v1677, 7
    %v1679 = vsub.s32 %v1676, %v1678
    %v1680 = vrot.slane %v1250, %v1679
    %v1682 = vunpack.c.l.s4 1983009808
    %v1683 = vunpack.c.0.s8 %v1682
    %v1684 = vlaneseq
    %v1685 = vshrl.u32 %v1684, 7
    %v1686 = vsub.s32 %v1683, %v1685
    %v1687 = vrot.slane %v1673, %v1686
    %v1688 = vcombine.high %v1680, %v1680
    %v1689 = vcombine.high %v1687, %v1687
    %1690 = vrot.lane.b32.xlu0 %v1680, 59
    %v1691 = vpop.permute.xlu0 %1690
    %1692 = vrot.lane.b32.xlu0 %v1688, 59
    %v1693 = vpop.permute.xlu0 %1692
    %1694 = vrot.lane.b32.xlu0 %v1687, 59
    %v1695 = vpop.permute.xlu0 %1694
    %1696 = vrot.lane.b32.xlu0 %v1689, 59
    %v1697 = vpop.permute.xlu0 %1696
    %vm1698 = vcmask 482304
    %v1699 = vsel %vm1698, %v1691, %v1693
    %v1700 = vsel %vm1698, %v1693, %v1695
    %v1701 = vsel %vm1698, %v1695, %v1697
    %v1704 = vsel %vm1698, %v1697, %v1691
    %v1706 = vcombine.low %v1699, %v1700
    %v1707 = vcombine.low %v1701, %v1704
    %v1709 = vunpack.c.l.s4 1983009808
    %v1710 = vunpack.c.0.s8 %v1709
    %v1711 = vlaneseq
    %v1712 = vshrl.u32 %v1711, 7
    %v1713 = vsub.s32 %v1710, %v1712
    %v1714 = vrot.slane %v1706, %v1713
    %v1716 = vunpack.c.l.s4 1983009808
    %v1717 = vunpack.c.0.s8 %v1716
    %v1718 = vlaneseq
    %v1719 = vshrl.u32 %v1718, 7
    %v1720 = vsub.s32 %v1717, %v1719
    %v1721 = vrot.slane %v1707, %v1720
    %v1722 = vcombine.low %v1714, %v1721
    %v1724 = vadd.f32 %v1671, %v1722
    %v1725 = vmul.f32 %v1724, %v76
    %v1727 = vcombine.high %v1725, %v1725
    %v1729 = vunpack.c.l.s4 1983009808
    %v1730 = vunpack.c.0.s8 %v1729
    %v1731 = vlaneseq
    %v1732 = vshrl.u32 %v1731, 7
    %v1733 = vsub.s32 %v1730, %v1732
    %v1734 = vrot.slane %v1725, %v1733
    %v1736 = vunpack.c.l.s4 1983009808
    %v1737 = vunpack.c.0.s8 %v1736
    %v1738 = vlaneseq
    %v1739 = vshrl.u32 %v1738, 7
    %v1740 = vsub.s32 %v1737, %v1739
    %v1741 = vrot.slane %v1727, %v1740
    %v1742 = vcombine.high %v1734, %v1734
    %v1743 = vcombine.high %v1741, %v1741
    %v1748 = vsel %vm565, %v1734, 0.0
    %v1749 = vsel %vm565, %v1742, 0.0
    %v1750 = vadd.f32 %v1748, %v1749
    %v1751 = vsel %vm565, %v1741, 0.0
    %v1752 = vadd.f32 %v1750, %v1751
    %v1753 = vsel %vm565, %v1743, 0.0
    %v1754 = vadd.f32 %v1752, %v1753
    %1755 = vadd.xlane.f32.xlu0 %v1754
    %v1756 = vpop.xlane.xlu0 %1755
    %v1757 = vrot.slane %v1756, 4
    %v1758 = vadd.f32 %v1756, %v1757
    %v1759 = vrot.slane %v1758, 2
    %v1760 = vadd.f32 %v1758, %v1759
    %v1761 = vrot.slane %v1760, 1
    %v1762 = vadd.f32 %v1760, %v1761
    %s1763 = vtos %v1762
    %s1764 = smul.f32 %s1763, 0.001953125
    %v1765 = vstv %s1764
    %v1766 = vsub.f32 %v1724, %v1765
    %v1767 = vmul.f32 %v1766, %v76
    %v1768 = vmul.f32 %v1767, %v1767
    %v1770 = vcombine.high %v1768, %v1768
    %v1772 = vunpack.c.l.s4 1983009808
    %v1773 = vunpack.c.0.s8 %v1772
    %v1774 = vlaneseq
    %v1775 = vshrl.u32 %v1774, 7
    %v1776 = vsub.s32 %v1773, %v1775
    %v1777 = vrot.slane %v1768, %v1776
    %v1779 = vunpack.c.l.s4 1983009808
    %v1780 = vunpack.c.0.s8 %v1779
    %v1781 = vlaneseq
    %v1782 = vshrl.u32 %v1781, 7
    %v1783 = vsub.s32 %v1780, %v1782
    %v1784 = vrot.slane %v1770, %v1783
    %v1785 = vcombine.high %v1777, %v1777
    %v1786 = vcombine.high %v1784, %v1784
    %v1791 = vsel %vm565, %v1777, 0.0
    %v1792 = vsel %vm565, %v1785, 0.0
    %v1793 = vadd.f32 %v1791, %v1792
    %v1794 = vsel %vm565, %v1784, 0.0
    %v1795 = vadd.f32 %v1793, %v1794
    %v1796 = vsel %vm565, %v1786, 0.0
    %v1797 = vadd.f32 %v1795, %v1796
    %1798 = vadd.xlane.f32.xlu0 %v1797
    %v1799 = vpop.xlane.xlu0 %1798
    %v1800 = vrot.slane %v1799, 4
    %v1801 = vadd.f32 %v1799, %v1800
    %v1802 = vrot.slane %v1801, 2
    %v1803 = vadd.f32 %v1801, %v1802
    %v1804 = vrot.slane %v1803, 1
    %v1805 = vadd.f32 %v1803, %v1804
    %s1806 = vtos %v1805
    %s1807 = smul.f32 %s1806, 0.001953125
    %s1808 = sld [smem:[#allocation6 + $0x2]]
    %s1809 = sadd.f32 %s1807, 1e-05
    %v1810 = vstv %s1809
    %v1811 = vrsqrt.pop %v1810
    %s1812 = vtos %v1811
    %s1813 = smul.f32 %s1808, %s1812
    %v1814 = vstv %s1813
    %v1815 = vmul.f32 %v1767, %v1814
    %s1816 = sld [smem:[#allocation8 + $0x2]]
    %v1817 = vstv %s1816
    %v1818 = vadd.f32 %v1815, %v1817
    %v1819 = vmax.f32 %v1818, 0.0
    %v1820 = vmul.f32 %v1819, %v76
    %s1821 = scalar_lea.vmem [#allocation2], 24
    %1822 = vst [vmem:[%s1821] sm:$0xff] %v1820
    %s1823 = sld [smem:[#allocation9 + $0x3]]
    %v1824 = vstv %s1823
    %v1825 = vmul.f32 %v1824, %v1820
    %v1826 = vadd.f32 %v1235, %v1825
    loop: start=0, step=1, limit=4
    $region60: #{msdnet_forward.1} parent=1 // loop_pre_header
      _
    $region61: #{msdnet_forward.1} parent=1 // loop_header
      %s1828 = sphi 0, %s1832
      %p1829 = scmp.ge.s32.totalorder %s1828, 4
      %v1833 = vphi 0.0, %v1851
      %v1834 = vphi 0.0, %v1856
      %v1835 = vphi 0.0, %v1861
      %v1836 = vphi 0.0, %v1866
      %v1837 = vphi 0.0, %v1871
      %v1838 = vphi 0.0, %v1876
      %v1839 = vphi 0.0, %v1881
      %v1840 = vphi 0.0, %v1886
      %v1841 = vphi 0.0, %v1891
    $region62: #{msdnet_forward.1} parent=1 // loop_header_branch
      %1831 = sbr.rel (%p1829) target = $region66
    $region63: #{msdnet_forward.1} parent=1 // loop_body
      %s1842 = smul.u32 %s1828, 4
      %s1843 = smul.addr %s1842, 2
      %s1844 = scalar_lea.vmem [#allocation2], %s1843
      %v1845 = vld [vmem:[%s1844] sm:$0xff]
      %s1846 = smul.u32 %s1828, 9
      %s1847 = sadd.s32 %s1846, 54
      %s1848 = sld [smem:[#allocation4 + %s1847]]
      %v1849 = vstv %s1848
      %v1850 = vmul.f32 %v1849, %v1845
      %v1851 = vadd.f32 %v1833, %v1850
      %s1852 = sadd.s32 %s1846, 55
      %s1853 = sld [smem:[#allocation4 + %s1852]]
      %v1854 = vstv %s1853
      %v1855 = vmul.f32 %v1854, %v1845
      %v1856 = vadd.f32 %v1834, %v1855
      %s1857 = sadd.s32 %s1846, 56
      %s1858 = sld [smem:[#allocation4 + %s1857]]
      %v1859 = vstv %s1858
      %v1860 = vmul.f32 %v1859, %v1845
      %v1861 = vadd.f32 %v1835, %v1860
      %s1862 = sadd.s32 %s1846, 57
      %s1863 = sld [smem:[#allocation4 + %s1862]]
      %v1864 = vstv %s1863
      %v1865 = vmul.f32 %v1864, %v1845
      %v1866 = vadd.f32 %v1836, %v1865
      %s1867 = sadd.s32 %s1846, 58
      %s1868 = sld [smem:[#allocation4 + %s1867]]
      %v1869 = vstv %s1868
      %v1870 = vmul.f32 %v1869, %v1845
      %v1871 = vadd.f32 %v1837, %v1870
      %s1872 = sadd.s32 %s1846, 59
      %s1873 = sld [smem:[#allocation4 + %s1872]]
      %v1874 = vstv %s1873
      %v1875 = vmul.f32 %v1874, %v1845
      %v1876 = vadd.f32 %v1838, %v1875
      %s1877 = sadd.s32 %s1846, 60
      %s1878 = sld [smem:[#allocation4 + %s1877]]
      %v1879 = vstv %s1878
      %v1880 = vmul.f32 %v1879, %v1845
      %v1881 = vadd.f32 %v1839, %v1880
      %s1882 = sadd.s32 %s1846, 61
      %s1883 = sld [smem:[#allocation4 + %s1882]]
      %v1884 = vstv %s1883
      %v1885 = vmul.f32 %v1884, %v1845
      %v1886 = vadd.f32 %v1840, %v1885
      %s1887 = sadd.s32 %s1846, 62
      %s1888 = sld [smem:[#allocation4 + %s1887]]
      %v1889 = vstv %s1888
      %v1890 = vmul.f32 %v1889, %v1845
      %v1891 = vadd.f32 %v1841, %v1890
    $region64: #{msdnet_forward.1} parent=1 // loop_footer
      %s1832 = sadd.s32 1, %s1828
    $region65: #{msdnet_forward.1} parent=1 // loop_footer_branch
      %1827 = sbr.rel target = $region61
    $region66: #{msdnet_forward.1} parent=1 // loop_exit
      _
    %v1893 = vcombine.high %v1833, %v1833
    %v1895 = vunpack.c.l.s4 1983009808
    %v1896 = vunpack.c.0.s8 %v1895
    %v1897 = vlaneseq
    %v1898 = vshrl.u32 %v1897, 7
    %v1899 = vsub.s32 %v1896, %v1898
    %v1900 = vrot.slane %v1833, %v1899
    %v1902 = vunpack.c.l.s4 1983009808
    %v1903 = vunpack.c.0.s8 %v1902
    %v1904 = vlaneseq
    %v1905 = vshrl.u32 %v1904, 7
    %v1906 = vsub.s32 %v1903, %v1905
    %v1907 = vrot.slane %v1893, %v1906
    %v1908 = vcombine.high %v1907, %v1907
    %1909 = vrot.lane.b32.xlu0 %v1908, 23
    %v1910 = vpop.permute.xlu0 %1909
    %v1912 = vcombine.high %v1900, %v1900
    %1913 = vrot.lane.b32.xlu0 %v1900, 23
    %v1914 = vpop.permute.xlu0 %1913
    %1915 = vrot.lane.b32.xlu0 %v1912, 23
    %v1916 = vpop.permute.xlu0 %1915
    %1917 = vrot.lane.b32.xlu0 %v1907, 23
    %v1918 = vpop.permute.xlu0 %1917
    %v1919 = vsel %vm145, %v1914, %v1916
    %v1920 = vsel %vm145, %v1916, %v1918
    %v1921 = vsel %vm145, %v1918, %v1910
    %v1923 = vsel %vm145, %v1910, %v1914
    %v1925 = vcombine.low %v1923, %v1919
    %v1926 = vcombine.low %v1920, %v1921
    %v1928 = vunpack.c.l.s4 1983009808
    %v1929 = vunpack.c.0.s8 %v1928
    %v1930 = vlaneseq
    %v1931 = vshrl.u32 %v1930, 7
    %v1932 = vsub.s32 %v1929, %v1931
    %v1933 = vrot.slane %v1925, %v1932
    %v1935 = vunpack.c.l.s4 1983009808
    %v1936 = vunpack.c.0.s8 %v1935
    %v1937 = vlaneseq
    %v1938 = vshrl.u32 %v1937, 7
    %v1939 = vsub.s32 %v1936, %v1938
    %v1940 = vrot.slane %v1926, %v1939
    %v1941 = vcombine.low %v1933, %v1940
    %v1943 = vadd.f32 %v1837, %v1941
    %v1945 = vcombine.high %v1834, %v1834
    %v1947 = vunpack.c.l.s4 1983009808
    %v1948 = vunpack.c.0.s8 %v1947
    %v1949 = vlaneseq
    %v1950 = vshrl.u32 %v1949, 7
    %v1951 = vsub.s32 %v1948, %v1950
    %v1952 = vrot.slane %v1834, %v1951
    %v1954 = vunpack.c.l.s4 1983009808
    %v1955 = vunpack.c.0.s8 %v1954
    %v1956 = vlaneseq
    %v1957 = vshrl.u32 %v1956, 7
    %v1958 = vsub.s32 %v1955, %v1957
    %v1959 = vrot.slane %v1945, %v1958
    %v1960 = vcombine.high %v1959, %v1959
    %1961 = vrot.lane.b32.xlu0 %v1960, 22
    %v1962 = vpop.permute.xlu0 %1961
    %v1964 = vcombine.high %v1952, %v1952
    %1965 = vrot.lane.b32.xlu0 %v1952, 22
    %v1966 = vpop.permute.xlu0 %1965
    %1967 = vrot.lane.b32.xlu0 %v1964, 22
    %v1968 = vpop.permute.xlu0 %1967
    %1969 = vrot.lane.b32.xlu0 %v1959, 22
    %v1970 = vpop.permute.xlu0 %1969
    %v1971 = vsel %vm198, %v1966, %v1968
    %v1972 = vsel %vm198, %v1968, %v1970
    %v1973 = vsel %vm198, %v1970, %v1962
    %v1975 = vsel %vm198, %v1962, %v1966
    %v1977 = vcombine.low %v1975, %v1971
    %v1978 = vcombine.low %v1972, %v1973
    %v1980 = vunpack.c.l.s4 1983009808
    %v1981 = vunpack.c.0.s8 %v1980
    %v1982 = vlaneseq
    %v1983 = vshrl.u32 %v1982, 7
    %v1984 = vsub.s32 %v1981, %v1983
    %v1985 = vrot.slane %v1977, %v1984
    %v1987 = vunpack.c.l.s4 1983009808
    %v1988 = vunpack.c.0.s8 %v1987
    %v1989 = vlaneseq
    %v1990 = vshrl.u32 %v1989, 7
    %v1991 = vsub.s32 %v1988, %v1990
    %v1992 = vrot.slane %v1978, %v1991
    %v1993 = vcombine.low %v1985, %v1992
    %v1995 = vadd.f32 %v1943, %v1993
    %v1997 = vcombine.high %v1835, %v1835
    %v1999 = vunpack.c.l.s4 1983009808
    %v2000 = vunpack.c.0.s8 %v1999
    %v2001 = vlaneseq
    %v2002 = vshrl.u32 %v2001, 7
    %v2003 = vsub.s32 %v2000, %v2002
    %v2004 = vrot.slane %v1835, %v2003
    %v2006 = vunpack.c.l.s4 1983009808
    %v2007 = vunpack.c.0.s8 %v2006
    %v2008 = vlaneseq
    %v2009 = vshrl.u32 %v2008, 7
    %v2010 = vsub.s32 %v2007, %v2009
    %v2011 = vrot.slane %v1997, %v2010
    %v2012 = vcombine.high %v2011, %v2011
    %2013 = vrot.lane.b32.xlu0 %v2012, 21
    %v2014 = vpop.permute.xlu0 %2013
    %v2016 = vcombine.high %v2004, %v2004
    %2017 = vrot.lane.b32.xlu0 %v2004, 21
    %v2018 = vpop.permute.xlu0 %2017
    %2019 = vrot.lane.b32.xlu0 %v2016, 21
    %v2020 = vpop.permute.xlu0 %2019
    %2021 = vrot.lane.b32.xlu0 %v2011, 21
    %v2022 = vpop.permute.xlu0 %2021
    %v2023 = vsel %vm251, %v2018, %v2020
    %v2024 = vsel %vm251, %v2020, %v2022
    %v2025 = vsel %vm251, %v2022, %v2014
    %v2027 = vsel %vm251, %v2014, %v2018
    %v2029 = vcombine.low %v2027, %v2023
    %v2030 = vcombine.low %v2024, %v2025
    %v2032 = vunpack.c.l.s4 1983009808
    %v2033 = vunpack.c.0.s8 %v2032
    %v2034 = vlaneseq
    %v2035 = vshrl.u32 %v2034, 7
    %v2036 = vsub.s32 %v2033, %v2035
    %v2037 = vrot.slane %v2029, %v2036
    %v2039 = vunpack.c.l.s4 1983009808
    %v2040 = vunpack.c.0.s8 %v2039
    %v2041 = vlaneseq
    %v2042 = vshrl.u32 %v2041, 7
    %v2043 = vsub.s32 %v2040, %v2042
    %v2044 = vrot.slane %v2030, %v2043
    %v2045 = vcombine.low %v2037, %v2044
    %v2047 = vadd.f32 %v1995, %v2045
    %v2049 = vcombine.high %v1836, %v1836
    %v2051 = vunpack.c.l.s4 1983009808
    %v2052 = vunpack.c.0.s8 %v2051
    %v2053 = vlaneseq
    %v2054 = vshrl.u32 %v2053, 7
    %v2055 = vsub.s32 %v2052, %v2054
    %v2056 = vrot.slane %v1836, %v2055
    %v2058 = vunpack.c.l.s4 1983009808
    %v2059 = vunpack.c.0.s8 %v2058
    %v2060 = vlaneseq
    %v2061 = vshrl.u32 %v2060, 7
    %v2062 = vsub.s32 %v2059, %v2061
    %v2063 = vrot.slane %v2049, %v2062
    %v2064 = vcombine.high %v2063, %v2063
    %2065 = vrot.lane.b32.xlu0 %v2064, 1
    %v2066 = vpop.permute.xlu0 %2065
    %v2068 = vcombine.high %v2056, %v2056
    %2069 = vrot.lane.b32.xlu0 %v2056, 1
    %v2070 = vpop.permute.xlu0 %2069
    %2071 = vrot.lane.b32.xlu0 %v2068, 1
    %v2072 = vpop.permute.xlu0 %2071
    %2073 = vrot.lane.b32.xlu0 %v2063, 1
    %v2074 = vpop.permute.xlu0 %2073
    %v2075 = vsel %vm304, %v2070, %v2072
    %v2076 = vsel %vm304, %v2072, %v2074
    %v2077 = vsel %vm304, %v2074, %v2066
    %v2079 = vsel %vm304, %v2066, %v2070
    %v2081 = vcombine.low %v2079, %v2075
    %v2082 = vcombine.low %v2076, %v2077
    %v2084 = vunpack.c.l.s4 1983009808
    %v2085 = vunpack.c.0.s8 %v2084
    %v2086 = vlaneseq
    %v2087 = vshrl.u32 %v2086, 7
    %v2088 = vsub.s32 %v2085, %v2087
    %v2089 = vrot.slane %v2081, %v2088
    %v2091 = vunpack.c.l.s4 1983009808
    %v2092 = vunpack.c.0.s8 %v2091
    %v2093 = vlaneseq
    %v2094 = vshrl.u32 %v2093, 7
    %v2095 = vsub.s32 %v2092, %v2094
    %v2096 = vrot.slane %v2082, %v2095
    %v2097 = vcombine.low %v2089, %v2096
    %v2099 = vadd.f32 %v2047, %v2097
    %v2101 = vcombine.high %v1838, %v1838
    %v2103 = vunpack.c.l.s4 1983009808
    %v2104 = vunpack.c.0.s8 %v2103
    %v2105 = vlaneseq
    %v2106 = vshrl.u32 %v2105, 7
    %v2107 = vsub.s32 %v2104, %v2106
    %v2108 = vrot.slane %v1838, %v2107
    %v2110 = vunpack.c.l.s4 1983009808
    %v2111 = vunpack.c.0.s8 %v2110
    %v2112 = vlaneseq
    %v2113 = vshrl.u32 %v2112, 7
    %v2114 = vsub.s32 %v2111, %v2113
    %v2115 = vrot.slane %v2101, %v2114
    %v2116 = vcombine.high %v2108, %v2108
    %v2117 = vcombine.high %v2115, %v2115
    %2118 = vrot.lane.b32.xlu0 %v2108, 127
    %v2119 = vpop.permute.xlu0 %2118
    %2120 = vrot.lane.b32.xlu0 %v2116, 127
    %v2121 = vpop.permute.xlu0 %2120
    %2122 = vrot.lane.b32.xlu0 %v2115, 127
    %v2123 = vpop.permute.xlu0 %2122
    %2124 = vrot.lane.b32.xlu0 %v2117, 127
    %v2125 = vpop.permute.xlu0 %2124
    %v2126 = vsel %vm356, %v2119, %v2121
    %v2127 = vsel %vm356, %v2121, %v2123
    %v2128 = vsel %vm356, %v2123, %v2125
    %v2131 = vsel %vm356, %v2125, %v2119
    %v2133 = vcombine.low %v2126, %v2127
    %v2134 = vcombine.low %v2128, %v2131
    %v2136 = vunpack.c.l.s4 1983009808
    %v2137 = vunpack.c.0.s8 %v2136
    %v2138 = vlaneseq
    %v2139 = vshrl.u32 %v2138, 7
    %v2140 = vsub.s32 %v2137, %v2139
    %v2141 = vrot.slane %v2133, %v2140
    %v2143 = vunpack.c.l.s4 1983009808
    %v2144 = vunpack.c.0.s8 %v2143
    %v2145 = vlaneseq
    %v2146 = vshrl.u32 %v2145, 7
    %v2147 = vsub.s32 %v2144, %v2146
    %v2148 = vrot.slane %v2134, %v2147
    %v2149 = vcombine.low %v2141, %v2148
    %v2151 = vadd.f32 %v2099, %v2149
    %v2153 = vcombine.high %v1839, %v1839
    %v2155 = vunpack.c.l.s4 1983009808
    %v2156 = vunpack.c.0.s8 %v2155
    %v2157 = vlaneseq
    %v2158 = vshrl.u32 %v2157, 7
    %v2159 = vsub.s32 %v2156, %v2158
    %v2160 = vrot.slane %v1839, %v2159
    %v2162 = vunpack.c.l.s4 1983009808
    %v2163 = vunpack.c.0.s8 %v2162
    %v2164 = vlaneseq
    %v2165 = vshrl.u32 %v2164, 7
    %v2166 = vsub.s32 %v2163, %v2165
    %v2167 = vrot.slane %v2153, %v2166
    %v2168 = vcombine.high %v2160, %v2160
    %v2169 = vcombine.high %v2167, %v2167
    %2170 = vrot.lane.b32.xlu0 %v2160, 107
    %v2171 = vpop.permute.xlu0 %2170
    %2172 = vrot.lane.b32.xlu0 %v2168, 107
    %v2173 = vpop.permute.xlu0 %2172
    %2174 = vrot.lane.b32.xlu0 %v2167, 107
    %v2175 = vpop.permute.xlu0 %2174
    %2176 = vrot.lane.b32.xlu0 %v2169, 107
    %v2177 = vpop.permute.xlu0 %2176
    %v2178 = vsel %vm409, %v2171, %v2173
    %v2179 = vsel %vm409, %v2173, %v2175
    %v2180 = vsel %vm409, %v2175, %v2177
    %v2183 = vsel %vm409, %v2177, %v2171
    %v2185 = vcombine.low %v2178, %v2179
    %v2186 = vcombine.low %v2180, %v2183
    %v2188 = vunpack.c.l.s4 1983009808
    %v2189 = vunpack.c.0.s8 %v2188
    %v2190 = vlaneseq
    %v2191 = vshrl.u32 %v2190, 7
    %v2192 = vsub.s32 %v2189, %v2191
    %v2193 = vrot.slane %v2185, %v2192
    %v2195 = vunpack.c.l.s4 1983009808
    %v2196 = vunpack.c.0.s8 %v2195
    %v2197 = vlaneseq
    %v2198 = vshrl.u32 %v2197, 7
    %v2199 = vsub.s32 %v2196, %v2198
    %v2200 = vrot.slane %v2186, %v2199
    %v2201 = vcombine.low %v2193, %v2200
    %v2203 = vadd.f32 %v2151, %v2201
    %v2205 = vcombine.high %v1840, %v1840
    %v2207 = vunpack.c.l.s4 1983009808
    %v2208 = vunpack.c.0.s8 %v2207
    %v2209 = vlaneseq
    %v2210 = vshrl.u32 %v2209, 7
    %v2211 = vsub.s32 %v2208, %v2210
    %v2212 = vrot.slane %v1840, %v2211
    %v2214 = vunpack.c.l.s4 1983009808
    %v2215 = vunpack.c.0.s8 %v2214
    %v2216 = vlaneseq
    %v2217 = vshrl.u32 %v2216, 7
    %v2218 = vsub.s32 %v2215, %v2217
    %v2219 = vrot.slane %v2205, %v2218
    %v2220 = vcombine.high %v2212, %v2212
    %v2221 = vcombine.high %v2219, %v2219
    %2222 = vrot.lane.b32.xlu0 %v2212, 106
    %v2223 = vpop.permute.xlu0 %2222
    %2224 = vrot.lane.b32.xlu0 %v2220, 106
    %v2225 = vpop.permute.xlu0 %2224
    %2226 = vrot.lane.b32.xlu0 %v2219, 106
    %v2227 = vpop.permute.xlu0 %2226
    %2228 = vrot.lane.b32.xlu0 %v2221, 106
    %v2229 = vpop.permute.xlu0 %2228
    %v2230 = vsel %vm462, %v2223, %v2225
    %v2231 = vsel %vm462, %v2225, %v2227
    %v2232 = vsel %vm462, %v2227, %v2229
    %v2235 = vsel %vm462, %v2229, %v2223
    %v2237 = vcombine.low %v2230, %v2231
    %v2238 = vcombine.low %v2232, %v2235
    %v2240 = vunpack.c.l.s4 1983009808
    %v2241 = vunpack.c.0.s8 %v2240
    %v2242 = vlaneseq
    %v2243 = vshrl.u32 %v2242, 7
    %v2244 = vsub.s32 %v2241, %v2243
    %v2245 = vrot.slane %v2237, %v2244
    %v2247 = vunpack.c.l.s4 1983009808
    %v2248 = vunpack.c.0.s8 %v2247
    %v2249 = vlaneseq
    %v2250 = vshrl.u32 %v2249, 7
    %v2251 = vsub.s32 %v2248, %v2250
    %v2252 = vrot.slane %v2238, %v2251
    %v2253 = vcombine.low %v2245, %v2252
    %v2255 = vadd.f32 %v2203, %v2253
    %v2257 = vcombine.high %v1841, %v1841
    %v2259 = vunpack.c.l.s4 1983009808
    %v2260 = vunpack.c.0.s8 %v2259
    %v2261 = vlaneseq
    %v2262 = vshrl.u32 %v2261, 7
    %v2263 = vsub.s32 %v2260, %v2262
    %v2264 = vrot.slane %v1841, %v2263
    %v2266 = vunpack.c.l.s4 1983009808
    %v2267 = vunpack.c.0.s8 %v2266
    %v2268 = vlaneseq
    %v2269 = vshrl.u32 %v2268, 7
    %v2270 = vsub.s32 %v2267, %v2269
    %v2271 = vrot.slane %v2257, %v2270
    %v2272 = vcombine.high %v2264, %v2264
    %v2273 = vcombine.high %v2271, %v2271
    %2274 = vrot.lane.b32.xlu0 %v2264, 105
    %v2275 = vpop.permute.xlu0 %2274
    %2276 = vrot.lane.b32.xlu0 %v2272, 105
    %v2277 = vpop.permute.xlu0 %2276
    %2278 = vrot.lane.b32.xlu0 %v2271, 105
    %v2279 = vpop.permute.xlu0 %2278
    %2280 = vrot.lane.b32.xlu0 %v2273, 105
    %v2281 = vpop.permute.xlu0 %2280
    %v2282 = vsel %vm515, %v2275, %v2277
    %v2283 = vsel %vm515, %v2277, %v2279
    %v2284 = vsel %vm515, %v2279, %v2281
    %v2287 = vsel %vm515, %v2281, %v2275
    %v2289 = vcombine.low %v2282, %v2283
    %v2290 = vcombine.low %v2284, %v2287
    %v2292 = vunpack.c.l.s4 1983009808
    %v2293 = vunpack.c.0.s8 %v2292
    %v2294 = vlaneseq
    %v2295 = vshrl.u32 %v2294, 7
    %v2296 = vsub.s32 %v2293, %v2295
    %v2297 = vrot.slane %v2289, %v2296
    %v2299 = vunpack.c.l.s4 1983009808
    %v2300 = vunpack.c.0.s8 %v2299
    %v2301 = vlaneseq
    %v2302 = vshrl.u32 %v2301, 7
    %v2303 = vsub.s32 %v2300, %v2302
    %v2304 = vrot.slane %v2290, %v2303
    %v2305 = vcombine.low %v2297, %v2304
    %v2307 = vadd.f32 %v2255, %v2305
    %v2308 = vmul.f32 %v2307, %v76
    %v2310 = vcombine.high %v2308, %v2308
    %v2312 = vunpack.c.l.s4 1983009808
    %v2313 = vunpack.c.0.s8 %v2312
    %v2314 = vlaneseq
    %v2315 = vshrl.u32 %v2314, 7
    %v2316 = vsub.s32 %v2313, %v2315
    %v2317 = vrot.slane %v2308, %v2316
    %v2319 = vunpack.c.l.s4 1983009808
    %v2320 = vunpack.c.0.s8 %v2319
    %v2321 = vlaneseq
    %v2322 = vshrl.u32 %v2321, 7
    %v2323 = vsub.s32 %v2320, %v2322
    %v2324 = vrot.slane %v2310, %v2323
    %v2325 = vcombine.high %v2317, %v2317
    %v2326 = vcombine.high %v2324, %v2324
    %v2331 = vsel %vm565, %v2317, 0.0
    %v2332 = vsel %vm565, %v2325, 0.0
    %v2333 = vadd.f32 %v2331, %v2332
    %v2334 = vsel %vm565, %v2324, 0.0
    %v2335 = vadd.f32 %v2333, %v2334
    %v2336 = vsel %vm565, %v2326, 0.0
    %v2337 = vadd.f32 %v2335, %v2336
    %2338 = vadd.xlane.f32.xlu0 %v2337
    %v2339 = vpop.xlane.xlu0 %2338
    %v2340 = vrot.slane %v2339, 4
    %v2341 = vadd.f32 %v2339, %v2340
    %v2342 = vrot.slane %v2341, 2
    %v2343 = vadd.f32 %v2341, %v2342
    %v2344 = vrot.slane %v2343, 1
    %v2345 = vadd.f32 %v2343, %v2344
    %s2346 = vtos %v2345
    %s2347 = smul.f32 %s2346, 0.001953125
    %v2348 = vstv %s2347
    %v2349 = vsub.f32 %v2307, %v2348
    %v2350 = vmul.f32 %v2349, %v76
    %v2351 = vmul.f32 %v2350, %v2350
    %v2353 = vcombine.high %v2351, %v2351
    %v2355 = vunpack.c.l.s4 1983009808
    %v2356 = vunpack.c.0.s8 %v2355
    %v2357 = vlaneseq
    %v2358 = vshrl.u32 %v2357, 7
    %v2359 = vsub.s32 %v2356, %v2358
    %v2360 = vrot.slane %v2351, %v2359
    %v2362 = vunpack.c.l.s4 1983009808
    %v2363 = vunpack.c.0.s8 %v2362
    %v2364 = vlaneseq
    %v2365 = vshrl.u32 %v2364, 7
    %v2366 = vsub.s32 %v2363, %v2365
    %v2367 = vrot.slane %v2353, %v2366
    %v2368 = vcombine.high %v2360, %v2360
    %v2369 = vcombine.high %v2367, %v2367
    %v2374 = vsel %vm565, %v2360, 0.0
    %v2375 = vsel %vm565, %v2368, 0.0
    %v2376 = vadd.f32 %v2374, %v2375
    %v2377 = vsel %vm565, %v2367, 0.0
    %v2378 = vadd.f32 %v2376, %v2377
    %v2379 = vsel %vm565, %v2369, 0.0
    %v2380 = vadd.f32 %v2378, %v2379
    %2381 = vadd.xlane.f32.xlu0 %v2380
    %v2382 = vpop.xlane.xlu0 %2381
    %v2383 = vrot.slane %v2382, 4
    %v2384 = vadd.f32 %v2382, %v2383
    %v2385 = vrot.slane %v2384, 2
    %v2386 = vadd.f32 %v2384, %v2385
    %v2387 = vrot.slane %v2386, 1
    %v2388 = vadd.f32 %v2386, %v2387
    %s2389 = vtos %v2388
    %s2390 = smul.f32 %s2389, 0.001953125
    %s2391 = sld [smem:[#allocation6 + $0x3]]
    %s2392 = sadd.f32 %s2390, 1e-05
    %v2393 = vstv %s2392
    %v2394 = vrsqrt.pop %v2393
    %s2395 = vtos %v2394
    %s2396 = smul.f32 %s2391, %s2395
    %v2397 = vstv %s2396
    %v2398 = vmul.f32 %v2350, %v2397
    %s2399 = sld [smem:[#allocation8 + $0x3]]
    %v2400 = vstv %s2399
    %v2401 = vadd.f32 %v2398, %v2400
    %v2402 = vmax.f32 %v2401, 0.0
    %v2403 = vmul.f32 %v2402, %v76
    %s2404 = scalar_lea.vmem [#allocation2], 32
    %2405 = vst [vmem:[%s2404] sm:$0xff] %v2403
    %s2406 = sld [smem:[#allocation9 + $0x4]]
    %v2407 = vstv %s2406
    %v2408 = vmul.f32 %v2407, %v2403
    %v2409 = vadd.f32 %v1826, %v2408
    loop: start=0, step=1, limit=5
    $region67: #{msdnet_forward.1} parent=1 // loop_pre_header
      _
    $region68: #{msdnet_forward.1} parent=1 // loop_header
      %s2411 = sphi 0, %s2415
      %p2412 = scmp.ge.s32.totalorder %s2411, 5
      %v2416 = vphi 0.0, %v2434
      %v2417 = vphi 0.0, %v2439
      %v2418 = vphi 0.0, %v2444
      %v2419 = vphi 0.0, %v2449
      %v2420 = vphi 0.0, %v2454
      %v2421 = vphi 0.0, %v2459
      %v2422 = vphi 0.0, %v2464
      %v2423 = vphi 0.0, %v2469
      %v2424 = vphi 0.0, %v2474
    $region69: #{msdnet_forward.1} parent=1 // loop_header_branch
      %2414 = sbr.rel (%p2412) target = $region73
    $region70: #{msdnet_forward.1} parent=1 // loop_body
      %s2425 = smul.u32 %s2411, 4
      %s2426 = smul.addr %s2425, 2
      %s2427 = scalar_lea.vmem [#allocation2], %s2426
      %v2428 = vld [vmem:[%s2427] sm:$0xff]
      %s2429 = smul.u32 %s2411, 9
      %s2430 = sadd.s32 %s2429, 90
      %s2431 = sld [smem:[#allocation4 + %s2430]]
      %v2432 = vstv %s2431
      %v2433 = vmul.f32 %v2432, %v2428
      %v2434 = vadd.f32 %v2416, %v2433
      %s2435 = sadd.s32 %s2429, 91
      %s2436 = sld [smem:[#allocation4 + %s2435]]
      %v2437 = vstv %s2436
      %v2438 = vmul.f32 %v2437, %v2428
      %v2439 = vadd.f32 %v2417, %v2438
      %s2440 = sadd.s32 %s2429, 92
      %s2441 = sld [smem:[#allocation4 + %s2440]]
      %v2442 = vstv %s2441
      %v2443 = vmul.f32 %v2442, %v2428
      %v2444 = vadd.f32 %v2418, %v2443
      %s2445 = sadd.s32 %s2429, 93
      %s2446 = sld [smem:[#allocation4 + %s2445]]
      %v2447 = vstv %s2446
      %v2448 = vmul.f32 %v2447, %v2428
      %v2449 = vadd.f32 %v2419, %v2448
      %s2450 = sadd.s32 %s2429, 94
      %s2451 = sld [smem:[#allocation4 + %s2450]]
      %v2452 = vstv %s2451
      %v2453 = vmul.f32 %v2452, %v2428
      %v2454 = vadd.f32 %v2420, %v2453
      %s2455 = sadd.s32 %s2429, 95
      %s2456 = sld [smem:[#allocation4 + %s2455]]
      %v2457 = vstv %s2456
      %v2458 = vmul.f32 %v2457, %v2428
      %v2459 = vadd.f32 %v2421, %v2458
      %s2460 = sadd.s32 %s2429, 96
      %s2461 = sld [smem:[#allocation4 + %s2460]]
      %v2462 = vstv %s2461
      %v2463 = vmul.f32 %v2462, %v2428
      %v2464 = vadd.f32 %v2422, %v2463
      %s2465 = sadd.s32 %s2429, 97
      %s2466 = sld [smem:[#allocation4 + %s2465]]
      %v2467 = vstv %s2466
      %v2468 = vmul.f32 %v2467, %v2428
      %v2469 = vadd.f32 %v2423, %v2468
      %s2470 = sadd.s32 %s2429, 98
      %s2471 = sld [smem:[#allocation4 + %s2470]]
      %v2472 = vstv %s2471
      %v2473 = vmul.f32 %v2472, %v2428
      %v2474 = vadd.f32 %v2424, %v2473
    $region71: #{msdnet_forward.1} parent=1 // loop_footer
      %s2415 = sadd.s32 1, %s2411
    $region72: #{msdnet_forward.1} parent=1 // loop_footer_branch
      %2410 = sbr.rel target = $region68
    $region73: #{msdnet_forward.1} parent=1 // loop_exit
      _
    %v2476 = vcombine.high %v2416, %v2416
    %v2478 = vunpack.c.l.s4 1983009808
    %v2479 = vunpack.c.0.s8 %v2478
    %v2480 = vlaneseq
    %v2481 = vshrl.u32 %v2480, 7
    %v2482 = vsub.s32 %v2479, %v2481
    %v2483 = vrot.slane %v2416, %v2482
    %v2485 = vunpack.c.l.s4 1983009808
    %v2486 = vunpack.c.0.s8 %v2485
    %v2487 = vlaneseq
    %v2488 = vshrl.u32 %v2487, 7
    %v2489 = vsub.s32 %v2486, %v2488
    %v2490 = vrot.slane %v2476, %v2489
    %v2491 = vcombine.high %v2490, %v2490
    %2492 = vrot.lane.b32.xlu0 %v2491, 46
    %v2493 = vpop.permute.xlu0 %2492
    %v2495 = vcombine.high %v2483, %v2483
    %2496 = vrot.lane.b32.xlu0 %v2483, 46
    %v2497 = vpop.permute.xlu0 %2496
    %2498 = vrot.lane.b32.xlu0 %v2495, 46
    %v2499 = vpop.permute.xlu0 %2498
    %2500 = vrot.lane.b32.xlu0 %v2490, 46
    %v2501 = vpop.permute.xlu0 %2500
    %v2502 = vsel %vm737, %v2497, %v2499
    %v2503 = vsel %vm737, %v2499, %v2501
    %v2504 = vsel %vm737, %v2501, %v2493
    %v2506 = vsel %vm737, %v2493, %v2497
    %v2508 = vcombine.low %v2506, %v2502
    %v2509 = vcombine.low %v2503, %v2504
    %v2511 = vunpack.c.l.s4 1983009808
    %v2512 = vunpack.c.0.s8 %v2511
    %v2513 = vlaneseq
    %v2514 = vshrl.u32 %v2513, 7
    %v2515 = vsub.s32 %v2512, %v2514
    %v2516 = vrot.slane %v2508, %v2515
    %v2518 = vunpack.c.l.s4 1983009808
    %v2519 = vunpack.c.0.s8 %v2518
    %v2520 = vlaneseq
    %v2521 = vshrl.u32 %v2520, 7
    %v2522 = vsub.s32 %v2519, %v2521
    %v2523 = vrot.slane %v2509, %v2522
    %v2524 = vcombine.low %v2516, %v2523
    %v2526 = vadd.f32 %v2420, %v2524
    %v2528 = vcombine.high %v2417, %v2417
    %v2530 = vunpack.c.l.s4 1983009808
    %v2531 = vunpack.c.0.s8 %v2530
    %v2532 = vlaneseq
    %v2533 = vshrl.u32 %v2532, 7
    %v2534 = vsub.s32 %v2531, %v2533
    %v2535 = vrot.slane %v2417, %v2534
    %v2537 = vunpack.c.l.s4 1983009808
    %v2538 = vunpack.c.0.s8 %v2537
    %v2539 = vlaneseq
    %v2540 = vshrl.u32 %v2539, 7
    %v2541 = vsub.s32 %v2538, %v2540
    %v2542 = vrot.slane %v2528, %v2541
    %v2543 = vcombine.high %v2542, %v2542
    %2544 = vrot.lane.b32.xlu0 %v2543, 44
    %v2545 = vpop.permute.xlu0 %2544
    %v2547 = vcombine.high %v2535, %v2535
    %2548 = vrot.lane.b32.xlu0 %v2535, 44
    %v2549 = vpop.permute.xlu0 %2548
    %2550 = vrot.lane.b32.xlu0 %v2547, 44
    %v2551 = vpop.permute.xlu0 %2550
    %2552 = vrot.lane.b32.xlu0 %v2542, 44
    %v2553 = vpop.permute.xlu0 %2552
    %v2554 = vsel %vm790, %v2549, %v2551
    %v2555 = vsel %vm790, %v2551, %v2553
    %v2556 = vsel %vm790, %v2553, %v2545
    %v2558 = vsel %vm790, %v2545, %v2549
    %v2560 = vcombine.low %v2558, %v2554
    %v2561 = vcombine.low %v2555, %v2556
    %v2563 = vunpack.c.l.s4 1983009808
    %v2564 = vunpack.c.0.s8 %v2563
    %v2565 = vlaneseq
    %v2566 = vshrl.u32 %v2565, 7
    %v2567 = vsub.s32 %v2564, %v2566
    %v2568 = vrot.slane %v2560, %v2567
    %v2570 = vunpack.c.l.s4 1983009808
    %v2571 = vunpack.c.0.s8 %v2570
    %v2572 = vlaneseq
    %v2573 = vshrl.u32 %v2572, 7
    %v2574 = vsub.s32 %v2571, %v2573
    %v2575 = vrot.slane %v2561, %v2574
    %v2576 = vcombine.low %v2568, %v2575
    %v2578 = vadd.f32 %v2526, %v2576
    %v2580 = vcombine.high %v2418, %v2418
    %v2582 = vunpack.c.l.s4 1983009808
    %v2583 = vunpack.c.0.s8 %v2582
    %v2584 = vlaneseq
    %v2585 = vshrl.u32 %v2584, 7
    %v2586 = vsub.s32 %v2583, %v2585
    %v2587 = vrot.slane %v2418, %v2586
    %v2589 = vunpack.c.l.s4 1983009808
    %v2590 = vunpack.c.0.s8 %v2589
    %v2591 = vlaneseq
    %v2592 = vshrl.u32 %v2591, 7
    %v2593 = vsub.s32 %v2590, %v2592
    %v2594 = vrot.slane %v2580, %v2593
    %v2595 = vcombine.high %v2594, %v2594
    %2596 = vrot.lane.b32.xlu0 %v2595, 42
    %v2597 = vpop.permute.xlu0 %2596
    %v2599 = vcombine.high %v2587, %v2587
    %2600 = vrot.lane.b32.xlu0 %v2587, 42
    %v2601 = vpop.permute.xlu0 %2600
    %2602 = vrot.lane.b32.xlu0 %v2599, 42
    %v2603 = vpop.permute.xlu0 %2602
    %2604 = vrot.lane.b32.xlu0 %v2594, 42
    %v2605 = vpop.permute.xlu0 %2604
    %v2606 = vsel %vm843, %v2601, %v2603
    %v2607 = vsel %vm843, %v2603, %v2605
    %v2608 = vsel %vm843, %v2605, %v2597
    %v2610 = vsel %vm843, %v2597, %v2601
    %v2612 = vcombine.low %v2610, %v2606
    %v2613 = vcombine.low %v2607, %v2608
    %v2615 = vunpack.c.l.s4 1983009808
    %v2616 = vunpack.c.0.s8 %v2615
    %v2617 = vlaneseq
    %v2618 = vshrl.u32 %v2617, 7
    %v2619 = vsub.s32 %v2616, %v2618
    %v2620 = vrot.slane %v2612, %v2619
    %v2622 = vunpack.c.l.s4 1983009808
    %v2623 = vunpack.c.0.s8 %v2622
    %v2624 = vlaneseq
    %v2625 = vshrl.u32 %v2624, 7
    %v2626 = vsub.s32 %v2623, %v2625
    %v2627 = vrot.slane %v2613, %v2626
    %v2628 = vcombine.low %v2620, %v2627
    %v2630 = vadd.f32 %v2578, %v2628
    %v2632 = vcombine.high %v2419, %v2419
    %v2634 = vunpack.c.l.s4 1983009808
    %v2635 = vunpack.c.0.s8 %v2634
    %v2636 = vlaneseq
    %v2637 = vshrl.u32 %v2636, 7
    %v2638 = vsub.s32 %v2635, %v2637
    %v2639 = vrot.slane %v2419, %v2638
    %v2641 = vunpack.c.l.s4 1983009808
    %v2642 = vunpack.c.0.s8 %v2641
    %v2643 = vlaneseq
    %v2644 = vshrl.u32 %v2643, 7
    %v2645 = vsub.s32 %v2642, %v2644
    %v2646 = vrot.slane %v2632, %v2645
    %v2647 = vcombine.high %v2646, %v2646
    %2648 = vrot.lane.b32.xlu0 %v2647, 2
    %v2649 = vpop.permute.xlu0 %2648
    %v2651 = vcombine.high %v2639, %v2639
    %2652 = vrot.lane.b32.xlu0 %v2639, 2
    %v2653 = vpop.permute.xlu0 %2652
    %2654 = vrot.lane.b32.xlu0 %v2651, 2
    %v2655 = vpop.permute.xlu0 %2654
    %2656 = vrot.lane.b32.xlu0 %v2646, 2
    %v2657 = vpop.permute.xlu0 %2656
    %v2658 = vsel %vm896, %v2653, %v2655
    %v2659 = vsel %vm896, %v2655, %v2657
    %v2660 = vsel %vm896, %v2657, %v2649
    %v2662 = vsel %vm896, %v2649, %v2653
    %v2664 = vcombine.low %v2662, %v2658
    %v2665 = vcombine.low %v2659, %v2660
    %v2667 = vunpack.c.l.s4 1983009808
    %v2668 = vunpack.c.0.s8 %v2667
    %v2669 = vlaneseq
    %v2670 = vshrl.u32 %v2669, 7
    %v2671 = vsub.s32 %v2668, %v2670
    %v2672 = vrot.slane %v2664, %v2671
    %v2674 = vunpack.c.l.s4 1983009808
    %v2675 = vunpack.c.0.s8 %v2674
    %v2676 = vlaneseq
    %v2677 = vshrl.u32 %v2676, 7
    %v2678 = vsub.s32 %v2675, %v2677
    %v2679 = vrot.slane %v2665, %v2678
    %v2680 = vcombine.low %v2672, %v2679
    %v2682 = vadd.f32 %v2630, %v2680
    %v2684 = vcombine.high %v2421, %v2421
    %v2686 = vunpack.c.l.s4 1983009808
    %v2687 = vunpack.c.0.s8 %v2686
    %v2688 = vlaneseq
    %v2689 = vshrl.u32 %v2688, 7
    %v2690 = vsub.s32 %v2687, %v2689
    %v2691 = vrot.slane %v2421, %v2690
    %v2693 = vunpack.c.l.s4 1983009808
    %v2694 = vunpack.c.0.s8 %v2693
    %v2695 = vlaneseq
    %v2696 = vshrl.u32 %v2695, 7
    %v2697 = vsub.s32 %v2694, %v2696
    %v2698 = vrot.slane %v2684, %v2697
    %v2699 = vcombine.high %v2691, %v2691
    %v2700 = vcombine.high %v2698, %v2698
    %2701 = vrot.lane.b32.xlu0 %v2691, 126
    %v2702 = vpop.permute.xlu0 %2701
    %2703 = vrot.lane.b32.xlu0 %v2699, 126
    %v2704 = vpop.permute.xlu0 %2703
    %2705 = vrot.lane.b32.xlu0 %v2698, 126
    %v2706 = vpop.permute.xlu0 %2705
    %2707 = vrot.lane.b32.xlu0 %v2700, 126
    %v2708 = vpop.permute.xlu0 %2707
    %v2709 = vsel %vm948, %v2702, %v2704
    %v2710 = vsel %vm948, %v2704, %v2706
    %v2711 = vsel %vm948, %v2706, %v2708
    %v2714 = vsel %vm948, %v2708, %v2702
    %v2716 = vcombine.low %v2709, %v2710
    %v2717 = vcombine.low %v2711, %v2714
    %v2719 = vunpack.c.l.s4 1983009808
    %v2720 = vunpack.c.0.s8 %v2719
    %v2721 = vlaneseq
    %v2722 = vshrl.u32 %v2721, 7
    %v2723 = vsub.s32 %v2720, %v2722
    %v2724 = vrot.slane %v2716, %v2723
    %v2726 = vunpack.c.l.s4 1983009808
    %v2727 = vunpack.c.0.s8 %v2726
    %v2728 = vlaneseq
    %v2729 = vshrl.u32 %v2728, 7
    %v2730 = vsub.s32 %v2727, %v2729
    %v2731 = vrot.slane %v2717, %v2730
    %v2732 = vcombine.low %v2724, %v2731
    %v2734 = vadd.f32 %v2682, %v2732
    %v2736 = vcombine.high %v2422, %v2422
    %v2738 = vunpack.c.l.s4 1983009808
    %v2739 = vunpack.c.0.s8 %v2738
    %v2740 = vlaneseq
    %v2741 = vshrl.u32 %v2740, 7
    %v2742 = vsub.s32 %v2739, %v2741
    %v2743 = vrot.slane %v2422, %v2742
    %v2745 = vunpack.c.l.s4 1983009808
    %v2746 = vunpack.c.0.s8 %v2745
    %v2747 = vlaneseq
    %v2748 = vshrl.u32 %v2747, 7
    %v2749 = vsub.s32 %v2746, %v2748
    %v2750 = vrot.slane %v2736, %v2749
    %v2751 = vcombine.high %v2743, %v2743
    %v2752 = vcombine.high %v2750, %v2750
    %2753 = vrot.lane.b32.xlu0 %v2743, 86
    %v2754 = vpop.permute.xlu0 %2753
    %2755 = vrot.lane.b32.xlu0 %v2751, 86
    %v2756 = vpop.permute.xlu0 %2755
    %2757 = vrot.lane.b32.xlu0 %v2750, 86
    %v2758 = vpop.permute.xlu0 %2757
    %2759 = vrot.lane.b32.xlu0 %v2752, 86
    %v2760 = vpop.permute.xlu0 %2759
    %v2761 = vsel %vm1001, %v2754, %v2756
    %v2762 = vsel %vm1001, %v2756, %v2758
    %v2763 = vsel %vm1001, %v2758, %v2760
    %v2766 = vsel %vm1001, %v2760, %v2754
    %v2768 = vcombine.low %v2761, %v2762
    %v2769 = vcombine.low %v2763, %v2766
    %v2771 = vunpack.c.l.s4 1983009808
    %v2772 = vunpack.c.0.s8 %v2771
    %v2773 = vlaneseq
    %v2774 = vshrl.u32 %v2773, 7
    %v2775 = vsub.s32 %v2772, %v2774
    %v2776 = vrot.slane %v2768, %v2775
    %v2778 = vunpack.c.l.s4 1983009808
    %v2779 = vunpack.c.0.s8 %v2778
    %v2780 = vlaneseq
    %v2781 = vshrl.u32 %v2780, 7
    %v2782 = vsub.s32 %v2779, %v2781
    %v2783 = vrot.slane %v2769, %v2782
    %v2784 = vcombine.low %v2776, %v2783
    %v2786 = vadd.f32 %v2734, %v2784
    %v2788 = vcombine.high %v2423, %v2423
    %v2790 = vunpack.c.l.s4 1983009808
    %v2791 = vunpack.c.0.s8 %v2790
    %v2792 = vlaneseq
    %v2793 = vshrl.u32 %v2792, 7
    %v2794 = vsub.s32 %v2791, %v2793
    %v2795 = vrot.slane %v2423, %v2794
    %v2797 = vunpack.c.l.s4 1983009808
    %v2798 = vunpack.c.0.s8 %v2797
    %v2799 = vlaneseq
    %v2800 = vshrl.u32 %v2799, 7
    %v2801 = vsub.s32 %v2798, %v2800
    %v2802 = vrot.slane %v2788, %v2801
    %v2803 = vcombine.high %v2795, %v2795
    %v2804 = vcombine.high %v2802, %v2802
    %2805 = vrot.lane.b32.xlu0 %v2795, 84
    %v2806 = vpop.permute.xlu0 %2805
    %2807 = vrot.lane.b32.xlu0 %v2803, 84
    %v2808 = vpop.permute.xlu0 %2807
    %2809 = vrot.lane.b32.xlu0 %v2802, 84
    %v2810 = vpop.permute.xlu0 %2809
    %2811 = vrot.lane.b32.xlu0 %v2804, 84
    %v2812 = vpop.permute.xlu0 %2811
    %v2813 = vsel %vm1054, %v2806, %v2808
    %v2814 = vsel %vm1054, %v2808, %v2810
    %v2815 = vsel %vm1054, %v2810, %v2812
    %v2818 = vsel %vm1054, %v2812, %v2806
    %v2820 = vcombine.low %v2813, %v2814
    %v2821 = vcombine.low %v2815, %v2818
    %v2823 = vunpack.c.l.s4 1983009808
    %v2824 = vunpack.c.0.s8 %v2823
    %v2825 = vlaneseq
    %v2826 = vshrl.u32 %v2825, 7
    %v2827 = vsub.s32 %v2824, %v2826
    %v2828 = vrot.slane %v2820, %v2827
    %v2830 = vunpack.c.l.s4 1983009808
    %v2831 = vunpack.c.0.s8 %v2830
    %v2832 = vlaneseq
    %v2833 = vshrl.u32 %v2832, 7
    %v2834 = vsub.s32 %v2831, %v2833
    %v2835 = vrot.slane %v2821, %v2834
    %v2836 = vcombine.low %v2828, %v2835
    %v2838 = vadd.f32 %v2786, %v2836
    %v2840 = vcombine.high %v2424, %v2424
    %v2842 = vunpack.c.l.s4 1983009808
    %v2843 = vunpack.c.0.s8 %v2842
    %v2844 = vlaneseq
    %v2845 = vshrl.u32 %v2844, 7
    %v2846 = vsub.s32 %v2843, %v2845
    %v2847 = vrot.slane %v2424, %v2846
    %v2849 = vunpack.c.l.s4 1983009808
    %v2850 = vunpack.c.0.s8 %v2849
    %v2851 = vlaneseq
    %v2852 = vshrl.u32 %v2851, 7
    %v2853 = vsub.s32 %v2850, %v2852
    %v2854 = vrot.slane %v2840, %v2853
    %v2855 = vcombine.high %v2847, %v2847
    %v2856 = vcombine.high %v2854, %v2854
    %2857 = vrot.lane.b32.xlu0 %v2847, 82
    %v2858 = vpop.permute.xlu0 %2857
    %2859 = vrot.lane.b32.xlu0 %v2855, 82
    %v2860 = vpop.permute.xlu0 %2859
    %2861 = vrot.lane.b32.xlu0 %v2854, 82
    %v2862 = vpop.permute.xlu0 %2861
    %2863 = vrot.lane.b32.xlu0 %v2856, 82
    %v2864 = vpop.permute.xlu0 %2863
    %v2865 = vsel %vm1107, %v2858, %v2860
    %v2866 = vsel %vm1107, %v2860, %v2862
    %v2867 = vsel %vm1107, %v2862, %v2864
    %v2870 = vsel %vm1107, %v2864, %v2858
    %v2872 = vcombine.low %v2865, %v2866
    %v2873 = vcombine.low %v2867, %v2870
    %v2875 = vunpack.c.l.s4 1983009808
    %v2876 = vunpack.c.0.s8 %v2875
    %v2877 = vlaneseq
    %v2878 = vshrl.u32 %v2877, 7
    %v2879 = vsub.s32 %v2876, %v2878
    %v2880 = vrot.slane %v2872, %v2879
    %v2882 = vunpack.c.l.s4 1983009808
    %v2883 = vunpack.c.0.s8 %v2882
    %v2884 = vlaneseq
    %v2885 = vshrl.u32 %v2884, 7
    %v2886 = vsub.s32 %v2883, %v2885
    %v2887 = vrot.slane %v2873, %v2886
    %v2888 = vcombine.low %v2880, %v2887
    %v2890 = vadd.f32 %v2838, %v2888
    %v2891 = vmul.f32 %v2890, %v76
    %v2893 = vcombine.high %v2891, %v2891
    %v2895 = vunpack.c.l.s4 1983009808
    %v2896 = vunpack.c.0.s8 %v2895
    %v2897 = vlaneseq
    %v2898 = vshrl.u32 %v2897, 7
    %v2899 = vsub.s32 %v2896, %v2898
    %v2900 = vrot.slane %v2891, %v2899
    %v2902 = vunpack.c.l.s4 1983009808
    %v2903 = vunpack.c.0.s8 %v2902
    %v2904 = vlaneseq
    %v2905 = vshrl.u32 %v2904, 7
    %v2906 = vsub.s32 %v2903, %v2905
    %v2907 = vrot.slane %v2893, %v2906
    %v2908 = vcombine.high %v2900, %v2900
    %v2909 = vcombine.high %v2907, %v2907
    %v2914 = vsel %vm565, %v2900, 0.0
    %v2915 = vsel %vm565, %v2908, 0.0
    %v2916 = vadd.f32 %v2914, %v2915
    %v2917 = vsel %vm565, %v2907, 0.0
    %v2918 = vadd.f32 %v2916, %v2917
    %v2919 = vsel %vm565, %v2909, 0.0
    %v2920 = vadd.f32 %v2918, %v2919
    %2921 = vadd.xlane.f32.xlu0 %v2920
    %v2922 = vpop.xlane.xlu0 %2921
    %v2923 = vrot.slane %v2922, 4
    %v2924 = vadd.f32 %v2922, %v2923
    %v2925 = vrot.slane %v2924, 2
    %v2926 = vadd.f32 %v2924, %v2925
    %v2927 = vrot.slane %v2926, 1
    %v2928 = vadd.f32 %v2926, %v2927
    %s2929 = vtos %v2928
    %s2930 = smul.f32 %s2929, 0.001953125
    %v2931 = vstv %s2930
    %v2932 = vsub.f32 %v2890, %v2931
    %v2933 = vmul.f32 %v2932, %v76
    %v2934 = vmul.f32 %v2933, %v2933
    %v2936 = vcombine.high %v2934, %v2934
    %v2938 = vunpack.c.l.s4 1983009808
    %v2939 = vunpack.c.0.s8 %v2938
    %v2940 = vlaneseq
    %v2941 = vshrl.u32 %v2940, 7
    %v2942 = vsub.s32 %v2939, %v2941
    %v2943 = vrot.slane %v2934, %v2942
    %v2945 = vunpack.c.l.s4 1983009808
    %v2946 = vunpack.c.0.s8 %v2945
    %v2947 = vlaneseq
    %v2948 = vshrl.u32 %v2947, 7
    %v2949 = vsub.s32 %v2946, %v2948
    %v2950 = vrot.slane %v2936, %v2949
    %v2951 = vcombine.high %v2943, %v2943
    %v2952 = vcombine.high %v2950, %v2950
    %v2957 = vsel %vm565, %v2943, 0.0
    %v2958 = vsel %vm565, %v2951, 0.0
    %v2959 = vadd.f32 %v2957, %v2958
    %v2960 = vsel %vm565, %v2950, 0.0
    %v2961 = vadd.f32 %v2959, %v2960
    %v2962 = vsel %vm565, %v2952, 0.0
    %v2963 = vadd.f32 %v2961, %v2962
    %2964 = vadd.xlane.f32.xlu0 %v2963
    %v2965 = vpop.xlane.xlu0 %2964
    %v2966 = vrot.slane %v2965, 4
    %v2967 = vadd.f32 %v2965, %v2966
    %v2968 = vrot.slane %v2967, 2
    %v2969 = vadd.f32 %v2967, %v2968
    %v2970 = vrot.slane %v2969, 1
    %v2971 = vadd.f32 %v2969, %v2970
    %s2972 = vtos %v2971
    %s2973 = smul.f32 %s2972, 0.001953125
    %s2974 = sld [smem:[#allocation6 + $0x4]]
    %s2975 = sadd.f32 %s2973, 1e-05
    %v2976 = vstv %s2975
    %v2977 = vrsqrt.pop %v2976
    %s2978 = vtos %v2977
    %s2979 = smul.f32 %s2974, %s2978
    %v2980 = vstv %s2979
    %v2981 = vmul.f32 %v2933, %v2980
    %s2982 = sld [smem:[#allocation8 + $0x4]]
    %v2983 = vstv %s2982
    %v2984 = vadd.f32 %v2981, %v2983
    %v2985 = vmax.f32 %v2984, 0.0
    %v2986 = vmul.f32 %v2985, %v76
    %s2987 = scalar_lea.vmem [#allocation2], 40
    %2988 = vst [vmem:[%s2987] sm:$0xff] %v2986
    %s2989 = sld [smem:[#allocation9 + $0x5]]
    %v2990 = vstv %s2989
    %v2991 = vmul.f32 %v2990, %v2986
    %v2992 = vadd.f32 %v2409, %v2991
    loop: start=0, step=1, limit=6
    $region74: #{msdnet_forward.1} parent=1 // loop_pre_header
      _
    $region75: #{msdnet_forward.1} parent=1 // loop_header
      %s2994 = sphi 0, %s2998
      %p2995 = scmp.ge.s32.totalorder %s2994, 6
      %v2999 = vphi 0.0, %v3017
      %v3000 = vphi 0.0, %v3022
      %v3001 = vphi 0.0, %v3027
      %v3002 = vphi 0.0, %v3032
      %v3003 = vphi 0.0, %v3037
      %v3004 = vphi 0.0, %v3042
      %v3005 = vphi 0.0, %v3047
      %v3006 = vphi 0.0, %v3052
      %v3007 = vphi 0.0, %v3057
    $region76: #{msdnet_forward.1} parent=1 // loop_header_branch
      %2997 = sbr.rel (%p2995) target = $region80
    $region77: #{msdnet_forward.1} parent=1 // loop_body
      %s3008 = smul.u32 %s2994, 4
      %s3009 = smul.addr %s3008, 2
      %s3010 = scalar_lea.vmem [#allocation2], %s3009
      %v3011 = vld [vmem:[%s3010] sm:$0xff]
      %s3012 = smul.u32 %s2994, 9
      %s3013 = sadd.s32 %s3012, 135
      %s3014 = sld [smem:[#allocation4 + %s3013]]
      %v3015 = vstv %s3014
      %v3016 = vmul.f32 %v3015, %v3011
      %v3017 = vadd.f32 %v2999, %v3016
      %s3018 = sadd.s32 %s3012, 136
      %s3019 = sld [smem:[#allocation4 + %s3018]]
      %v3020 = vstv %s3019
      %v3021 = vmul.f32 %v3020, %v3011
      %v3022 = vadd.f32 %v3000, %v3021
      %s3023 = sadd.s32 %s3012, 137
      %s3024 = sld [smem:[#allocation4 + %s3023]]
      %v3025 = vstv %s3024
      %v3026 = vmul.f32 %v3025, %v3011
      %v3027 = vadd.f32 %v3001, %v3026
      %s3028 = sadd.s32 %s3012, 138
      %s3029 = sld [smem:[#allocation4 + %s3028]]
      %v3030 = vstv %s3029
      %v3031 = vmul.f32 %v3030, %v3011
      %v3032 = vadd.f32 %v3002, %v3031
      %s3033 = sadd.s32 %s3012, 139
      %s3034 = sld [smem:[#allocation4 + %s3033]]
      %v3035 = vstv %s3034
      %v3036 = vmul.f32 %v3035, %v3011
      %v3037 = vadd.f32 %v3003, %v3036
      %s3038 = sadd.s32 %s3012, 140
      %s3039 = sld [smem:[#allocation4 + %s3038]]
      %v3040 = vstv %s3039
      %v3041 = vmul.f32 %v3040, %v3011
      %v3042 = vadd.f32 %v3004, %v3041
      %s3043 = sadd.s32 %s3012, 141
      %s3044 = sld [smem:[#allocation4 + %s3043]]
      %v3045 = vstv %s3044
      %v3046 = vmul.f32 %v3045, %v3011
      %v3047 = vadd.f32 %v3005, %v3046
      %s3048 = sadd.s32 %s3012, 142
      %s3049 = sld [smem:[#allocation4 + %s3048]]
      %v3050 = vstv %s3049
      %v3051 = vmul.f32 %v3050, %v3011
      %v3052 = vadd.f32 %v3006, %v3051
      %s3053 = sadd.s32 %s3012, 143
      %s3054 = sld [smem:[#allocation4 + %s3053]]
      %v3055 = vstv %s3054
      %v3056 = vmul.f32 %v3055, %v3011
      %v3057 = vadd.f32 %v3007, %v3056
    $region78: #{msdnet_forward.1} parent=1 // loop_footer
      %s2998 = sadd.s32 1, %s2994
    $region79: #{msdnet_forward.1} parent=1 // loop_footer_branch
      %2993 = sbr.rel target = $region75
    $region80: #{msdnet_forward.1} parent=1 // loop_exit
      _
    %v3059 = vcombine.high %v2999, %v2999
    %v3061 = vunpack.c.l.s4 1983009808
    %v3062 = vunpack.c.0.s8 %v3061
    %v3063 = vlaneseq
    %v3064 = vshrl.u32 %v3063, 7
    %v3065 = vsub.s32 %v3062, %v3064
    %v3066 = vrot.slane %v2999, %v3065
    %v3068 = vunpack.c.l.s4 1983009808
    %v3069 = vunpack.c.0.s8 %v3068
    %v3070 = vlaneseq
    %v3071 = vshrl.u32 %v3070, 7
    %v3072 = vsub.s32 %v3069, %v3071
    %v3073 = vrot.slane %v3059, %v3072
    %v3074 = vcombine.high %v3073, %v3073
    %3075 = vrot.lane.b32.xlu0 %v3074, 69
    %v3076 = vpop.permute.xlu0 %3075
    %v3078 = vcombine.high %v3066, %v3066
    %3079 = vrot.lane.b32.xlu0 %v3066, 69
    %v3080 = vpop.permute.xlu0 %3079
    %3081 = vrot.lane.b32.xlu0 %v3078, 69
    %v3082 = vpop.permute.xlu0 %3081
    %3083 = vrot.lane.b32.xlu0 %v3073, 69
    %v3084 = vpop.permute.xlu0 %3083
    %v3085 = vsel %vm1328, %v3080, %v3082
    %v3086 = vsel %vm1328, %v3082, %v3084
    %v3087 = vsel %vm1328, %v3084, %v3076
    %v3089 = vsel %vm1328, %v3076, %v3080
    %v3091 = vcombine.low %v3089, %v3085
    %v3092 = vcombine.low %v3086, %v3087
    %v3094 = vunpack.c.l.s4 1983009808
    %v3095 = vunpack.c.0.s8 %v3094
    %v3096 = vlaneseq
    %v3097 = vshrl.u32 %v3096, 7
    %v3098 = vsub.s32 %v3095, %v3097
    %v3099 = vrot.slane %v3091, %v3098
    %v3101 = vunpack.c.l.s4 1983009808
    %v3102 = vunpack.c.0.s8 %v3101
    %v3103 = vlaneseq
    %v3104 = vshrl.u32 %v3103, 7
    %v3105 = vsub.s32 %v3102, %v3104
    %v3106 = vrot.slane %v3092, %v3105
    %v3107 = vcombine.low %v3099, %v3106
    %v3109 = vadd.f32 %v3003, %v3107
    %v3111 = vcombine.high %v3000, %v3000
    %v3113 = vunpack.c.l.s4 1983009808
    %v3114 = vunpack.c.0.s8 %v3113
    %v3115 = vlaneseq
    %v3116 = vshrl.u32 %v3115, 7
    %v3117 = vsub.s32 %v3114, %v3116
    %v3118 = vrot.slane %v3000, %v3117
    %v3120 = vunpack.c.l.s4 1983009808
    %v3121 = vunpack.c.0.s8 %v3120
    %v3122 = vlaneseq
    %v3123 = vshrl.u32 %v3122, 7
    %v3124 = vsub.s32 %v3121, %v3123
    %v3125 = vrot.slane %v3111, %v3124
    %v3126 = vcombine.high %v3125, %v3125
    %3127 = vrot.lane.b32.xlu0 %v3126, 66
    %v3128 = vpop.permute.xlu0 %3127
    %v3130 = vcombine.high %v3118, %v3118
    %3131 = vrot.lane.b32.xlu0 %v3118, 66
    %v3132 = vpop.permute.xlu0 %3131
    %3133 = vrot.lane.b32.xlu0 %v3130, 66
    %v3134 = vpop.permute.xlu0 %3133
    %3135 = vrot.lane.b32.xlu0 %v3125, 66
    %v3136 = vpop.permute.xlu0 %3135
    %v3137 = vsel %vm1381, %v3132, %v3134
    %v3138 = vsel %vm1381, %v3134, %v3136
    %v3139 = vsel %vm1381, %v3136, %v3128
    %v3141 = vsel %vm1381, %v3128, %v3132
    %v3143 = vcombine.low %v3141, %v3137
    %v3144 = vcombine.low %v3138, %v3139
    %v3146 = vunpack.c.l.s4 1983009808
    %v3147 = vunpack.c.0.s8 %v3146
    %v3148 = vlaneseq
    %v3149 = vshrl.u32 %v3148, 7
    %v3150 = vsub.s32 %v3147, %v3149
    %v3151 = vrot.slane %v3143, %v3150
    %v3153 = vunpack.c.l.s4 1983009808
    %v3154 = vunpack.c.0.s8 %v3153
    %v3155 = vlaneseq
    %v3156 = vshrl.u32 %v3155, 7
    %v3157 = vsub.s32 %v3154, %v3156
    %v3158 = vrot.slane %v3144, %v3157
    %v3159 = vcombine.low %v3151, %v3158
    %v3161 = vadd.f32 %v3109, %v3159
    %v3163 = vcombine.high %v3001, %v3001
    %v3165 = vunpack.c.l.s4 1983009808
    %v3166 = vunpack.c.0.s8 %v3165
    %v3167 = vlaneseq
    %v3168 = vshrl.u32 %v3167, 7
    %v3169 = vsub.s32 %v3166, %v3168
    %v3170 = vrot.slane %v3001, %v3169
    %v3172 = vunpack.c.l.s4 1983009808
    %v3173 = vunpack.c.0.s8 %v3172
    %v3174 = vlaneseq
    %v3175 = vshrl.u32 %v3174, 7
    %v3176 = vsub.s32 %v3173, %v3175
    %v3177 = vrot.slane %v3163, %v3176
    %v3178 = vcombine.high %v3177, %v3177
    %3179 = vrot.lane.b32.xlu0 %v3178, 63
    %v3180 = vpop.permute.xlu0 %3179
    %v3182 = vcombine.high %v3170, %v3170
    %3183 = vrot.lane.b32.xlu0 %v3170, 63
    %v3184 = vpop.permute.xlu0 %3183
    %3185 = vrot.lane.b32.xlu0 %v3182, 63
    %v3186 = vpop.permute.xlu0 %3185
    %3187 = vrot.lane.b32.xlu0 %v3177, 63
    %v3188 = vpop.permute.xlu0 %3187
    %v3189 = vsel %vm1434, %v3184, %v3186
    %v3190 = vsel %vm1434, %v3186, %v3188
    %v3191 = vsel %vm1434, %v3188, %v3180
    %v3193 = vsel %vm1434, %v3180, %v3184
    %v3195 = vcombine.low %v3193, %v3189
    %v3196 = vcombine.low %v3190, %v3191
    %v3198 = vunpack.c.l.s4 1983009808
    %v3199 = vunpack.c.0.s8 %v3198
    %v3200 = vlaneseq
    %v3201 = vshrl.u32 %v3200, 7
    %v3202 = vsub.s32 %v3199, %v3201
    %v3203 = vrot.slane %v3195, %v3202
    %v3205 = vunpack.c.l.s4 1983009808
    %v3206 = vunpack.c.0.s8 %v3205
    %v3207 = vlaneseq
    %v3208 = vshrl.u32 %v3207, 7
    %v3209 = vsub.s32 %v3206, %v3208
    %v3210 = vrot.slane %v3196, %v3209
    %v3211 = vcombine.low %v3203, %v3210
    %v3213 = vadd.f32 %v3161, %v3211
    %v3215 = vcombine.high %v3002, %v3002
    %v3217 = vunpack.c.l.s4 1983009808
    %v3218 = vunpack.c.0.s8 %v3217
    %v3219 = vlaneseq
    %v3220 = vshrl.u32 %v3219, 7
    %v3221 = vsub.s32 %v3218, %v3220
    %v3222 = vrot.slane %v3002, %v3221
    %v3224 = vunpack.c.l.s4 1983009808
    %v3225 = vunpack.c.0.s8 %v3224
    %v3226 = vlaneseq
    %v3227 = vshrl.u32 %v3226, 7
    %v3228 = vsub.s32 %v3225, %v3227
    %v3229 = vrot.slane %v3215, %v3228
    %v3230 = vcombine.high %v3229, %v3229
    %3231 = vrot.lane.b32.xlu0 %v3230, 3
    %v3232 = vpop.permute.xlu0 %3231
    %v3234 = vcombine.high %v3222, %v3222
    %3235 = vrot.lane.b32.xlu0 %v3222, 3
    %v3236 = vpop.permute.xlu0 %3235
    %3237 = vrot.lane.b32.xlu0 %v3234, 3
    %v3238 = vpop.permute.xlu0 %3237
    %3239 = vrot.lane.b32.xlu0 %v3229, 3
    %v3240 = vpop.permute.xlu0 %3239
    %v3241 = vsel %vm1487, %v3236, %v3238
    %v3242 = vsel %vm1487, %v3238, %v3240
    %v3243 = vsel %vm1487, %v3240, %v3232
    %v3245 = vsel %vm1487, %v3232, %v3236
    %v3247 = vcombine.low %v3245, %v3241
    %v3248 = vcombine.low %v3242, %v3243
    %v3250 = vunpack.c.l.s4 1983009808
    %v3251 = vunpack.c.0.s8 %v3250
    %v3252 = vlaneseq
    %v3253 = vshrl.u32 %v3252, 7
    %v3254 = vsub.s32 %v3251, %v3253
    %v3255 = vrot.slane %v3247, %v3254
    %v3257 = vunpack.c.l.s4 1983009808
    %v3258 = vunpack.c.0.s8 %v3257
    %v3259 = vlaneseq
    %v3260 = vshrl.u32 %v3259, 7
    %v3261 = vsub.s32 %v3258, %v3260
    %v3262 = vrot.slane %v3248, %v3261
    %v3263 = vcombine.low %v3255, %v3262
    %v3265 = vadd.f32 %v3213, %v3263
    %v3267 = vcombine.high %v3004, %v3004
    %v3269 = vunpack.c.l.s4 1983009808
    %v3270 = vunpack.c.0.s8 %v3269
    %v3271 = vlaneseq
    %v3272 = vshrl.u32 %v3271, 7
    %v3273 = vsub.s32 %v3270, %v3272
    %v3274 = vrot.slane %v3004, %v3273
    %v3276 = vunpack.c.l.s4 1983009808
    %v3277 = vunpack.c.0.s8 %v3276
    %v3278 = vlaneseq
    %v3279 = vshrl.u32 %v3278, 7
    %v3280 = vsub.s32 %v3277, %v3279
    %v3281 = vrot.slane %v3267, %v3280
    %v3282 = vcombine.high %v3274, %v3274
    %v3283 = vcombine.high %v3281, %v3281
    %3284 = vrot.lane.b32.xlu0 %v3274, 125
    %v3285 = vpop.permute.xlu0 %3284
    %3286 = vrot.lane.b32.xlu0 %v3282, 125
    %v3287 = vpop.permute.xlu0 %3286
    %3288 = vrot.lane.b32.xlu0 %v3281, 125
    %v3289 = vpop.permute.xlu0 %3288
    %3290 = vrot.lane.b32.xlu0 %v3283, 125
    %v3291 = vpop.permute.xlu0 %3290
    %v3292 = vsel %vm1539, %v3285, %v3287
    %v3293 = vsel %vm1539, %v3287, %v3289
    %v3294 = vsel %vm1539, %v3289, %v3291
    %v3297 = vsel %vm1539, %v3291, %v3285
    %v3299 = vcombine.low %v3292, %v3293
    %v3300 = vcombine.low %v3294, %v3297
    %v3302 = vunpack.c.l.s4 1983009808
    %v3303 = vunpack.c.0.s8 %v3302
    %v3304 = vlaneseq
    %v3305 = vshrl.u32 %v3304, 7
    %v3306 = vsub.s32 %v3303, %v3305
    %v3307 = vrot.slane %v3299, %v3306
    %v3309 = vunpack.c.l.s4 1983009808
    %v3310 = vunpack.c.0.s8 %v3309
    %v3311 = vlaneseq
    %v3312 = vshrl.u32 %v3311, 7
    %v3313 = vsub.s32 %v3310, %v3312
    %v3314 = vrot.slane %v3300, %v3313
    %v3315 = vcombine.low %v3307, %v3314
    %v3317 = vadd.f32 %v3265, %v3315
    %v3319 = vcombine.high %v3005, %v3005
    %v3321 = vunpack.c.l.s4 1983009808
    %v3322 = vunpack.c.0.s8 %v3321
    %v3323 = vlaneseq
    %v3324 = vshrl.u32 %v3323, 7
    %v3325 = vsub.s32 %v3322, %v3324
    %v3326 = vrot.slane %v3005, %v3325
    %v3328 = vunpack.c.l.s4 1983009808
    %v3329 = vunpack.c.0.s8 %v3328
    %v3330 = vlaneseq
    %v3331 = vshrl.u32 %v3330, 7
    %v3332 = vsub.s32 %v3329, %v3331
    %v3333 = vrot.slane %v3319, %v3332
    %v3334 = vcombine.high %v3326, %v3326
    %v3335 = vcombine.high %v3333, %v3333
    %3336 = vrot.lane.b32.xlu0 %v3326, 65
    %v3337 = vpop.permute.xlu0 %3336
    %3338 = vrot.lane.b32.xlu0 %v3334, 65
    %v3339 = vpop.permute.xlu0 %3338
    %3340 = vrot.lane.b32.xlu0 %v3333, 65
    %v3341 = vpop.permute.xlu0 %3340
    %3342 = vrot.lane.b32.xlu0 %v3335, 65
    %v3343 = vpop.permute.xlu0 %3342
    %v3344 = vsel %vm1592, %v3337, %v3339
    %v3345 = vsel %vm1592, %v3339, %v3341
    %v3346 = vsel %vm1592, %v3341, %v3343
    %v3349 = vsel %vm1592, %v3343, %v3337
    %v3351 = vcombine.low %v3344, %v3345
    %v3352 = vcombine.low %v3346, %v3349
    %v3354 = vunpack.c.l.s4 1983009808
    %v3355 = vunpack.c.0.s8 %v3354
    %v3356 = vlaneseq
    %v3357 = vshrl.u32 %v3356, 7
    %v3358 = vsub.s32 %v3355, %v3357
    %v3359 = vrot.slane %v3351, %v3358
    %v3361 = vunpack.c.l.s4 1983009808
    %v3362 = vunpack.c.0.s8 %v3361
    %v3363 = vlaneseq
    %v3364 = vshrl.u32 %v3363, 7
    %v3365 = vsub.s32 %v3362, %v3364
    %v3366 = vrot.slane %v3352, %v3365
    %v3367 = vcombine.low %v3359, %v3366
    %v3369 = vadd.f32 %v3317, %v3367
    %v3371 = vcombine.high %v3006, %v3006
    %v3373 = vunpack.c.l.s4 1983009808
    %v3374 = vunpack.c.0.s8 %v3373
    %v3375 = vlaneseq
    %v3376 = vshrl.u32 %v3375, 7
    %v3377 = vsub.s32 %v3374, %v3376
    %v3378 = vrot.slane %v3006, %v3377
    %v3380 = vunpack.c.l.s4 1983009808
    %v3381 = vunpack.c.0.s8 %v3380
    %v3382 = vlaneseq
    %v3383 = vshrl.u32 %v3382, 7
    %v3384 = vsub.s32 %v3381, %v3383
    %v3385 = vrot.slane %v3371, %v3384
    %v3386 = vcombine.high %v3378, %v3378
    %v3387 = vcombine.high %v3385, %v3385
    %3388 = vrot.lane.b32.xlu0 %v3378, 62
    %v3389 = vpop.permute.xlu0 %3388
    %3390 = vrot.lane.b32.xlu0 %v3386, 62
    %v3391 = vpop.permute.xlu0 %3390
    %3392 = vrot.lane.b32.xlu0 %v3385, 62
    %v3393 = vpop.permute.xlu0 %3392
    %3394 = vrot.lane.b32.xlu0 %v3387, 62
    %v3395 = vpop.permute.xlu0 %3394
    %v3396 = vsel %vm1645, %v3389, %v3391
    %v3397 = vsel %vm1645, %v3391, %v3393
    %v3398 = vsel %vm1645, %v3393, %v3395
    %v3401 = vsel %vm1645, %v3395, %v3389
    %v3403 = vcombine.low %v3396, %v3397
    %v3404 = vcombine.low %v3398, %v3401
    %v3406 = vunpack.c.l.s4 1983009808
    %v3407 = vunpack.c.0.s8 %v3406
    %v3408 = vlaneseq
    %v3409 = vshrl.u32 %v3408, 7
    %v3410 = vsub.s32 %v3407, %v3409
    %v3411 = vrot.slane %v3403, %v3410
    %v3413 = vunpack.c.l.s4 1983009808
    %v3414 = vunpack.c.0.s8 %v3413
    %v3415 = vlaneseq
    %v3416 = vshrl.u32 %v3415, 7
    %v3417 = vsub.s32 %v3414, %v3416
    %v3418 = vrot.slane %v3404, %v3417
    %v3419 = vcombine.low %v3411, %v3418
    %v3421 = vadd.f32 %v3369, %v3419
    %v3423 = vcombine.high %v3007, %v3007
    %v3425 = vunpack.c.l.s4 1983009808
    %v3426 = vunpack.c.0.s8 %v3425
    %v3427 = vlaneseq
    %v3428 = vshrl.u32 %v3427, 7
    %v3429 = vsub.s32 %v3426, %v3428
    %v3430 = vrot.slane %v3007, %v3429
    %v3432 = vunpack.c.l.s4 1983009808
    %v3433 = vunpack.c.0.s8 %v3432
    %v3434 = vlaneseq
    %v3435 = vshrl.u32 %v3434, 7
    %v3436 = vsub.s32 %v3433, %v3435
    %v3437 = vrot.slane %v3423, %v3436
    %v3438 = vcombine.high %v3430, %v3430
    %v3439 = vcombine.high %v3437, %v3437
    %3440 = vrot.lane.b32.xlu0 %v3430, 59
    %v3441 = vpop.permute.xlu0 %3440
    %3442 = vrot.lane.b32.xlu0 %v3438, 59
    %v3443 = vpop.permute.xlu0 %3442
    %3444 = vrot.lane.b32.xlu0 %v3437, 59
    %v3445 = vpop.permute.xlu0 %3444
    %3446 = vrot.lane.b32.xlu0 %v3439, 59
    %v3447 = vpop.permute.xlu0 %3446
    %v3448 = vsel %vm1698, %v3441, %v3443
    %v3449 = vsel %vm1698, %v3443, %v3445
    %v3450 = vsel %vm1698, %v3445, %v3447
    %v3453 = vsel %vm1698, %v3447, %v3441
    %v3455 = vcombine.low %v3448, %v3449
    %v3456 = vcombine.low %v3450, %v3453
    %v3458 = vunpack.c.l.s4 1983009808
    %v3459 = vunpack.c.0.s8 %v3458
    %v3460 = vlaneseq
    %v3461 = vshrl.u32 %v3460, 7
    %v3462 = vsub.s32 %v3459, %v3461
    %v3463 = vrot.slane %v3455, %v3462
    %v3465 = vunpack.c.l.s4 1983009808
    %v3466 = vunpack.c.0.s8 %v3465
    %v3467 = vlaneseq
    %v3468 = vshrl.u32 %v3467, 7
    %v3469 = vsub.s32 %v3466, %v3468
    %v3470 = vrot.slane %v3456, %v3469
    %v3471 = vcombine.low %v3463, %v3470
    %v3473 = vadd.f32 %v3421, %v3471
    %v3474 = vmul.f32 %v3473, %v76
    %v3476 = vcombine.high %v3474, %v3474
    %v3478 = vunpack.c.l.s4 1983009808
    %v3479 = vunpack.c.0.s8 %v3478
    %v3480 = vlaneseq
    %v3481 = vshrl.u32 %v3480, 7
    %v3482 = vsub.s32 %v3479, %v3481
    %v3483 = vrot.slane %v3474, %v3482
    %v3485 = vunpack.c.l.s4 1983009808
    %v3486 = vunpack.c.0.s8 %v3485
    %v3487 = vlaneseq
    %v3488 = vshrl.u32 %v3487, 7
    %v3489 = vsub.s32 %v3486, %v3488
    %v3490 = vrot.slane %v3476, %v3489
    %v3491 = vcombine.high %v3483, %v3483
    %v3492 = vcombine.high %v3490, %v3490
    %v3497 = vsel %vm565, %v3483, 0.0
    %v3498 = vsel %vm565, %v3491, 0.0
    %v3499 = vadd.f32 %v3497, %v3498
    %v3500 = vsel %vm565, %v3490, 0.0
    %v3501 = vadd.f32 %v3499, %v3500
    %v3502 = vsel %vm565, %v3492, 0.0
    %v3503 = vadd.f32 %v3501, %v3502
    %3504 = vadd.xlane.f32.xlu0 %v3503
    %v3505 = vpop.xlane.xlu0 %3504
    %v3506 = vrot.slane %v3505, 4
    %v3507 = vadd.f32 %v3505, %v3506
    %v3508 = vrot.slane %v3507, 2
    %v3509 = vadd.f32 %v3507, %v3508
    %v3510 = vrot.slane %v3509, 1
    %v3511 = vadd.f32 %v3509, %v3510
    %s3512 = vtos %v3511
    %s3513 = smul.f32 %s3512, 0.001953125
    %v3514 = vstv %s3513
    %v3515 = vsub.f32 %v3473, %v3514
    %v3516 = vmul.f32 %v3515, %v76
    %v3517 = vmul.f32 %v3516, %v3516
    %v3519 = vcombine.high %v3517, %v3517
    %v3521 = vunpack.c.l.s4 1983009808
    %v3522 = vunpack.c.0.s8 %v3521
    %v3523 = vlaneseq
    %v3524 = vshrl.u32 %v3523, 7
    %v3525 = vsub.s32 %v3522, %v3524
    %v3526 = vrot.slane %v3517, %v3525
    %v3528 = vunpack.c.l.s4 1983009808
    %v3529 = vunpack.c.0.s8 %v3528
    %v3530 = vlaneseq
    %v3531 = vshrl.u32 %v3530, 7
    %v3532 = vsub.s32 %v3529, %v3531
    %v3533 = vrot.slane %v3519, %v3532
    %v3534 = vcombine.high %v3526, %v3526
    %v3535 = vcombine.high %v3533, %v3533
    %v3540 = vsel %vm565, %v3526, 0.0
    %v3541 = vsel %vm565, %v3534, 0.0
    %v3542 = vadd.f32 %v3540, %v3541
    %v3543 = vsel %vm565, %v3533, 0.0
    %v3544 = vadd.f32 %v3542, %v3543
    %v3545 = vsel %vm565, %v3535, 0.0
    %v3546 = vadd.f32 %v3544, %v3545
    %3547 = vadd.xlane.f32.xlu0 %v3546
    %v3548 = vpop.xlane.xlu0 %3547
    %v3549 = vrot.slane %v3548, 4
    %v3550 = vadd.f32 %v3548, %v3549
    %v3551 = vrot.slane %v3550, 2
    %v3552 = vadd.f32 %v3550, %v3551
    %v3553 = vrot.slane %v3552, 1
    %v3554 = vadd.f32 %v3552, %v3553
    %s3555 = vtos %v3554
    %s3556 = smul.f32 %s3555, 0.001953125
    %s3557 = sld [smem:[#allocation6 + $0x5]]
    %s3558 = sadd.f32 %s3556, 1e-05
    %v3559 = vstv %s3558
    %v3560 = vrsqrt.pop %v3559
    %s3561 = vtos %v3560
    %s3562 = smul.f32 %s3557, %s3561
    %v3563 = vstv %s3562
    %v3564 = vmul.f32 %v3516, %v3563
    %s3565 = sld [smem:[#allocation8 + $0x5]]
    %v3566 = vstv %s3565
    %v3567 = vadd.f32 %v3564, %v3566
    %v3568 = vmax.f32 %v3567, 0.0
    %v3569 = vmul.f32 %v3568, %v76
    %s3570 = scalar_lea.vmem [#allocation2], 48
    %3571 = vst [vmem:[%s3570] sm:$0xff] %v3569
    %s3572 = sld [smem:[#allocation9 + $0x6]]
    %v3573 = vstv %s3572
    %v3574 = vmul.f32 %v3573, %v3569
    %v3575 = vadd.f32 %v2992, %v3574
    loop: start=0, step=1, limit=7
    $region81: #{msdnet_forward.1} parent=1 // loop_pre_header
      _
    $region82: #{msdnet_forward.1} parent=1 // loop_header
      %s3577 = sphi 0, %s3581
      %p3578 = scmp.ge.s32.totalorder %s3577, 7
      %v3582 = vphi 0.0, %v3600
      %v3583 = vphi 0.0, %v3605
      %v3584 = vphi 0.0, %v3610
      %v3585 = vphi 0.0, %v3615
      %v3586 = vphi 0.0, %v3620
      %v3587 = vphi 0.0, %v3625
      %v3588 = vphi 0.0, %v3630
      %v3589 = vphi 0.0, %v3635
      %v3590 = vphi 0.0, %v3640
    $region83: #{msdnet_forward.1} parent=1 // loop_header_branch
      %3580 = sbr.rel (%p3578) target = $region87
    $region84: #{msdnet_forward.1} parent=1 // loop_body
      %s3591 = smul.u32 %s3577, 4
      %s3592 = smul.addr %s3591, 2
      %s3593 = scalar_lea.vmem [#allocation2], %s3592
      %v3594 = vld [vmem:[%s3593] sm:$0xff]
      %s3595 = smul.u32 %s3577, 9
      %s3596 = sadd.s32 %s3595, 189
      %s3597 = sld [smem:[#allocation4 + %s3596]]
      %v3598 = vstv %s3597
      %v3599 = vmul.f32 %v3598, %v3594
      %v3600 = vadd.f32 %v3582, %v3599
      %s3601 = sadd.s32 %s3595, 190
      %s3602 = sld [smem:[#allocation4 + %s3601]]
      %v3603 = vstv %s3602
      %v3604 = vmul.f32 %v3603, %v3594
      %v3605 = vadd.f32 %v3583, %v3604
      %s3606 = sadd.s32 %s3595, 191
      %s3607 = sld [smem:[#allocation4 + %s3606]]
      %v3608 = vstv %s3607
      %v3609 = vmul.f32 %v3608, %v3594
      %v3610 = vadd.f32 %v3584, %v3609
      %s3611 = sadd.s32 %s3595, 192
      %s3612 = sld [smem:[#allocation4 + %s3611]]
      %v3613 = vstv %s3612
      %v3614 = vmul.f32 %v3613, %v3594
      %v3615 = vadd.f32 %v3585, %v3614
      %s3616 = sadd.s32 %s3595, 193
      %s3617 = sld [smem:[#allocation4 + %s3616]]
      %v3618 = vstv %s3617
      %v3619 = vmul.f32 %v3618, %v3594
      %v3620 = vadd.f32 %v3586, %v3619
      %s3621 = sadd.s32 %s3595, 194
      %s3622 = sld [smem:[#allocation4 + %s3621]]
      %v3623 = vstv %s3622
      %v3624 = vmul.f32 %v3623, %v3594
      %v3625 = vadd.f32 %v3587, %v3624
      %s3626 = sadd.s32 %s3595, 195
      %s3627 = sld [smem:[#allocation4 + %s3626]]
      %v3628 = vstv %s3627
      %v3629 = vmul.f32 %v3628, %v3594
      %v3630 = vadd.f32 %v3588, %v3629
      %s3631 = sadd.s32 %s3595, 196
      %s3632 = sld [smem:[#allocation4 + %s3631]]
      %v3633 = vstv %s3632
      %v3634 = vmul.f32 %v3633, %v3594
      %v3635 = vadd.f32 %v3589, %v3634
      %s3636 = sadd.s32 %s3595, 197
      %s3637 = sld [smem:[#allocation4 + %s3636]]
      %v3638 = vstv %s3637
      %v3639 = vmul.f32 %v3638, %v3594
      %v3640 = vadd.f32 %v3590, %v3639
    $region85: #{msdnet_forward.1} parent=1 // loop_footer
      %s3581 = sadd.s32 1, %s3577
    $region86: #{msdnet_forward.1} parent=1 // loop_footer_branch
      %3576 = sbr.rel target = $region82
    $region87: #{msdnet_forward.1} parent=1 // loop_exit
      _
    %v3642 = vcombine.high %v3582, %v3582
    %v3644 = vunpack.c.l.s4 1983009808
    %v3645 = vunpack.c.0.s8 %v3644
    %v3646 = vlaneseq
    %v3647 = vshrl.u32 %v3646, 7
    %v3648 = vsub.s32 %v3645, %v3647
    %v3649 = vrot.slane %v3582, %v3648
    %v3651 = vunpack.c.l.s4 1983009808
    %v3652 = vunpack.c.0.s8 %v3651
    %v3653 = vlaneseq
    %v3654 = vshrl.u32 %v3653, 7
    %v3655 = vsub.s32 %v3652, %v3654
    %v3656 = vrot.slane %v3642, %v3655
    %v3657 = vcombine.high %v3656, %v3656
    %3658 = vrot.lane.b32.xlu0 %v3657, 23
    %v3659 = vpop.permute.xlu0 %3658
    %v3661 = vcombine.high %v3649, %v3649
    %3662 = vrot.lane.b32.xlu0 %v3649, 23
    %v3663 = vpop.permute.xlu0 %3662
    %3664 = vrot.lane.b32.xlu0 %v3661, 23
    %v3665 = vpop.permute.xlu0 %3664
    %3666 = vrot.lane.b32.xlu0 %v3656, 23
    %v3667 = vpop.permute.xlu0 %3666
    %v3668 = vsel %vm145, %v3663, %v3665
    %v3669 = vsel %vm145, %v3665, %v3667
    %v3670 = vsel %vm145, %v3667, %v3659
    %v3672 = vsel %vm145, %v3659, %v3663
    %v3674 = vcombine.low %v3672, %v3668
    %v3675 = vcombine.low %v3669, %v3670
    %v3677 = vunpack.c.l.s4 1983009808
    %v3678 = vunpack.c.0.s8 %v3677
    %v3679 = vlaneseq
    %v3680 = vshrl.u32 %v3679, 7
    %v3681 = vsub.s32 %v3678, %v3680
    %v3682 = vrot.slane %v3674, %v3681
    %v3684 = vunpack.c.l.s4 1983009808
    %v3685 = vunpack.c.0.s8 %v3684
    %v3686 = vlaneseq
    %v3687 = vshrl.u32 %v3686, 7
    %v3688 = vsub.s32 %v3685, %v3687
    %v3689 = vrot.slane %v3675, %v3688
    %v3690 = vcombine.low %v3682, %v3689
    %v3692 = vadd.f32 %v3586, %v3690
    %v3694 = vcombine.high %v3583, %v3583
    %v3696 = vunpack.c.l.s4 1983009808
    %v3697 = vunpack.c.0.s8 %v3696
    %v3698 = vlaneseq
    %v3699 = vshrl.u32 %v3698, 7
    %v3700 = vsub.s32 %v3697, %v3699
    %v3701 = vrot.slane %v3583, %v3700
    %v3703 = vunpack.c.l.s4 1983009808
    %v3704 = vunpack.c.0.s8 %v3703
    %v3705 = vlaneseq
    %v3706 = vshrl.u32 %v3705, 7
    %v3707 = vsub.s32 %v3704, %v3706
    %v3708 = vrot.slane %v3694, %v3707
    %v3709 = vcombine.high %v3708, %v3708
    %3710 = vrot.lane.b32.xlu0 %v3709, 22
    %v3711 = vpop.permute.xlu0 %3710
    %v3713 = vcombine.high %v3701, %v3701
    %3714 = vrot.lane.b32.xlu0 %v3701, 22
    %v3715 = vpop.permute.xlu0 %3714
    %3716 = vrot.lane.b32.xlu0 %v3713, 22
    %v3717 = vpop.permute.xlu0 %3716
    %3718 = vrot.lane.b32.xlu0 %v3708, 22
    %v3719 = vpop.permute.xlu0 %3718
    %v3720 = vsel %vm198, %v3715, %v3717
    %v3721 = vsel %vm198, %v3717, %v3719
    %v3722 = vsel %vm198, %v3719, %v3711
    %v3724 = vsel %vm198, %v3711, %v3715
    %v3726 = vcombine.low %v3724, %v3720
    %v3727 = vcombine.low %v3721, %v3722
    %v3729 = vunpack.c.l.s4 1983009808
    %v3730 = vunpack.c.0.s8 %v3729
    %v3731 = vlaneseq
    %v3732 = vshrl.u32 %v3731, 7
    %v3733 = vsub.s32 %v3730, %v3732
    %v3734 = vrot.slane %v3726, %v3733
    %v3736 = vunpack.c.l.s4 1983009808
    %v3737 = vunpack.c.0.s8 %v3736
    %v3738 = vlaneseq
    %v3739 = vshrl.u32 %v3738, 7
    %v3740 = vsub.s32 %v3737, %v3739
    %v3741 = vrot.slane %v3727, %v3740
    %v3742 = vcombine.low %v3734, %v3741
    %v3744 = vadd.f32 %v3692, %v3742
    %v3746 = vcombine.high %v3584, %v3584
    %v3748 = vunpack.c.l.s4 1983009808
    %v3749 = vunpack.c.0.s8 %v3748
    %v3750 = vlaneseq
    %v3751 = vshrl.u32 %v3750, 7
    %v3752 = vsub.s32 %v3749, %v3751
    %v3753 = vrot.slane %v3584, %v3752
    %v3755 = vunpack.c.l.s4 1983009808
    %v3756 = vunpack.c.0.s8 %v3755
    %v3757 = vlaneseq
    %v3758 = vshrl.u32 %v3757, 7
    %v3759 = vsub.s32 %v3756, %v3758
    %v3760 = vrot.slane %v3746, %v3759
    %v3761 = vcombine.high %v3760, %v3760
    %3762 = vrot.lane.b32.xlu0 %v3761, 21
    %v3763 = vpop.permute.xlu0 %3762
    %v3765 = vcombine.high %v3753, %v3753
    %3766 = vrot.lane.b32.xlu0 %v3753, 21
    %v3767 = vpop.permute.xlu0 %3766
    %3768 = vrot.lane.b32.xlu0 %v3765, 21
    %v3769 = vpop.permute.xlu0 %3768
    %3770 = vrot.lane.b32.xlu0 %v3760, 21
    %v3771 = vpop.permute.xlu0 %3770
    %v3772 = vsel %vm251, %v3767, %v3769
    %v3773 = vsel %vm251, %v3769, %v3771
    %v3774 = vsel %vm251, %v3771, %v3763
    %v3776 = vsel %vm251, %v3763, %v3767
    %v3778 = vcombine.low %v3776, %v3772
    %v3779 = vcombine.low %v3773, %v3774
    %v3781 = vunpack.c.l.s4 1983009808
    %v3782 = vunpack.c.0.s8 %v3781
    %v3783 = vlaneseq
    %v3784 = vshrl.u32 %v3783, 7
    %v3785 = vsub.s32 %v3782, %v3784
    %v3786 = vrot.slane %v3778, %v3785
    %v3788 = vunpack.c.l.s4 1983009808
    %v3789 = vunpack.c.0.s8 %v3788
    %v3790 = vlaneseq
    %v3791 = vshrl.u32 %v3790, 7
    %v3792 = vsub.s32 %v3789, %v3791
    %v3793 = vrot.slane %v3779, %v3792
    %v3794 = vcombine.low %v3786, %v3793
    %v3796 = vadd.f32 %v3744, %v3794
    %v3798 = vcombine.high %v3585, %v3585
    %v3800 = vunpack.c.l.s4 1983009808
    %v3801 = vunpack.c.0.s8 %v3800
    %v3802 = vlaneseq
    %v3803 = vshrl.u32 %v3802, 7
    %v3804 = vsub.s32 %v3801, %v3803
    %v3805 = vrot.slane %v3585, %v3804
    %v3807 = vunpack.c.l.s4 1983009808
    %v3808 = vunpack.c.0.s8 %v3807
    %v3809 = vlaneseq
    %v3810 = vshrl.u32 %v3809, 7
    %v3811 = vsub.s32 %v3808, %v3810
    %v3812 = vrot.slane %v3798, %v3811
    %v3813 = vcombine.high %v3812, %v3812
    %3814 = vrot.lane.b32.xlu0 %v3813, 1
    %v3815 = vpop.permute.xlu0 %3814
    %v3817 = vcombine.high %v3805, %v3805
    %3818 = vrot.lane.b32.xlu0 %v3805, 1
    %v3819 = vpop.permute.xlu0 %3818
    %3820 = vrot.lane.b32.xlu0 %v3817, 1
    %v3821 = vpop.permute.xlu0 %3820
    %3822 = vrot.lane.b32.xlu0 %v3812, 1
    %v3823 = vpop.permute.xlu0 %3822
    %v3824 = vsel %vm304, %v3819, %v3821
    %v3825 = vsel %vm304, %v3821, %v3823
    %v3826 = vsel %vm304, %v3823, %v3815
    %v3828 = vsel %vm304, %v3815, %v3819
    %v3830 = vcombine.low %v3828, %v3824
    %v3831 = vcombine.low %v3825, %v3826
    %v3833 = vunpack.c.l.s4 1983009808
    %v3834 = vunpack.c.0.s8 %v3833
    %v3835 = vlaneseq
    %v3836 = vshrl.u32 %v3835, 7
    %v3837 = vsub.s32 %v3834, %v3836
    %v3838 = vrot.slane %v3830, %v3837
    %v3840 = vunpack.c.l.s4 1983009808
    %v3841 = vunpack.c.0.s8 %v3840
    %v3842 = vlaneseq
    %v3843 = vshrl.u32 %v3842, 7
    %v3844 = vsub.s32 %v3841, %v3843
    %v3845 = vrot.slane %v3831, %v3844
    %v3846 = vcombine.low %v3838, %v3845
    %v3848 = vadd.f32 %v3796, %v3846
    %v3850 = vcombine.high %v3587, %v3587
    %v3852 = vunpack.c.l.s4 1983009808
    %v3853 = vunpack.c.0.s8 %v3852
    %v3854 = vlaneseq
    %v3855 = vshrl.u32 %v3854, 7
    %v3856 = vsub.s32 %v3853, %v3855
    %v3857 = vrot.slane %v3587, %v3856
    %v3859 = vunpack.c.l.s4 1983009808
    %v3860 = vunpack.c.0.s8 %v3859
    %v3861 = vlaneseq
    %v3862 = vshrl.u32 %v3861, 7
    %v3863 = vsub.s32 %v3860, %v3862
    %v3864 = vrot.slane %v3850, %v3863
    %v3865 = vcombine.high %v3857, %v3857
    %v3866 = vcombine.high %v3864, %v3864
    %3867 = vrot.lane.b32.xlu0 %v3857, 127
    %v3868 = vpop.permute.xlu0 %3867
    %3869 = vrot.lane.b32.xlu0 %v3865, 127
    %v3870 = vpop.permute.xlu0 %3869
    %3871 = vrot.lane.b32.xlu0 %v3864, 127
    %v3872 = vpop.permute.xlu0 %3871
    %3873 = vrot.lane.b32.xlu0 %v3866, 127
    %v3874 = vpop.permute.xlu0 %3873
    %v3875 = vsel %vm356, %v3868, %v3870
    %v3876 = vsel %vm356, %v3870, %v3872
    %v3877 = vsel %vm356, %v3872, %v3874
    %v3880 = vsel %vm356, %v3874, %v3868
    %v3882 = vcombine.low %v3875, %v3876
    %v3883 = vcombine.low %v3877, %v3880
    %v3885 = vunpack.c.l.s4 1983009808
    %v3886 = vunpack.c.0.s8 %v3885
    %v3887 = vlaneseq
    %v3888 = vshrl.u32 %v3887, 7
    %v3889 = vsub.s32 %v3886, %v3888
    %v3890 = vrot.slane %v3882, %v3889
    %v3892 = vunpack.c.l.s4 1983009808
    %v3893 = vunpack.c.0.s8 %v3892
    %v3894 = vlaneseq
    %v3895 = vshrl.u32 %v3894, 7
    %v3896 = vsub.s32 %v3893, %v3895
    %v3897 = vrot.slane %v3883, %v3896
    %v3898 = vcombine.low %v3890, %v3897
    %v3900 = vadd.f32 %v3848, %v3898
    %v3902 = vcombine.high %v3588, %v3588
    %v3904 = vunpack.c.l.s4 1983009808
    %v3905 = vunpack.c.0.s8 %v3904
    %v3906 = vlaneseq
    %v3907 = vshrl.u32 %v3906, 7
    %v3908 = vsub.s32 %v3905, %v3907
    %v3909 = vrot.slane %v3588, %v3908
    %v3911 = vunpack.c.l.s4 1983009808
    %v3912 = vunpack.c.0.s8 %v3911
    %v3913 = vlaneseq
    %v3914 = vshrl.u32 %v3913, 7
    %v3915 = vsub.s32 %v3912, %v3914
    %v3916 = vrot.slane %v3902, %v3915
    %v3917 = vcombine.high %v3909, %v3909
    %v3918 = vcombine.high %v3916, %v3916
    %3919 = vrot.lane.b32.xlu0 %v3909, 107
    %v3920 = vpop.permute.xlu0 %3919
    %3921 = vrot.lane.b32.xlu0 %v3917, 107
    %v3922 = vpop.permute.xlu0 %3921
    %3923 = vrot.lane.b32.xlu0 %v3916, 107
    %v3924 = vpop.permute.xlu0 %3923
    %3925 = vrot.lane.b32.xlu0 %v3918, 107
    %v3926 = vpop.permute.xlu0 %3925
    %v3927 = vsel %vm409, %v3920, %v3922
    %v3928 = vsel %vm409, %v3922, %v3924
    %v3929 = vsel %vm409, %v3924, %v3926
    %v3932 = vsel %vm409, %v3926, %v3920
    %v3934 = vcombine.low %v3927, %v3928
    %v3935 = vcombine.low %v3929, %v3932
    %v3937 = vunpack.c.l.s4 1983009808
    %v3938 = vunpack.c.0.s8 %v3937
    %v3939 = vlaneseq
    %v3940 = vshrl.u32 %v3939, 7
    %v3941 = vsub.s32 %v3938, %v3940
    %v3942 = vrot.slane %v3934, %v3941
    %v3944 = vunpack.c.l.s4 1983009808
    %v3945 = vunpack.c.0.s8 %v3944
    %v3946 = vlaneseq
    %v3947 = vshrl.u32 %v3946, 7
    %v3948 = vsub.s32 %v3945, %v3947
    %v3949 = vrot.slane %v3935, %v3948
    %v3950 = vcombine.low %v3942, %v3949
    %v3952 = vadd.f32 %v3900, %v3950
    %v3954 = vcombine.high %v3589, %v3589
    %v3956 = vunpack.c.l.s4 1983009808
    %v3957 = vunpack.c.0.s8 %v3956
    %v3958 = vlaneseq
    %v3959 = vshrl.u32 %v3958, 7
    %v3960 = vsub.s32 %v3957, %v3959
    %v3961 = vrot.slane %v3589, %v3960
    %v3963 = vunpack.c.l.s4 1983009808
    %v3964 = vunpack.c.0.s8 %v3963
    %v3965 = vlaneseq
    %v3966 = vshrl.u32 %v3965, 7
    %v3967 = vsub.s32 %v3964, %v3966
    %v3968 = vrot.slane %v3954, %v3967
    %v3969 = vcombine.high %v3961, %v3961
    %v3970 = vcombine.high %v3968, %v3968
    %3971 = vrot.lane.b32.xlu0 %v3961, 106
    %v3972 = vpop.permute.xlu0 %3971
    %3973 = vrot.lane.b32.xlu0 %v3969, 106
    %v3974 = vpop.permute.xlu0 %3973
    %3975 = vrot.lane.b32.xlu0 %v3968, 106
    %v3976 = vpop.permute.xlu0 %3975
    %3977 = vrot.lane.b32.xlu0 %v3970, 106
    %v3978 = vpop.permute.xlu0 %3977
    %v3979 = vsel %vm462, %v3972, %v3974
    %v3980 = vsel %vm462, %v3974, %v3976
    %v3981 = vsel %vm462, %v3976, %v3978
    %v3984 = vsel %vm462, %v3978, %v3972
    %v3986 = vcombine.low %v3979, %v3980
    %v3987 = vcombine.low %v3981, %v3984
    %v3989 = vunpack.c.l.s4 1983009808
    %v3990 = vunpack.c.0.s8 %v3989
    %v3991 = vlaneseq
    %v3992 = vshrl.u32 %v3991, 7
    %v3993 = vsub.s32 %v3990, %v3992
    %v3994 = vrot.slane %v3986, %v3993
    %v3996 = vunpack.c.l.s4 1983009808
    %v3997 = vunpack.c.0.s8 %v3996
    %v3998 = vlaneseq
    %v3999 = vshrl.u32 %v3998, 7
    %v4000 = vsub.s32 %v3997, %v3999
    %v4001 = vrot.slane %v3987, %v4000
    %v4002 = vcombine.low %v3994, %v4001
    %v4004 = vadd.f32 %v3952, %v4002
    %v4006 = vcombine.high %v3590, %v3590
    %v4008 = vunpack.c.l.s4 1983009808
    %v4009 = vunpack.c.0.s8 %v4008
    %v4010 = vlaneseq
    %v4011 = vshrl.u32 %v4010, 7
    %v4012 = vsub.s32 %v4009, %v4011
    %v4013 = vrot.slane %v3590, %v4012
    %v4015 = vunpack.c.l.s4 1983009808
    %v4016 = vunpack.c.0.s8 %v4015
    %v4017 = vlaneseq
    %v4018 = vshrl.u32 %v4017, 7
    %v4019 = vsub.s32 %v4016, %v4018
    %v4020 = vrot.slane %v4006, %v4019
    %v4021 = vcombine.high %v4013, %v4013
    %v4022 = vcombine.high %v4020, %v4020
    %4023 = vrot.lane.b32.xlu0 %v4013, 105
    %v4024 = vpop.permute.xlu0 %4023
    %4025 = vrot.lane.b32.xlu0 %v4021, 105
    %v4026 = vpop.permute.xlu0 %4025
    %4027 = vrot.lane.b32.xlu0 %v4020, 105
    %v4028 = vpop.permute.xlu0 %4027
    %4029 = vrot.lane.b32.xlu0 %v4022, 105
    %v4030 = vpop.permute.xlu0 %4029
    %v4031 = vsel %vm515, %v4024, %v4026
    %v4032 = vsel %vm515, %v4026, %v4028
    %v4033 = vsel %vm515, %v4028, %v4030
    %v4036 = vsel %vm515, %v4030, %v4024
    %v4038 = vcombine.low %v4031, %v4032
    %v4039 = vcombine.low %v4033, %v4036
    %v4041 = vunpack.c.l.s4 1983009808
    %v4042 = vunpack.c.0.s8 %v4041
    %v4043 = vlaneseq
    %v4044 = vshrl.u32 %v4043, 7
    %v4045 = vsub.s32 %v4042, %v4044
    %v4046 = vrot.slane %v4038, %v4045
    %v4048 = vunpack.c.l.s4 1983009808
    %v4049 = vunpack.c.0.s8 %v4048
    %v4050 = vlaneseq
    %v4051 = vshrl.u32 %v4050, 7
    %v4052 = vsub.s32 %v4049, %v4051
    %v4053 = vrot.slane %v4039, %v4052
    %v4054 = vcombine.low %v4046, %v4053
    %v4056 = vadd.f32 %v4004, %v4054
    %v4057 = vmul.f32 %v4056, %v76
    %v4059 = vcombine.high %v4057, %v4057
    %v4061 = vunpack.c.l.s4 1983009808
    %v4062 = vunpack.c.0.s8 %v4061
    %v4063 = vlaneseq
    %v4064 = vshrl.u32 %v4063, 7
    %v4065 = vsub.s32 %v4062, %v4064
    %v4066 = vrot.slane %v4057, %v4065
    %v4068 = vunpack.c.l.s4 1983009808
    %v4069 = vunpack.c.0.s8 %v4068
    %v4070 = vlaneseq
    %v4071 = vshrl.u32 %v4070, 7
    %v4072 = vsub.s32 %v4069, %v4071
    %v4073 = vrot.slane %v4059, %v4072
    %v4074 = vcombine.high %v4066, %v4066
    %v4075 = vcombine.high %v4073, %v4073
    %v4080 = vsel %vm565, %v4066, 0.0
    %v4081 = vsel %vm565, %v4074, 0.0
    %v4082 = vadd.f32 %v4080, %v4081
    %v4083 = vsel %vm565, %v4073, 0.0
    %v4084 = vadd.f32 %v4082, %v4083
    %v4085 = vsel %vm565, %v4075, 0.0
    %v4086 = vadd.f32 %v4084, %v4085
    %4087 = vadd.xlane.f32.xlu0 %v4086
    %v4088 = vpop.xlane.xlu0 %4087
    %v4089 = vrot.slane %v4088, 4
    %v4090 = vadd.f32 %v4088, %v4089
    %v4091 = vrot.slane %v4090, 2
    %v4092 = vadd.f32 %v4090, %v4091
    %v4093 = vrot.slane %v4092, 1
    %v4094 = vadd.f32 %v4092, %v4093
    %s4095 = vtos %v4094
    %s4096 = smul.f32 %s4095, 0.001953125
    %v4097 = vstv %s4096
    %v4098 = vsub.f32 %v4056, %v4097
    %v4099 = vmul.f32 %v4098, %v76
    %v4100 = vmul.f32 %v4099, %v4099
    %v4102 = vcombine.high %v4100, %v4100
    %v4104 = vunpack.c.l.s4 1983009808
    %v4105 = vunpack.c.0.s8 %v4104
    %v4106 = vlaneseq
    %v4107 = vshrl.u32 %v4106, 7
    %v4108 = vsub.s32 %v4105, %v4107
    %v4109 = vrot.slane %v4100, %v4108
    %v4111 = vunpack.c.l.s4 1983009808
    %v4112 = vunpack.c.0.s8 %v4111
    %v4113 = vlaneseq
    %v4114 = vshrl.u32 %v4113, 7
    %v4115 = vsub.s32 %v4112, %v4114
    %v4116 = vrot.slane %v4102, %v4115
    %v4117 = vcombine.high %v4109, %v4109
    %v4118 = vcombine.high %v4116, %v4116
    %v4123 = vsel %vm565, %v4109, 0.0
    %v4124 = vsel %vm565, %v4117, 0.0
    %v4125 = vadd.f32 %v4123, %v4124
    %v4126 = vsel %vm565, %v4116, 0.0
    %v4127 = vadd.f32 %v4125, %v4126
    %v4128 = vsel %vm565, %v4118, 0.0
    %v4129 = vadd.f32 %v4127, %v4128
    %4130 = vadd.xlane.f32.xlu0 %v4129
    %v4131 = vpop.xlane.xlu0 %4130
    %v4132 = vrot.slane %v4131, 4
    %v4133 = vadd.f32 %v4131, %v4132
    %v4134 = vrot.slane %v4133, 2
    %v4135 = vadd.f32 %v4133, %v4134
    %v4136 = vrot.slane %v4135, 1
    %v4137 = vadd.f32 %v4135, %v4136
    %s4138 = vtos %v4137
    %s4139 = smul.f32 %s4138, 0.001953125
    %s4140 = sld [smem:[#allocation6 + $0x6]]
    %s4141 = sadd.f32 %s4139, 1e-05
    %v4142 = vstv %s4141
    %v4143 = vrsqrt.pop %v4142
    %s4144 = vtos %v4143
    %s4145 = smul.f32 %s4140, %s4144
    %v4146 = vstv %s4145
    %v4147 = vmul.f32 %v4099, %v4146
    %s4148 = sld [smem:[#allocation8 + $0x6]]
    %v4149 = vstv %s4148
    %v4150 = vadd.f32 %v4147, %v4149
    %v4151 = vmax.f32 %v4150, 0.0
    %v4152 = vmul.f32 %v4151, %v76
    %s4153 = scalar_lea.vmem [#allocation2], 56
    %4154 = vst [vmem:[%s4153] sm:$0xff] %v4152
    %s4155 = sld [smem:[#allocation9 + $0x7]]
    %v4156 = vstv %s4155
    %v4157 = vmul.f32 %v4156, %v4152
    %v4158 = vadd.f32 %v3575, %v4157
    loop: start=0, step=1, limit=8
    $region88: #{msdnet_forward.1} parent=1 // loop_pre_header
      _
    $region89: #{msdnet_forward.1} parent=1 // loop_header
      %s4160 = sphi 0, %s4164
      %p4161 = scmp.ge.s32.totalorder %s4160, 8
      %v4165 = vphi 0.0, %v4183
      %v4166 = vphi 0.0, %v4188
      %v4167 = vphi 0.0, %v4193
      %v4168 = vphi 0.0, %v4198
      %v4169 = vphi 0.0, %v4203
      %v4170 = vphi 0.0, %v4208
      %v4171 = vphi 0.0, %v4213
      %v4172 = vphi 0.0, %v4218
      %v4173 = vphi 0.0, %v4223
    $region90: #{msdnet_forward.1} parent=1 // loop_header_branch
      %4163 = sbr.rel (%p4161) target = $region94
    $region91: #{msdnet_forward.1} parent=1 // loop_body
      %s4174 = smul.u32 %s4160, 4
      %s4175 = smul.addr %s4174, 2
      %s4176 = scalar_lea.vmem [#allocation2], %s4175
      %v4177 = vld [vmem:[%s4176] sm:$0xff]
      %s4178 = smul.u32 %s4160, 9
      %s4179 = sadd.s32 %s4178, 252
      %s4180 = sld [smem:[#allocation4 + %s4179]]
      %v4181 = vstv %s4180
      %v4182 = vmul.f32 %v4181, %v4177
      %v4183 = vadd.f32 %v4165, %v4182
      %s4184 = sadd.s32 %s4178, 253
      %s4185 = sld [smem:[#allocation4 + %s4184]]
      %v4186 = vstv %s4185
      %v4187 = vmul.f32 %v4186, %v4177
      %v4188 = vadd.f32 %v4166, %v4187
      %s4189 = sadd.s32 %s4178, 254
      %s4190 = sld [smem:[#allocation4 + %s4189]]
      %v4191 = vstv %s4190
      %v4192 = vmul.f32 %v4191, %v4177
      %v4193 = vadd.f32 %v4167, %v4192
      %s4194 = sadd.s32 %s4178, 255
      %s4195 = sld [smem:[#allocation4 + %s4194]]
      %v4196 = vstv %s4195
      %v4197 = vmul.f32 %v4196, %v4177
      %v4198 = vadd.f32 %v4168, %v4197
      %s4199 = sadd.s32 %s4178, 256
      %s4200 = sld [smem:[#allocation4 + %s4199]]
      %v4201 = vstv %s4200
      %v4202 = vmul.f32 %v4201, %v4177
      %v4203 = vadd.f32 %v4169, %v4202
      %s4204 = sadd.s32 %s4178, 257
      %s4205 = sld [smem:[#allocation4 + %s4204]]
      %v4206 = vstv %s4205
      %v4207 = vmul.f32 %v4206, %v4177
      %v4208 = vadd.f32 %v4170, %v4207
      %s4209 = sadd.s32 %s4178, 258
      %s4210 = sld [smem:[#allocation4 + %s4209]]
      %v4211 = vstv %s4210
      %v4212 = vmul.f32 %v4211, %v4177
      %v4213 = vadd.f32 %v4171, %v4212
      %s4214 = sadd.s32 %s4178, 259
      %s4215 = sld [smem:[#allocation4 + %s4214]]
      %v4216 = vstv %s4215
      %v4217 = vmul.f32 %v4216, %v4177
      %v4218 = vadd.f32 %v4172, %v4217
      %s4219 = sadd.s32 %s4178, 260
      %s4220 = sld [smem:[#allocation4 + %s4219]]
      %v4221 = vstv %s4220
      %v4222 = vmul.f32 %v4221, %v4177
      %v4223 = vadd.f32 %v4173, %v4222
    $region92: #{msdnet_forward.1} parent=1 // loop_footer
      %s4164 = sadd.s32 1, %s4160
    $region93: #{msdnet_forward.1} parent=1 // loop_footer_branch
      %4159 = sbr.rel target = $region89
    $region94: #{msdnet_forward.1} parent=1 // loop_exit
      _
    %v4225 = vcombine.high %v4165, %v4165
    %v4227 = vunpack.c.l.s4 1983009808
    %v4228 = vunpack.c.0.s8 %v4227
    %v4229 = vlaneseq
    %v4230 = vshrl.u32 %v4229, 7
    %v4231 = vsub.s32 %v4228, %v4230
    %v4232 = vrot.slane %v4165, %v4231
    %v4234 = vunpack.c.l.s4 1983009808
    %v4235 = vunpack.c.0.s8 %v4234
    %v4236 = vlaneseq
    %v4237 = vshrl.u32 %v4236, 7
    %v4238 = vsub.s32 %v4235, %v4237
    %v4239 = vrot.slane %v4225, %v4238
    %v4240 = vcombine.high %v4239, %v4239
    %4241 = vrot.lane.b32.xlu0 %v4240, 46
    %v4242 = vpop.permute.xlu0 %4241
    %v4244 = vcombine.high %v4232, %v4232
    %4245 = vrot.lane.b32.xlu0 %v4232, 46
    %v4246 = vpop.permute.xlu0 %4245
    %4247 = vrot.lane.b32.xlu0 %v4244, 46
    %v4248 = vpop.permute.xlu0 %4247
    %4249 = vrot.lane.b32.xlu0 %v4239, 46
    %v4250 = vpop.permute.xlu0 %4249
    %v4251 = vsel %vm737, %v4246, %v4248
    %v4252 = vsel %vm737, %v4248, %v4250
    %v4253 = vsel %vm737, %v4250, %v4242
    %v4255 = vsel %vm737, %v4242, %v4246
    %v4257 = vcombine.low %v4255, %v4251
    %v4258 = vcombine.low %v4252, %v4253
    %v4260 = vunpack.c.l.s4 1983009808
    %v4261 = vunpack.c.0.s8 %v4260
    %v4262 = vlaneseq
    %v4263 = vshrl.u32 %v4262, 7
    %v4264 = vsub.s32 %v4261, %v4263
    %v4265 = vrot.slane %v4257, %v4264
    %v4267 = vunpack.c.l.s4 1983009808
    %v4268 = vunpack.c.0.s8 %v4267
    %v4269 = vlaneseq
    %v4270 = vshrl.u32 %v4269, 7
    %v4271 = vsub.s32 %v4268, %v4270
    %v4272 = vrot.slane %v4258, %v4271
    %v4273 = vcombine.low %v4265, %v4272
    %v4275 = vadd.f32 %v4169, %v4273
    %v4277 = vcombine.high %v4166, %v4166
    %v4279 = vunpack.c.l.s4 1983009808
    %v4280 = vunpack.c.0.s8 %v4279
    %v4281 = vlaneseq
    %v4282 = vshrl.u32 %v4281, 7
    %v4283 = vsub.s32 %v4280, %v4282
    %v4284 = vrot.slane %v4166, %v4283
    %v4286 = vunpack.c.l.s4 1983009808
    %v4287 = vunpack.c.0.s8 %v4286
    %v4288 = vlaneseq
    %v4289 = vshrl.u32 %v4288, 7
    %v4290 = vsub.s32 %v4287, %v4289
    %v4291 = vrot.slane %v4277, %v4290
    %v4292 = vcombine.high %v4291, %v4291
    %4293 = vrot.lane.b32.xlu0 %v4292, 44
    %v4294 = vpop.permute.xlu0 %4293
    %v4296 = vcombine.high %v4284, %v4284
    %4297 = vrot.lane.b32.xlu0 %v4284, 44
    %v4298 = vpop.permute.xlu0 %4297
    %4299 = vrot.lane.b32.xlu0 %v4296, 44
    %v4300 = vpop.permute.xlu0 %4299
    %4301 = vrot.lane.b32.xlu0 %v4291, 44
    %v4302 = vpop.permute.xlu0 %4301
    %v4303 = vsel %vm790, %v4298, %v4300
    %v4304 = vsel %vm790, %v4300, %v4302
    %v4305 = vsel %vm790, %v4302, %v4294
    %v4307 = vsel %vm790, %v4294, %v4298
    %v4309 = vcombine.low %v4307, %v4303
    %v4310 = vcombine.low %v4304, %v4305
    %v4312 = vunpack.c.l.s4 1983009808
    %v4313 = vunpack.c.0.s8 %v4312
    %v4314 = vlaneseq
    %v4315 = vshrl.u32 %v4314, 7
    %v4316 = vsub.s32 %v4313, %v4315
    %v4317 = vrot.slane %v4309, %v4316
    %v4319 = vunpack.c.l.s4 1983009808
    %v4320 = vunpack.c.0.s8 %v4319
    %v4321 = vlaneseq
    %v4322 = vshrl.u32 %v4321, 7
    %v4323 = vsub.s32 %v4320, %v4322
    %v4324 = vrot.slane %v4310, %v4323
    %v4325 = vcombine.low %v4317, %v4324
    %v4327 = vadd.f32 %v4275, %v4325
    %v4329 = vcombine.high %v4167, %v4167
    %v4331 = vunpack.c.l.s4 1983009808
    %v4332 = vunpack.c.0.s8 %v4331
    %v4333 = vlaneseq
    %v4334 = vshrl.u32 %v4333, 7
    %v4335 = vsub.s32 %v4332, %v4334
    %v4336 = vrot.slane %v4167, %v4335
    %v4338 = vunpack.c.l.s4 1983009808
    %v4339 = vunpack.c.0.s8 %v4338
    %v4340 = vlaneseq
    %v4341 = vshrl.u32 %v4340, 7
    %v4342 = vsub.s32 %v4339, %v4341
    %v4343 = vrot.slane %v4329, %v4342
    %v4344 = vcombine.high %v4343, %v4343
    %4345 = vrot.lane.b32.xlu0 %v4344, 42
    %v4346 = vpop.permute.xlu0 %4345
    %v4348 = vcombine.high %v4336, %v4336
    %4349 = vrot.lane.b32.xlu0 %v4336, 42
    %v4350 = vpop.permute.xlu0 %4349
    %4351 = vrot.lane.b32.xlu0 %v4348, 42
    %v4352 = vpop.permute.xlu0 %4351
    %4353 = vrot.lane.b32.xlu0 %v4343, 42
    %v4354 = vpop.permute.xlu0 %4353
    %v4355 = vsel %vm843, %v4350, %v4352
    %v4356 = vsel %vm843, %v4352, %v4354
    %v4357 = vsel %vm843, %v4354, %v4346
    %v4359 = vsel %vm843, %v4346, %v4350
    %v4361 = vcombine.low %v4359, %v4355
    %v4362 = vcombine.low %v4356, %v4357
    %v4364 = vunpack.c.l.s4 1983009808
    %v4365 = vunpack.c.0.s8 %v4364
    %v4366 = vlaneseq
    %v4367 = vshrl.u32 %v4366, 7
    %v4368 = vsub.s32 %v4365, %v4367
    %v4369 = vrot.slane %v4361, %v4368
    %v4371 = vunpack.c.l.s4 1983009808
    %v4372 = vunpack.c.0.s8 %v4371
    %v4373 = vlaneseq
    %v4374 = vshrl.u32 %v4373, 7
    %v4375 = vsub.s32 %v4372, %v4374
    %v4376 = vrot.slane %v4362, %v4375
    %v4377 = vcombine.low %v4369, %v4376
    %v4379 = vadd.f32 %v4327, %v4377
    %v4381 = vcombine.high %v4168, %v4168
    %v4383 = vunpack.c.l.s4 1983009808
    %v4384 = vunpack.c.0.s8 %v4383
    %v4385 = vlaneseq
    %v4386 = vshrl.u32 %v4385, 7
    %v4387 = vsub.s32 %v4384, %v4386
    %v4388 = vrot.slane %v4168, %v4387
    %v4390 = vunpack.c.l.s4 1983009808
    %v4391 = vunpack.c.0.s8 %v4390
    %v4392 = vlaneseq
    %v4393 = vshrl.u32 %v4392, 7
    %v4394 = vsub.s32 %v4391, %v4393
    %v4395 = vrot.slane %v4381, %v4394
    %v4396 = vcombine.high %v4395, %v4395
    %4397 = vrot.lane.b32.xlu0 %v4396, 2
    %v4398 = vpop.permute.xlu0 %4397
    %v4400 = vcombine.high %v4388, %v4388
    %4401 = vrot.lane.b32.xlu0 %v4388, 2
    %v4402 = vpop.permute.xlu0 %4401
    %4403 = vrot.lane.b32.xlu0 %v4400, 2
    %v4404 = vpop.permute.xlu0 %4403
    %4405 = vrot.lane.b32.xlu0 %v4395, 2
    %v4406 = vpop.permute.xlu0 %4405
    %v4407 = vsel %vm896, %v4402, %v4404
    %v4408 = vsel %vm896, %v4404, %v4406
    %v4409 = vsel %vm896, %v4406, %v4398
    %v4411 = vsel %vm896, %v4398, %v4402
    %v4413 = vcombine.low %v4411, %v4407
    %v4414 = vcombine.low %v4408, %v4409
    %v4416 = vunpack.c.l.s4 1983009808
    %v4417 = vunpack.c.0.s8 %v4416
    %v4418 = vlaneseq
    %v4419 = vshrl.u32 %v4418, 7
    %v4420 = vsub.s32 %v4417, %v4419
    %v4421 = vrot.slane %v4413, %v4420
    %v4423 = vunpack.c.l.s4 1983009808
    %v4424 = vunpack.c.0.s8 %v4423
    %v4425 = vlaneseq
    %v4426 = vshrl.u32 %v4425, 7
    %v4427 = vsub.s32 %v4424, %v4426
    %v4428 = vrot.slane %v4414, %v4427
    %v4429 = vcombine.low %v4421, %v4428
    %v4431 = vadd.f32 %v4379, %v4429
    %v4433 = vcombine.high %v4170, %v4170
    %v4435 = vunpack.c.l.s4 1983009808
    %v4436 = vunpack.c.0.s8 %v4435
    %v4437 = vlaneseq
    %v4438 = vshrl.u32 %v4437, 7
    %v4439 = vsub.s32 %v4436, %v4438
    %v4440 = vrot.slane %v4170, %v4439
    %v4442 = vunpack.c.l.s4 1983009808
    %v4443 = vunpack.c.0.s8 %v4442
    %v4444 = vlaneseq
    %v4445 = vshrl.u32 %v4444, 7
    %v4446 = vsub.s32 %v4443, %v4445
    %v4447 = vrot.slane %v4433, %v4446
    %v4448 = vcombine.high %v4440, %v4440
    %v4449 = vcombine.high %v4447, %v4447
    %4450 = vrot.lane.b32.xlu0 %v4440, 126
    %v4451 = vpop.permute.xlu0 %4450
    %4452 = vrot.lane.b32.xlu0 %v4448, 126
    %v4453 = vpop.permute.xlu0 %4452
    %4454 = vrot.lane.b32.xlu0 %v4447, 126
    %v4455 = vpop.permute.xlu0 %4454
    %4456 = vrot.lane.b32.xlu0 %v4449, 126
    %v4457 = vpop.permute.xlu0 %4456
    %v4458 = vsel %vm948, %v4451, %v4453
    %v4459 = vsel %vm948, %v4453, %v4455
    %v4460 = vsel %vm948, %v4455, %v4457
    %v4463 = vsel %vm948, %v4457, %v4451
    %v4465 = vcombine.low %v4458, %v4459
    %v4466 = vcombine.low %v4460, %v4463
    %v4468 = vunpack.c.l.s4 1983009808
    %v4469 = vunpack.c.0.s8 %v4468
    %v4470 = vlaneseq
    %v4471 = vshrl.u32 %v4470, 7
    %v4472 = vsub.s32 %v4469, %v4471
    %v4473 = vrot.slane %v4465, %v4472
    %v4475 = vunpack.c.l.s4 1983009808
    %v4476 = vunpack.c.0.s8 %v4475
    %v4477 = vlaneseq
    %v4478 = vshrl.u32 %v4477, 7
    %v4479 = vsub.s32 %v4476, %v4478
    %v4480 = vrot.slane %v4466, %v4479
    %v4481 = vcombine.low %v4473, %v4480
    %v4483 = vadd.f32 %v4431, %v4481
    %v4485 = vcombine.high %v4171, %v4171
    %v4487 = vunpack.c.l.s4 1983009808
    %v4488 = vunpack.c.0.s8 %v4487
    %v4489 = vlaneseq
    %v4490 = vshrl.u32 %v4489, 7
    %v4491 = vsub.s32 %v4488, %v4490
    %v4492 = vrot.slane %v4171, %v4491
    %v4494 = vunpack.c.l.s4 1983009808
    %v4495 = vunpack.c.0.s8 %v4494
    %v4496 = vlaneseq
    %v4497 = vshrl.u32 %v4496, 7
    %v4498 = vsub.s32 %v4495, %v4497
    %v4499 = vrot.slane %v4485, %v4498
    %v4500 = vcombine.high %v4492, %v4492
    %v4501 = vcombine.high %v4499, %v4499
    %4502 = vrot.lane.b32.xlu0 %v4492, 86
    %v4503 = vpop.permute.xlu0 %4502
    %4504 = vrot.lane.b32.xlu0 %v4500, 86
    %v4505 = vpop.permute.xlu0 %4504
    %4506 = vrot.lane.b32.xlu0 %v4499, 86
    %v4507 = vpop.permute.xlu0 %4506
    %4508 = vrot.lane.b32.xlu0 %v4501, 86
    %v4509 = vpop.permute.xlu0 %4508
    %v4510 = vsel %vm1001, %v4503, %v4505
    %v4511 = vsel %vm1001, %v4505, %v4507
    %v4512 = vsel %vm1001, %v4507, %v4509
    %v4515 = vsel %vm1001, %v4509, %v4503
    %v4517 = vcombine.low %v4510, %v4511
    %v4518 = vcombine.low %v4512, %v4515
    %v4520 = vunpack.c.l.s4 1983009808
    %v4521 = vunpack.c.0.s8 %v4520
    %v4522 = vlaneseq
    %v4523 = vshrl.u32 %v4522, 7
    %v4524 = vsub.s32 %v4521, %v4523
    %v4525 = vrot.slane %v4517, %v4524
    %v4527 = vunpack.c.l.s4 1983009808
    %v4528 = vunpack.c.0.s8 %v4527
    %v4529 = vlaneseq
    %v4530 = vshrl.u32 %v4529, 7
    %v4531 = vsub.s32 %v4528, %v4530
    %v4532 = vrot.slane %v4518, %v4531
    %v4533 = vcombine.low %v4525, %v4532
    %v4535 = vadd.f32 %v4483, %v4533
    %v4537 = vcombine.high %v4172, %v4172
    %v4539 = vunpack.c.l.s4 1983009808
    %v4540 = vunpack.c.0.s8 %v4539
    %v4541 = vlaneseq
    %v4542 = vshrl.u32 %v4541, 7
    %v4543 = vsub.s32 %v4540, %v4542
    %v4544 = vrot.slane %v4172, %v4543
    %v4546 = vunpack.c.l.s4 1983009808
    %v4547 = vunpack.c.0.s8 %v4546
    %v4548 = vlaneseq
    %v4549 = vshrl.u32 %v4548, 7
    %v4550 = vsub.s32 %v4547, %v4549
    %v4551 = vrot.slane %v4537, %v4550
    %v4552 = vcombine.high %v4544, %v4544
    %v4553 = vcombine.high %v4551, %v4551
    %4554 = vrot.lane.b32.xlu0 %v4544, 84
    %v4555 = vpop.permute.xlu0 %4554
    %4556 = vrot.lane.b32.xlu0 %v4552, 84
    %v4557 = vpop.permute.xlu0 %4556
    %4558 = vrot.lane.b32.xlu0 %v4551, 84
    %v4559 = vpop.permute.xlu0 %4558
    %4560 = vrot.lane.b32.xlu0 %v4553, 84
    %v4561 = vpop.permute.xlu0 %4560
    %v4562 = vsel %vm1054, %v4555, %v4557
    %v4563 = vsel %vm1054, %v4557, %v4559
    %v4564 = vsel %vm1054, %v4559, %v4561
    %v4567 = vsel %vm1054, %v4561, %v4555
    %v4569 = vcombine.low %v4562, %v4563
    %v4570 = vcombine.low %v4564, %v4567
    %v4572 = vunpack.c.l.s4 1983009808
    %v4573 = vunpack.c.0.s8 %v4572
    %v4574 = vlaneseq
    %v4575 = vshrl.u32 %v4574, 7
    %v4576 = vsub.s32 %v4573, %v4575
    %v4577 = vrot.slane %v4569, %v4576
    %v4579 = vunpack.c.l.s4 1983009808
    %v4580 = vunpack.c.0.s8 %v4579
    %v4581 = vlaneseq
    %v4582 = vshrl.u32 %v4581, 7
    %v4583 = vsub.s32 %v4580, %v4582
    %v4584 = vrot.slane %v4570, %v4583
    %v4585 = vcombine.low %v4577, %v4584
    %v4587 = vadd.f32 %v4535, %v4585
    %v4589 = vcombine.high %v4173, %v4173
    %v4591 = vunpack.c.l.s4 1983009808
    %v4592 = vunpack.c.0.s8 %v4591
    %v4593 = vlaneseq
    %v4594 = vshrl.u32 %v4593, 7
    %v4595 = vsub.s32 %v4592, %v4594
    %v4596 = vrot.slane %v4173, %v4595
    %v4598 = vunpack.c.l.s4 1983009808
    %v4599 = vunpack.c.0.s8 %v4598
    %v4600 = vlaneseq
    %v4601 = vshrl.u32 %v4600, 7
    %v4602 = vsub.s32 %v4599, %v4601
    %v4603 = vrot.slane %v4589, %v4602
    %v4604 = vcombine.high %v4596, %v4596
    %v4605 = vcombine.high %v4603, %v4603
    %4606 = vrot.lane.b32.xlu0 %v4596, 82
    %v4607 = vpop.permute.xlu0 %4606
    %4608 = vrot.lane.b32.xlu0 %v4604, 82
    %v4609 = vpop.permute.xlu0 %4608
    %4610 = vrot.lane.b32.xlu0 %v4603, 82
    %v4611 = vpop.permute.xlu0 %4610
    %4612 = vrot.lane.b32.xlu0 %v4605, 82
    %v4613 = vpop.permute.xlu0 %4612
    %v4614 = vsel %vm1107, %v4607, %v4609
    %v4615 = vsel %vm1107, %v4609, %v4611
    %v4616 = vsel %vm1107, %v4611, %v4613
    %v4619 = vsel %vm1107, %v4613, %v4607
    %v4621 = vcombine.low %v4614, %v4615
    %v4622 = vcombine.low %v4616, %v4619
    %v4624 = vunpack.c.l.s4 1983009808
    %v4625 = vunpack.c.0.s8 %v4624
    %v4626 = vlaneseq
    %v4627 = vshrl.u32 %v4626, 7
    %v4628 = vsub.s32 %v4625, %v4627
    %v4629 = vrot.slane %v4621, %v4628
    %v4631 = vunpack.c.l.s4 1983009808
    %v4632 = vunpack.c.0.s8 %v4631
    %v4633 = vlaneseq
    %v4634 = vshrl.u32 %v4633, 7
    %v4635 = vsub.s32 %v4632, %v4634
    %v4636 = vrot.slane %v4622, %v4635
    %v4637 = vcombine.low %v4629, %v4636
    %v4639 = vadd.f32 %v4587, %v4637
    %v4640 = vmul.f32 %v4639, %v76
    %v4642 = vcombine.high %v4640, %v4640
    %v4644 = vunpack.c.l.s4 1983009808
    %v4645 = vunpack.c.0.s8 %v4644
    %v4646 = vlaneseq
    %v4647 = vshrl.u32 %v4646, 7
    %v4648 = vsub.s32 %v4645, %v4647
    %v4649 = vrot.slane %v4640, %v4648
    %v4651 = vunpack.c.l.s4 1983009808
    %v4652 = vunpack.c.0.s8 %v4651
    %v4653 = vlaneseq
    %v4654 = vshrl.u32 %v4653, 7
    %v4655 = vsub.s32 %v4652, %v4654
    %v4656 = vrot.slane %v4642, %v4655
    %v4657 = vcombine.high %v4649, %v4649
    %v4658 = vcombine.high %v4656, %v4656
    %v4663 = vsel %vm565, %v4649, 0.0
    %v4664 = vsel %vm565, %v4657, 0.0
    %v4665 = vadd.f32 %v4663, %v4664
    %v4666 = vsel %vm565, %v4656, 0.0
    %v4667 = vadd.f32 %v4665, %v4666
    %v4668 = vsel %vm565, %v4658, 0.0
    %v4669 = vadd.f32 %v4667, %v4668
    %4670 = vadd.xlane.f32.xlu0 %v4669
    %v4671 = vpop.xlane.xlu0 %4670
    %v4672 = vrot.slane %v4671, 4
    %v4673 = vadd.f32 %v4671, %v4672
    %v4674 = vrot.slane %v4673, 2
    %v4675 = vadd.f32 %v4673, %v4674
    %v4676 = vrot.slane %v4675, 1
    %v4677 = vadd.f32 %v4675, %v4676
    %s4678 = vtos %v4677
    %s4679 = smul.f32 %s4678, 0.001953125
    %v4680 = vstv %s4679
    %v4681 = vsub.f32 %v4639, %v4680
    %v4682 = vmul.f32 %v4681, %v76
    %v4683 = vmul.f32 %v4682, %v4682
    %v4685 = vcombine.high %v4683, %v4683
    %v4687 = vunpack.c.l.s4 1983009808
    %v4688 = vunpack.c.0.s8 %v4687
    %v4689 = vlaneseq
    %v4690 = vshrl.u32 %v4689, 7
    %v4691 = vsub.s32 %v4688, %v4690
    %v4692 = vrot.slane %v4683, %v4691
    %v4694 = vunpack.c.l.s4 1983009808
    %v4695 = vunpack.c.0.s8 %v4694
    %v4696 = vlaneseq
    %v4697 = vshrl.u32 %v4696, 7
    %v4698 = vsub.s32 %v4695, %v4697
    %v4699 = vrot.slane %v4685, %v4698
    %v4700 = vcombine.high %v4692, %v4692
    %v4701 = vcombine.high %v4699, %v4699
    %v4706 = vsel %vm565, %v4692, 0.0
    %v4707 = vsel %vm565, %v4700, 0.0
    %v4708 = vadd.f32 %v4706, %v4707
    %v4709 = vsel %vm565, %v4699, 0.0
    %v4710 = vadd.f32 %v4708, %v4709
    %v4711 = vsel %vm565, %v4701, 0.0
    %v4712 = vadd.f32 %v4710, %v4711
    %4713 = vadd.xlane.f32.xlu0 %v4712
    %v4714 = vpop.xlane.xlu0 %4713
    %v4715 = vrot.slane %v4714, 4
    %v4716 = vadd.f32 %v4714, %v4715
    %v4717 = vrot.slane %v4716, 2
    %v4718 = vadd.f32 %v4716, %v4717
    %v4719 = vrot.slane %v4718, 1
    %v4720 = vadd.f32 %v4718, %v4719
    %s4721 = vtos %v4720
    %s4722 = smul.f32 %s4721, 0.001953125
    %s4723 = sld [smem:[#allocation6 + $0x7]]
    %s4724 = sadd.f32 %s4722, 1e-05
    %v4725 = vstv %s4724
    %v4726 = vrsqrt.pop %v4725
    %s4727 = vtos %v4726
    %s4728 = smul.f32 %s4723, %s4727
    %v4729 = vstv %s4728
    %v4730 = vmul.f32 %v4682, %v4729
    %s4731 = sld [smem:[#allocation8 + $0x7]]
    %v4732 = vstv %s4731
    %v4733 = vadd.f32 %v4730, %v4732
    %v4734 = vmax.f32 %v4733, 0.0
    %v4735 = vmul.f32 %v4734, %v76
    %s4736 = scalar_lea.vmem [#allocation2], 64
    %4737 = vst [vmem:[%s4736] sm:$0xff] %v4735
    %s4738 = sld [smem:[#allocation9 + $0x8]]
    %v4739 = vstv %s4738
    %v4740 = vmul.f32 %v4739, %v4735
    %v4741 = vadd.f32 %v4158, %v4740
    %s4742 = sld [smem:[#allocation3]]
    %v4743 = vstv %s4742
    %v4744 = vadd.f32 %v4741, %v4743
    %v4745 = vxor.u32 %v4744, 2147483648
    %v4746 = vmul.f32 %v4745, 1.442695
    %v4747 = vpow.pop %v4746
    %v4748 = vadd.f32 %v4747, 1.0
    %v4749 = vrcp.pop %v4748
    %v4750 = vmul.f32 1.0, %v4749
    %4751 = vst [vmem:[%s7] sm:$0xff] %v4750
    // Predicated region
    $region95: #{msdnet_forward.1} parent=1 // pred_check
      _
    $region96: #{msdnet_forward.1} parent=1 // pred_check_branch
      %4753 = sbr.rel (0) target = $region98
    $region97: #{msdnet_forward.1} parent=1 // pred_region
      _
    $region98: #{msdnet_forward.1} parent=1 // pred_fallthru
      _
    // Predicated region
    $region99: #{msdnet_forward.1} parent=1 // pred_check
      _
    $region100: #{msdnet_forward.1} parent=1 // pred_check_branch
      %4755 = sbr.rel (0) target = $region102
    $region101: #{msdnet_forward.1} parent=1 // pred_region
      _
    $region102: #{msdnet_forward.1} parent=1 // pred_fallthru
      _
    %4756 = vsyncpa [#allocation5], 1
    %4757 = vsyncpa [#allocation7], 1
    %4758 = vsyncpa [#allocation10], 1

</llo_original>
